<compile_context>
chip_gen: v7x
topology: tpu7x:2x2x1
jax: 0.10.0
libtpu: 0.0.40
codegen_flags: <defaults>
</compile_context>

<pallas_src>
import math
import functools

import jax
import jax.numpy as jnp
from jax import lax
from jax.experimental import pallas as pl
from jax.experimental.pallas import tpu as pltpu


# ----------------------------------------------------------------------------
# Helpers: VMEM limit + tile pickers
# ----------------------------------------------------------------------------
_VMEM_LIMIT = None


def _vmem_limit_bytes():
    """~100 MiB on 128-MiB parts (v5e/v6e); conservative 48 MiB if info unavailable."""
    try:
        cap = int(pltpu.get_tpu_info().vmem_capacity_bytes)
        if cap <= 0:
            raise ValueError
    except Exception:
        return 48 << 20
    return min(100 << 20, (cap * 3) // 4)


def _cparams(dims):
    global _VMEM_LIMIT
    if _VMEM_LIMIT is None:
        _VMEM_LIMIT = _vmem_limit_bytes()
    return pltpu.CompilerParams(dimension_semantics=dims,
                                vmem_limit_bytes=_VMEM_LIMIT)


def _pick_row_tile(m, target=1024):
    """Row-tile size: full array if small, else largest multiple of 8 <= target dividing m."""
    if m <= target:
        return m
    for t in range(target - target % 8, 0, -8):
        if m % t == 0:
            return t
    return m


def _pick_vocab_tile(v, target=2048):
    if v <= target:
        return v
    for t in range(target - target % 128, 0, -128):
        if v % t == 0:
            return t
    return v


# ----------------------------------------------------------------------------
# Shared attention core: per-head attention + out-proj + residual + LayerNorm
# (q, k, v already projected; operates on full-sequence tiles of one batch element)
# ----------------------------------------------------------------------------
def _mha_postnorm(x_res_f32, q, k, v, wo, bo, g, beta, *, nhead, causal, scale):
    # TODO(synk): for production Sq/Skv (~2k), add a flash-style online-softmax over
    # Skv tiles (q-row grid axis + m/l scratch, skip fully-masked causal KV tiles) so
    # the per-head (Sq, Skv) f32 score tile never materializes (required for v7x VMEM).
    sq, d = q.shape
    dh = d // nhead
    heads = []
    for h in range(nhead):  # static unroll: plain 2-D matmuls, robust Mosaic lowering
        sl = slice(h * dh, (h + 1) * dh)
        qh = q[:, sl].astype(jnp.bfloat16)
        kh = k[:, sl].astype(jnp.bfloat16)
        vh = v[:, sl].astype(jnp.bfloat16)
        s = lax.dot_general(qh, kh, dimension_numbers=(((1,), (1,)), ((), ())),
                            preferred_element_type=jnp.float32) * scale       # (Sq, Skv)
        if causal:
            row = lax.broadcasted_iota(jnp.int32, s.shape, 0)
            col = lax.broadcasted_iota(jnp.int32, s.shape, 1)
            s = jnp.where(row >= col, s, -1e30)        # keep mask in f32 (never bf16)
        m = jnp.max(s, axis=-1, keepdims=True)
        p = jnp.exp(s - m)
        p = p * pl.reciprocal(jnp.sum(p, axis=-1, keepdims=True), approx=True)
        heads.append(jnp.dot(p.astype(jnp.bfloat16), vh,
                             preferred_element_type=jnp.float32))              # (Sq, Dh)
    # single MXU-shaped out-projection instead of H accumulating Dh-wide matmuls
    o = jnp.concatenate(heads, axis=-1).astype(jnp.bfloat16)                    # (Sq, D)
    y = jnp.dot(o, wo, preferred_element_type=jnp.float32) + bo + x_res_f32
    mu = jnp.mean(y, axis=-1, keepdims=True)
    var = jnp.mean((y - mu) ** 2, axis=-1, keepdims=True)
    return (y - mu) * lax.rsqrt(var + 1e-5) * g + beta


# ----------------------------------------------------------------------------
# Fused self-attention sub-layer: LayerNorm(x + MHA(x, x, x))
# ----------------------------------------------------------------------------
def _self_attn_kernel(x_ref, wqkv_ref, bqkv_ref, wo_ref, bo_ref, g_ref, b_ref, o_ref,
                      *, nhead, causal, scale):
    x = x_ref[0]                                               # (Sq, D) bf16
    d = x.shape[-1]
    # one fused QKV projection (bf16 in, f32 accumulate)
    qkv = jnp.dot(x, wqkv_ref[...], preferred_element_type=jnp.float32) + bqkv_ref[...]
    y = _mha_postnorm(x.astype(jnp.float32),
                      qkv[:, :d], qkv[:, d:2 * d], qkv[:, 2 * d:],
                      wo_ref[...], bo_ref[...], g_ref[...], b_ref[...],
                      nhead=nhead, causal=causal, scale=scale)
    o_ref[0] = y.astype(o_ref.dtype)


def self_attn_block(x, p, ln, nhead, causal):
    B, S, D = x.shape
    scale = 1.0 / math.sqrt(D // nhead)
    # TODO(synk): on v7x with B==1 (or odd B), add a parallel Sq-tile grid axis so both
    # TensorCores are busy.
    return pl.pallas_call(
        functools.partial(_self_attn_kernel, nhead=nhead, causal=causal, scale=scale),
        grid=(B,),
        in_specs=[
            pl.BlockSpec((1, S, D), lambda b: (b, 0, 0)),     # x (shared for Q/K/V)
            pl.BlockSpec((D, 3 * D), lambda b: (0, 0)),       # wqkv bf16
            pl.BlockSpec((1, 3 * D), lambda b: (0, 0)),       # bqkv f32
            pl.BlockSpec((D, D), lambda b: (0, 0)),           # wo bf16
            pl.BlockSpec((1, D), lambda b: (0, 0)),           # bo
            pl.BlockSpec((1, D), lambda b: (0, 0)),           # ln gamma
            pl.BlockSpec((1, D), lambda b: (0, 0)),           # ln beta
        ],
        out_specs=pl.BlockSpec((1, S, D), lambda b: (b, 0, 0)),
        out_shape=jax.ShapeDtypeStruct((B, S, D), jnp.bfloat16),
        compiler_params=_cparams(("parallel",)),
    )(x, p["wqkv"], p["bqkv"], p["wo"], p["bo"], ln["g"], ln["b"])


# ----------------------------------------------------------------------------
# Fused cross-attention sub-layer: LayerNorm(xq + MHA(xq, mem, mem))
# ----------------------------------------------------------------------------
def _cross_attn_kernel(xq_ref, xkv_ref, wq_ref, bq_ref, wkv_ref, bkv_ref,
                       wo_ref, bo_ref, g_ref, b_ref, o_ref, *, nhead, scale):
    xq = xq_ref[0]                                             # (Sq, D)  bf16
    xkv = xkv_ref[0]                                           # (Skv, D) bf16
    d = xq.shape[-1]
    q = jnp.dot(xq, wq_ref[...], preferred_element_type=jnp.float32) + bq_ref[...]
    kv = jnp.dot(xkv, wkv_ref[...], preferred_element_type=jnp.float32) + bkv_ref[...]
    y = _mha_postnorm(xq.astype(jnp.float32), q, kv[:, :d], kv[:, d:],
                      wo_ref[...], bo_ref[...], g_ref[...], b_ref[...],
                      nhead=nhead, causal=False, scale=scale)
    o_ref[0] = y.astype(o_ref.dtype)


def cross_attn_block(xq, xkv, p, ln, nhead):
    B, Sq, D = xq.shape
    Skv = xkv.shape[1]
    scale = 1.0 / math.sqrt(D // nhead)
    return pl.pallas_call(
        functools.partial(_cross_attn_kernel, nhead=nhead, scale=scale),
        grid=(B,),
        in_specs=[
            pl.BlockSpec((1, Sq, D), lambda b: (b, 0, 0)),    # xq
            pl.BlockSpec((1, Skv, D), lambda b: (b, 0, 0)),   # xkv (encoder memory)
            pl.BlockSpec((D, D), lambda b: (0, 0)),           # wq
            pl.BlockSpec((1, D), lambda b: (0, 0)),           # bq
            pl.BlockSpec((D, 2 * D), lambda b: (0, 0)),       # wkv
            pl.BlockSpec((1, 2 * D), lambda b: (0, 0)),       # bkv
            pl.BlockSpec((D, D), lambda b: (0, 0)),           # wo
            pl.BlockSpec((1, D), lambda b: (0, 0)),           # bo
            pl.BlockSpec((1, D), lambda b: (0, 0)),           # ln gamma
            pl.BlockSpec((1, D), lambda b: (0, 0)),           # ln beta
        ],
        out_specs=pl.BlockSpec((1, Sq, D), lambda b: (b, 0, 0)),
        out_shape=jax.ShapeDtypeStruct((B, Sq, D), jnp.bfloat16),
        compiler_params=_cparams(("parallel",)),
    )(xq, xkv, p["wq"], p["bq"], p["wkv"], p["bkv"], p["wo"], p["bo"], ln["g"], ln["b"])


# ----------------------------------------------------------------------------
# Fused FFN sub-layer:  LayerNorm(x + W2 leaky_relu(W1 x + b1) + b2)
# ----------------------------------------------------------------------------
def _ffn_block_kernel(x_ref, w1_ref, b1_ref, w2_ref, b2_ref, g_ref, beta_ref, o_ref):
    x = x_ref[...]                                             # (tm, D) bf16
    h = jnp.dot(x, w1_ref[...], preferred_element_type=jnp.float32) + b1_ref[...]
    h = jnp.where(h >= 0.0, h, 0.01 * h)                       # leaky_relu(0.01), f32
    y = jnp.dot(h.astype(jnp.bfloat16), w2_ref[...],
                preferred_element_type=jnp.float32) + b2_ref[...]
    y = y + x.astype(jnp.float32)                              # residual (post-norm)
    mu = jnp.mean(y, axis=-1, keepdims=True)
    var = jnp.mean((y - mu) ** 2, axis=-1, keepdims=True)
    o_ref[...] = ((y - mu) * lax.rsqrt(var + 1e-5) * g_ref[...] + beta_ref[...]
                  ).astype(o_ref.dtype)


def ffn_block(x2d, p, ln, tm):
    M, D = x2d.shape
    F = p["w1"].shape[1]
    # TODO(synk): on v7x, when D*F bf16 weights x2 buffers approach ~32 MB, block the F
    # axis (extra grid axis + (tm, D) accumulator) or single-buffer the grid-invariant
    # weights with pipeline_mode=pl.Buffered(1).
    return pl.pallas_call(
        _ffn_block_kernel,
        grid=(M // tm,),
        in_specs=[
            pl.BlockSpec((tm, D), lambda i: (i, 0)),
            pl.BlockSpec((D, F), lambda i: (0, 0)),
            pl.BlockSpec((1, F), lambda i: (0, 0)),
            pl.BlockSpec((F, D), lambda i: (0, 0)),
            pl.BlockSpec((1, D), lambda i: (0, 0)),
            pl.BlockSpec((1, D), lambda i: (0, 0)),
            pl.BlockSpec((1, D), lambda i: (0, 0)),
        ],
        out_specs=pl.BlockSpec((tm, D), lambda i: (i, 0)),
        out_shape=jax.ShapeDtypeStruct((M, D), jnp.bfloat16),
        compiler_params=_cparams(("parallel",)),
    )(x2d, p["w1"], p["b1"], p["w2"], p["b2"], ln["g"], ln["b"])


# ----------------------------------------------------------------------------
# Plain LayerNorm (final encoder norm)
# ----------------------------------------------------------------------------
def _ln_kernel(x_ref, g_ref, b_ref, o_ref):
    x = x_ref[...].astype(jnp.float32)
    mu = jnp.mean(x, axis=-1, keepdims=True)
    var = jnp.mean((x - mu) ** 2, axis=-1, keepdims=True)
    o_ref[...] = ((x - mu) * lax.rsqrt(var + 1e-5) * g_ref[...] + b_ref[...]
                  ).astype(o_ref.dtype)


def layer_norm(x2d, ln, tm):
    M, D = x2d.shape
    return pl.pallas_call(
        _ln_kernel,
        grid=(M // tm,),
        in_specs=[pl.BlockSpec((tm, D), lambda i: (i, 0)),
                  pl.BlockSpec((1, D), lambda i: (0, 0)),
                  pl.BlockSpec((1, D), lambda i: (0, 0))],
        out_specs=pl.BlockSpec((tm, D), lambda i: (i, 0)),
        out_shape=jax.ShapeDtypeStruct((M, D), jnp.bfloat16),
        compiler_params=_cparams(("parallel",)),
    )(x2d, ln["g"], ln["b"])


# ----------------------------------------------------------------------------
# Final decoder LayerNorm + tied logits head + logit normalization (vocab-tiled)
# ----------------------------------------------------------------------------
def _ln_logits_kernel(x_ref, g_ref, b_ref, ebar_ref, e_ref, o_ref, xn_ref, *, inv_sqrt_d):
    @pl.when(pl.program_id(1) == 0)
    def _():
        x = x_ref[...].astype(jnp.float32)
        mu = jnp.mean(x, axis=-1, keepdims=True)
        var = jnp.mean((x - mu) ** 2, axis=-1, keepdims=True)
        xn = (x - mu) * lax.rsqrt(var + 1e-5) * g_ref[...] + b_ref[...]
        xn_ref[...] = xn.astype(jnp.bfloat16)

    xnb = xn_ref[...]
    # tied projection against this vocab tile (transposed-RHS contraction, no host emb.T)
    y = lax.dot_general(xnb, e_ref[...], dimension_numbers=(((1,), (1,)), ((), ())),
                        preferred_element_type=jnp.float32) * inv_sqrt_d       # (tm, tv)
    # normalize_logit: full-vocab mean == xn . mean(emb, axis=0) * inv_sqrt_d, so the
    # mean can be subtracted per vocab tile with no second pass over the logits.
    mv = jnp.sum(xnb.astype(jnp.float32) * ebar_ref[...],
                 axis=-1, keepdims=True) * inv_sqrt_d
    o_ref[...] = y - mv


def ln_logits(x2d, ln, emb, tm):
    M, D = x2d.shape
    V = emb.shape[0]
    tv = _pick_vocab_tile(V)
    ebar = jnp.mean(emb.astype(jnp.float32), axis=0, keepdims=True)   # (1, D) f32
    return pl.pallas_call(
        functools.partial(_ln_logits_kernel, inv_sqrt_d=1.0 / math.sqrt(D)),
        grid=(M // tm, V // tv),
        in_specs=[pl.BlockSpec((tm, D), lambda i, v: (i, 0)),
                  pl.BlockSpec((1, D), lambda i, v: (0, 0)),
                  pl.BlockSpec((1, D), lambda i, v: (0, 0)),
                  pl.BlockSpec((1, D), lambda i, v: (0, 0)),
                  pl.BlockSpec((tv, D), lambda i, v: (v, 0))],
        out_specs=pl.BlockSpec((tm, tv), lambda i, v: (i, v)),
        out_shape=jax.ShapeDtypeStruct((M, V), jnp.float32),
        scratch_shapes=[pltpu.VMEM((tm, D), jnp.bfloat16)],
        compiler_params=_cparams(("parallel", "arbitrary")),
    )(x2d, ln["g"], ln["b"], ebar, emb)


# ----------------------------------------------------------------------------
# Model glue (embedding gather + positional embedding; stays in plain JAX)
# ----------------------------------------------------------------------------
def pos_embedding(seqlen, d):
    # PositionEmbedding: freq = 1 / 10000**linspace(2/d, d, d//2); even cols sin, odd cos.
    # f32 overflow of the upper exponents (-> inf -> freq 0) matches the f32 torch ref.
    freqs = 1.0 / (10000.0 ** jnp.linspace(2.0 / d, float(d), d // 2, dtype=jnp.float32))
    pos = jnp.arange(seqlen, dtype=jnp.float32)[:, None] * freqs[None, :]
    return jnp.stack([jnp.sin(pos), jnp.cos(pos)], axis=-1).reshape(seqlen, d)


def seq2seq_transformer(params, src_tokens, tgt_tokens, nhead):
    B, Ss = src_tokens.shape
    St = tgt_tokens.shape[1]
    emb = params["emb"]                     # (V, D) bf16, tied input/output embedding
    D = emb.shape[1]

    # Token gather + positional embedding (f32 add); activations carried in bf16.
    src = (jnp.take(emb, src_tokens, axis=0).astype(jnp.float32)
           + pos_embedding(Ss, D)[None]).astype(jnp.bfloat16)
    tgt = (jnp.take(emb, tgt_tokens, axis=0).astype(jnp.float32)
           + pos_embedding(St, D)[None]).astype(jnp.bfloat16)

    tm_s = _pick_row_tile(B * Ss)
    tm_t = _pick_row_tile(B * St)

    # Encoder stack (post-norm) + final LayerNorm.
    x = src
    for lp in params["enc"]:
        x = self_attn_block(x, lp["self"], lp["ln1"], nhead, causal=False)
        x = ffn_block(x.reshape(B * Ss, D), lp["ffn"], lp["ln2"], tm_s).reshape(B, Ss, D)
    mem = layer_norm(x.reshape(B * Ss, D), params["enc_norm"], tm_s).reshape(B, Ss, D)

    # Decoder stack (post-norm); final LayerNorm fused into the logits head.
    y = tgt
    for lp in params["dec"]:
        y = self_attn_block(y, lp["self"], lp["ln1"], nhead, causal=True)
        y = cross_attn_block(y, mem, lp["cross"], lp["ln2"], nhead)
        y = ffn_block(y.reshape(B * St, D), lp["ffn"], lp["ln3"], tm_t).reshape(B, St, D)

    logits = ln_logits(y.reshape(B * St, D), params["dec_norm"], emb, tm_t)
    return logits.reshape(B, St, -1)


# ----------------------------------------------------------------------------
# Deterministic synthetic parameters (bf16 matmul weights, f32 bias/LN)
# ----------------------------------------------------------------------------
def init_params(key, vocab, d, dff, nhead, n_enc, n_dec):
    keys = iter(jax.random.split(key, 1024))
    nrm = lambda shape: 0.02 * jax.random.normal(next(keys), shape, jnp.float32)

    def self_attn_p():
        return dict(
            wqkv=nrm((d, 3 * d)).astype(jnp.bfloat16),
            bqkv=jnp.zeros((1, 3 * d), jnp.float32),
            wo=nrm((d, d)).astype(jnp.bfloat16),
            bo=jnp.zeros((1, d), jnp.float32),
        )

    def cross_attn_p():
        return dict(
            wq=nrm((d, d)).astype(jnp.bfloat16), bq=jnp.zeros((1, d), jnp.float32),
            wkv=nrm((d, 2 * d)).astype(jnp.bfloat16), bkv=jnp.zeros((1, 2 * d), jnp.float32),
            wo=nrm((d, d)).astype(jnp.bfloat16), bo=jnp.zeros((1, d), jnp.float32),
        )

    def ln_p():
        return dict(g=jnp.ones((1, d), jnp.float32), b=jnp.zeros((1, d), jnp.float32))

    def ffn_p():
        return dict(w1=nrm((d, dff)).astype(jnp.bfloat16), b1=jnp.zeros((1, dff), jnp.float32),
                    w2=nrm((dff, d)).astype(jnp.bfloat16), b2=jnp.zeros((1, d), jnp.float32))

    return dict(
        emb=nrm((vocab, d)).astype(jnp.bfloat16),
        enc=[dict(self=self_attn_p(), ln1=ln_p(), ffn=ffn_p(), ln2=ln_p())
             for _ in range(n_enc)],
        dec=[dict(self=self_attn_p(), ln1=ln_p(), cross=cross_attn_p(), ln2=ln_p(),
                  ffn=ffn_p(), ln3=ln_p())
             for _ in range(n_dec)],
        enc_norm=ln_p(),
        dec_norm=ln_p(),
    )


# ----------------------------------------------------------------------------
# Main
# ----------------------------------------------------------------------------
if __name__ == "__main__":
    VOCAB, D, NHEAD, DFF = 128, 32, 4, 64
    N_ENC, N_DEC = 2, 2
    B, SS, ST = 2, 8, 8

    key = jax.random.PRNGKey(0)
    pkey, skey, tkey = jax.random.split(key, 3)
    params = init_params(pkey, VOCAB, D, DFF, NHEAD, N_ENC, N_DEC)
    src = jax.random.randint(skey, (B, SS), 0, VOCAB, dtype=jnp.int32)
    tgt = jax.random.randint(tkey, (B, ST), 0, VOCAB, dtype=jnp.int32)

    fwd = jax.jit(functools.partial(seq2seq_transformer, nhead=NHEAD))
    out = jax.block_until_ready(fwd(params, src, tgt))

    assert out.shape == (B, ST, VOCAB), out.shape
    assert bool(jnp.all(jnp.isfinite(out)))
    # normalize_logit=True -> per-token mean of logits is ~0
    assert float(jnp.max(jnp.abs(jnp.mean(out, axis=-1)))) < 1e-4
    print("KERNEL_OK")
</pallas_src>

<mosaic_0001>
module attributes {stable_mosaic.version = 11 : i64} {
  func.func @_self_attn_kernel(%arg0: i32, %arg1: memref<1x8x32xbf16, #tpu.memory_space<vmem>>, %arg2: memref<32x96xbf16, #tpu.memory_space<vmem>>, %arg3: memref<1x96xf32, #tpu.memory_space<vmem>>, %arg4: memref<32x32xbf16, #tpu.memory_space<vmem>>, %arg5: memref<1x32xf32, #tpu.memory_space<vmem>>, %arg6: memref<1x32xf32, #tpu.memory_space<vmem>>, %arg7: memref<1x32xf32, #tpu.memory_space<vmem>>, %arg8: memref<1x8x32xbf16, #tpu.memory_space<vmem>>) attributes {dimension_semantics = [#tpu.dimension_semantics<parallel>], iteration_bounds = array<i64: 2>, scalar_prefetch = 0 : i64, scratch_operands = 0 : i64, tpu.core_type = #tpu.core_type<tc>, window_params = [{transform_indices = @transform_0, window_bounds = array<i64: 1, 8, 32>}, {pipeline_mode = #tpu.pipeline_mode<synchronous>, transform_indices = @transform_1, window_bounds = array<i64: 32, 96>}, {pipeline_mode = #tpu.pipeline_mode<synchronous>, transform_indices = @transform_2, window_bounds = array<i64: 1, 96>}, {pipeline_mode = #tpu.pipeline_mode<synchronous>, transform_indices = @transform_3, window_bounds = array<i64: 32, 32>}, {pipeline_mode = #tpu.pipeline_mode<synchronous>, transform_indices = @transform_4, window_bounds = array<i64: 1, 32>}, {pipeline_mode = #tpu.pipeline_mode<synchronous>, transform_indices = @transform_5, window_bounds = array<i64: 1, 32>}, {pipeline_mode = #tpu.pipeline_mode<synchronous>, transform_indices = @transform_6, window_bounds = array<i64: 1, 32>}, {transform_indices = @transform_7, window_bounds = array<i64: 1, 8, 32>}]} {
    %c0 = arith.constant 0 : index
    %c0_0 = arith.constant 0 : index
    %c0_1 = arith.constant 0 : index
    %0 = vector.load %arg1[%c0, %c0_0, %c0_1] : memref<1x8x32xbf16, #tpu.memory_space<vmem>>, vector<1x8x32xbf16>
    %1 = vector.shape_cast %0 : vector<1x8x32xbf16> to vector<8x32xbf16>
    %c0_2 = arith.constant 0 : index
    %c0_3 = arith.constant 0 : index
    %2 = vector.load %arg2[%c0_2, %c0_3] : memref<32x96xbf16, #tpu.memory_space<vmem>>, vector<32x96xbf16>
    %cst = arith.constant dense<0.000000e+00> : vector<8x96xf32>
    %3 = tpu.matmul %1, %2, %cst {dimension_numbers = #tpu.dot_dimension_numbers<[1], [0], [0], [1], [0, 0, 1, 1], [], []>} : vector<8x32xbf16>, vector<32x96xbf16>, vector<8x96xf32> -> vector<8x96xf32>
    %c0_4 = arith.constant 0 : index
    %c0_5 = arith.constant 0 : index
    %4 = vector.load %arg3[%c0_4, %c0_5] : memref<1x96xf32, #tpu.memory_space<vmem>>, vector<1x96xf32>
    %5 = vector.broadcast %4 : vector<1x96xf32> to vector<8x96xf32>
    %6 = arith.addf %3, %5 : vector<8x96xf32>
    %7 = arith.extf %1 : vector<8x32xbf16> to vector<8x32xf32>
    %8 = vector.extract_strided_slice %6 {offsets = [0, 0], sizes = [8, 32], strides = [1, 1]} : vector<8x96xf32> to vector<8x32xf32>
    %9 = vector.extract_strided_slice %6 {offsets = [0, 32], sizes = [8, 32], strides = [1, 1]} : vector<8x96xf32> to vector<8x32xf32>
    %10 = vector.extract_strided_slice %6 {offsets = [0, 64], sizes = [8, 32], strides = [1, 1]} : vector<8x96xf32> to vector<8x32xf32>
    %c0_6 = arith.constant 0 : index
    %c0_7 = arith.constant 0 : index
    %11 = vector.load %arg4[%c0_6, %c0_7] : memref<32x32xbf16, #tpu.memory_space<vmem>>, vector<32x32xbf16>
    %c0_8 = arith.constant 0 : index
    %c0_9 = arith.constant 0 : index
    %12 = vector.load %arg5[%c0_8, %c0_9] : memref<1x32xf32, #tpu.memory_space<vmem>>, vector<1x32xf32>
    %c0_10 = arith.constant 0 : index
    %c0_11 = arith.constant 0 : index
    %13 = vector.load %arg6[%c0_10, %c0_11] : memref<1x32xf32, #tpu.memory_space<vmem>>, vector<1x32xf32>
    %c0_12 = arith.constant 0 : index
    %c0_13 = arith.constant 0 : index
    %14 = vector.load %arg7[%c0_12, %c0_13] : memref<1x32xf32, #tpu.memory_space<vmem>>, vector<1x32xf32>
    %15 = vector.extract_strided_slice %8 {offsets = [0, 0], sizes = [8, 8], strides = [1, 1]} : vector<8x32xf32> to vector<8x8xf32>
    %16 = arith.truncf %15 : vector<8x8xf32> to vector<8x8xbf16>
    %17 = vector.extract_strided_slice %9 {offsets = [0, 0], sizes = [8, 8], strides = [1, 1]} : vector<8x32xf32> to vector<8x8xf32>
    %18 = arith.truncf %17 : vector<8x8xf32> to vector<8x8xbf16>
    %19 = vector.extract_strided_slice %10 {offsets = [0, 0], sizes = [8, 8], strides = [1, 1]} : vector<8x32xf32> to vector<8x8xf32>
    %20 = arith.truncf %19 : vector<8x8xf32> to vector<8x8xbf16>
    %cst_14 = arith.constant dense<0.000000e+00> : vector<8x8xf32>
    %21 = tpu.matmul %16, %18, %cst_14 {dimension_numbers = #tpu.dot_dimension_numbers<[1], [1], [0], [0], [0, 0, 1, 0], [], []>} : vector<8x8xbf16>, vector<8x8xbf16>, vector<8x8xf32> -> vector<8x8xf32>
    %cst_15 = arith.constant 0.353553385 : f32
    %22 = vector.broadcast %cst_15 : f32 to vector<8x8xf32>
    %23 = arith.mulf %21, %22 : vector<8x8xf32>
    %cst_16 = arith.constant dense<0xFF800000> : vector<8xf32>
    %24 = vector.multi_reduction <maximumf>, %23, %cst_16 [1] : vector<8x8xf32> to vector<8xf32>
    %25 = vector.shape_cast %24 : vector<8xf32> to vector<8x1xf32>
    %26 = vector.broadcast %25 : vector<8x1xf32> to vector<8x8xf32>
    %27 = arith.subf %23, %26 : vector<8x8xf32>
    %28 = math.exp %27 : vector<8x8xf32>
    %cst_17 = arith.constant dense<0.000000e+00> : vector<8xf32>
    %29 = vector.multi_reduction <add>, %28, %cst_17 [1] : vector<8x8xf32> to vector<8xf32>
    %30 = vector.shape_cast %29 : vector<8xf32> to vector<8x1xf32>
    %31 = tpu.reciprocal %30 {approx = true} : vector<8x1xf32> -> vector<8x1xf32>
    %32 = vector.broadcast %31 : vector<8x1xf32> to vector<8x8xf32>
    %33 = arith.mulf %28, %32 : vector<8x8xf32>
    %34 = arith.truncf %33 : vector<8x8xf32> to vector<8x8xbf16>
    %cst_18 = arith.constant dense<0.000000e+00> : vector<8x8xf32>
    %35 = tpu.matmul %34, %20, %cst_18 {dimension_numbers = #tpu.dot_dimension_numbers<[1], [0], [0], [1], [0, 0, 1, 1], [], []>} : vector<8x8xbf16>, vector<8x8xbf16>, vector<8x8xf32> -> vector<8x8xf32>
    %36 = vector.extract_strided_slice %8 {offsets = [0, 8], sizes = [8, 8], strides = [1, 1]} : vector<8x32xf32> to vector<8x8xf32>
    %37 = arith.truncf %36 : vector<8x8xf32> to vector<8x8xbf16>
    %38 = vector.extract_strided_slice %9 {offsets = [0, 8], sizes = [8, 8], strides = [1, 1]} : vector<8x32xf32> to vector<8x8xf32>
    %39 = arith.truncf %38 : vector<8x8xf32> to vector<8x8xbf16>
    %40 = vector.extract_strided_slice %10 {offsets = [0, 8], sizes = [8, 8], strides = [1, 1]} : vector<8x32xf32> to vector<8x8xf32>
    %41 = arith.truncf %40 : vector<8x8xf32> to vector<8x8xbf16>
    %cst_19 = arith.constant dense<0.000000e+00> : vector<8x8xf32>
    %42 = tpu.matmul %37, %39, %cst_19 {dimension_numbers = #tpu.dot_dimension_numbers<[1], [1], [0], [0], [0, 0, 1, 0], [], []>} : vector<8x8xbf16>, vector<8x8xbf16>, vector<8x8xf32> -> vector<8x8xf32>
    %cst_20 = arith.constant 0.353553385 : f32
    %43 = vector.broadcast %cst_20 : f32 to vector<8x8xf32>
    %44 = arith.mulf %42, %43 : vector<8x8xf32>
    %cst_21 = arith.constant dense<0xFF800000> : vector<8xf32>
    %45 = vector.multi_reduction <maximumf>, %44, %cst_21 [1] : vector<8x8xf32> to vector<8xf32>
    %46 = vector.shape_cast %45 : vector<8xf32> to vector<8x1xf32>
    %47 = vector.broadcast %46 : vector<8x1xf32> to vector<8x8xf32>
    %48 = arith.subf %44, %47 : vector<8x8xf32>
    %49 = math.exp %48 : vector<8x8xf32>
    %cst_22 = arith.constant dense<0.000000e+00> : vector<8xf32>
    %50 = vector.multi_reduction <add>, %49, %cst_22 [1] : vector<8x8xf32> to vector<8xf32>
    %51 = vector.shape_cast %50 : vector<8xf32> to vector<8x1xf32>
    %52 = tpu.reciprocal %51 {approx = true} : vector<8x1xf32> -> vector<8x1xf32>
    %53 = vector.broadcast %52 : vector<8x1xf32> to vector<8x8xf32>
    %54 = arith.mulf %49, %53 : vector<8x8xf32>
    %55 = arith.truncf %54 : vector<8x8xf32> to vector<8x8xbf16>
    %cst_23 = arith.constant dense<0.000000e+00> : vector<8x8xf32>
    %56 = tpu.matmul %55, %41, %cst_23 {dimension_numbers = #tpu.dot_dimension_numbers<[1], [0], [0], [1], [0, 0, 1, 1], [], []>} : vector<8x8xbf16>, vector<8x8xbf16>, vector<8x8xf32> -> vector<8x8xf32>
    %57 = vector.extract_strided_slice %8 {offsets = [0, 16], sizes = [8, 8], strides = [1, 1]} : vector<8x32xf32> to vector<8x8xf32>
    %58 = arith.truncf %57 : vector<8x8xf32> to vector<8x8xbf16>
    %59 = vector.extract_strided_slice %9 {offsets = [0, 16], sizes = [8, 8], strides = [1, 1]} : vector<8x32xf32> to vector<8x8xf32>
    %60 = arith.truncf %59 : vector<8x8xf32> to vector<8x8xbf16>
    %61 = vector.extract_strided_slice %10 {offsets = [0, 16], sizes = [8, 8], strides = [1, 1]} : vector<8x32xf32> to vector<8x8xf32>
    %62 = arith.truncf %61 : vector<8x8xf32> to vector<8x8xbf16>
    %cst_24 = arith.constant dense<0.000000e+00> : vector<8x8xf32>
    %63 = tpu.matmul %58, %60, %cst_24 {dimension_numbers = #tpu.dot_dimension_numbers<[1], [1], [0], [0], [0, 0, 1, 0], [], []>} : vector<8x8xbf16>, vector<8x8xbf16>, vector<8x8xf32> -> vector<8x8xf32>
    %cst_25 = arith.constant 0.353553385 : f32
    %64 = vector.broadcast %cst_25 : f32 to vector<8x8xf32>
    %65 = arith.mulf %63, %64 : vector<8x8xf32>
    %cst_26 = arith.constant dense<0xFF800000> : vector<8xf32>
    %66 = vector.multi_reduction <maximumf>, %65, %cst_26 [1] : vector<8x8xf32> to vector<8xf32>
    %67 = vector.shape_cast %66 : vector<8xf32> to vector<8x1xf32>
    %68 = vector.broadcast %67 : vector<8x1xf32> to vector<8x8xf32>
    %69 = arith.subf %65, %68 : vector<8x8xf32>
    %70 = math.exp %69 : vector<8x8xf32>
    %cst_27 = arith.constant dense<0.000000e+00> : vector<8xf32>
    %71 = vector.multi_reduction <add>, %70, %cst_27 [1] : vector<8x8xf32> to vector<8xf32>
    %72 = vector.shape_cast %71 : vector<8xf32> to vector<8x1xf32>
    %73 = tpu.reciprocal %72 {approx = true} : vector<8x1xf32> -> vector<8x1xf32>
    %74 = vector.broadcast %73 : vector<8x1xf32> to vector<8x8xf32>
    %75 = arith.mulf %70, %74 : vector<8x8xf32>
    %76 = arith.truncf %75 : vector<8x8xf32> to vector<8x8xbf16>
    %cst_28 = arith.constant dense<0.000000e+00> : vector<8x8xf32>
    %77 = tpu.matmul %76, %62, %cst_28 {dimension_numbers = #tpu.dot_dimension_numbers<[1], [0], [0], [1], [0, 0, 1, 1], [], []>} : vector<8x8xbf16>, vector<8x8xbf16>, vector<8x8xf32> -> vector<8x8xf32>
    %78 = vector.extract_strided_slice %8 {offsets = [0, 24], sizes = [8, 8], strides = [1, 1]} : vector<8x32xf32> to vector<8x8xf32>
    %79 = arith.truncf %78 : vector<8x8xf32> to vector<8x8xbf16>
    %80 = vector.extract_strided_slice %9 {offsets = [0, 24], sizes = [8, 8], strides = [1, 1]} : vector<8x32xf32> to vector<8x8xf32>
    %81 = arith.truncf %80 : vector<8x8xf32> to vector<8x8xbf16>
    %82 = vector.extract_strided_slice %10 {offsets = [0, 24], sizes = [8, 8], strides = [1, 1]} : vector<8x32xf32> to vector<8x8xf32>
    %83 = arith.truncf %82 : vector<8x8xf32> to vector<8x8xbf16>
    %cst_29 = arith.constant dense<0.000000e+00> : vector<8x8xf32>
    %84 = tpu.matmul %79, %81, %cst_29 {dimension_numbers = #tpu.dot_dimension_numbers<[1], [1], [0], [0], [0, 0, 1, 0], [], []>} : vector<8x8xbf16>, vector<8x8xbf16>, vector<8x8xf32> -> vector<8x8xf32>
    %cst_30 = arith.constant 0.353553385 : f32
    %85 = vector.broadcast %cst_30 : f32 to vector<8x8xf32>
    %86 = arith.mulf %84, %85 : vector<8x8xf32>
    %cst_31 = arith.constant dense<0xFF800000> : vector<8xf32>
    %87 = vector.multi_reduction <maximumf>, %86, %cst_31 [1] : vector<8x8xf32> to vector<8xf32>
    %88 = vector.shape_cast %87 : vector<8xf32> to vector<8x1xf32>
    %89 = vector.broadcast %88 : vector<8x1xf32> to vector<8x8xf32>
    %90 = arith.subf %86, %89 : vector<8x8xf32>
    %91 = math.exp %90 : vector<8x8xf32>
    %cst_32 = arith.constant dense<0.000000e+00> : vector<8xf32>
    %92 = vector.multi_reduction <add>, %91, %cst_32 [1] : vector<8x8xf32> to vector<8xf32>
    %93 = vector.shape_cast %92 : vector<8xf32> to vector<8x1xf32>
    %94 = tpu.reciprocal %93 {approx = true} : vector<8x1xf32> -> vector<8x1xf32>
    %95 = vector.broadcast %94 : vector<8x1xf32> to vector<8x8xf32>
    %96 = arith.mulf %91, %95 : vector<8x8xf32>
    %97 = arith.truncf %96 : vector<8x8xf32> to vector<8x8xbf16>
    %cst_33 = arith.constant dense<0.000000e+00> : vector<8x8xf32>
    %98 = tpu.matmul %97, %83, %cst_33 {dimension_numbers = #tpu.dot_dimension_numbers<[1], [0], [0], [1], [0, 0, 1, 1], [], []>} : vector<8x8xbf16>, vector<8x8xbf16>, vector<8x8xf32> -> vector<8x8xf32>
    %99 = tpu.concatenate %35, %56, %77, %98 in 1 : vector<8x8xf32>, vector<8x8xf32>, vector<8x8xf32>, vector<8x8xf32> -> vector<8x32xf32>
    %100 = arith.truncf %99 : vector<8x32xf32> to vector<8x32xbf16>
    %cst_34 = arith.constant dense<0.000000e+00> : vector<8x32xf32>
    %101 = tpu.matmul %100, %11, %cst_34 {dimension_numbers = #tpu.dot_dimension_numbers<[1], [0], [0], [1], [0, 0, 1, 1], [], []>} : vector<8x32xbf16>, vector<32x32xbf16>, vector<8x32xf32> -> vector<8x32xf32>
    %102 = vector.broadcast %12 : vector<1x32xf32> to vector<8x32xf32>
    %103 = arith.addf %101, %102 : vector<8x32xf32>
    %104 = arith.addf %103, %7 : vector<8x32xf32>
    %cst_35 = arith.constant dense<0.000000e+00> : vector<8xf32>
    %105 = vector.multi_reduction <add>, %104, %cst_35 [1] : vector<8x32xf32> to vector<8xf32>
    %106 = vector.shape_cast %105 : vector<8xf32> to vector<8x1xf32>
    %cst_36 = arith.constant 3.200000e+01 : f32
    %107 = vector.broadcast %cst_36 : f32 to vector<8x1xf32>
    %108 = arith.divf %106, %107 : vector<8x1xf32>
    %109 = vector.broadcast %108 : vector<8x1xf32> to vector<8x32xf32>
    %110 = arith.subf %104, %109 : vector<8x32xf32>
    %111 = arith.mulf %110, %110 : vector<8x32xf32>
    %cst_37 = arith.constant dense<0.000000e+00> : vector<8xf32>
    %112 = vector.multi_reduction <add>, %111, %cst_37 [1] : vector<8x32xf32> to vector<8xf32>
    %113 = vector.shape_cast %112 : vector<8xf32> to vector<8x1xf32>
    %cst_38 = arith.constant 3.200000e+01 : f32
    %114 = vector.broadcast %cst_38 : f32 to vector<8x1xf32>
    %115 = arith.divf %113, %114 : vector<8x1xf32>
    %116 = vector.broadcast %108 : vector<8x1xf32> to vector<8x32xf32>
    %117 = arith.subf %104, %116 : vector<8x32xf32>
    %cst_39 = arith.constant 9.99999974E-6 : f32
    %118 = vector.broadcast %cst_39 : f32 to vector<8x1xf32>
    %119 = arith.addf %115, %118 : vector<8x1xf32>
    %120 = math.rsqrt %119 : vector<8x1xf32>
    %121 = vector.broadcast %120 : vector<8x1xf32> to vector<8x32xf32>
    %122 = arith.mulf %117, %121 : vector<8x32xf32>
    %123 = vector.broadcast %13 : vector<1x32xf32> to vector<8x32xf32>
    %124 = arith.mulf %122, %123 : vector<8x32xf32>
    %125 = vector.broadcast %14 : vector<1x32xf32> to vector<8x32xf32>
    %126 = arith.addf %124, %125 : vector<8x32xf32>
    %127 = arith.truncf %126 : vector<8x32xf32> to vector<8x32xbf16>
    %c0_40 = arith.constant 0 : index
    %c0_41 = arith.constant 0 : index
    %c0_42 = arith.constant 0 : index
    %128 = vector.load %arg8[%c0_40, %c0_41, %c0_42] : memref<1x8x32xbf16, #tpu.memory_space<vmem>>, vector<1x8x32xbf16>
    %129 = vector.shape_cast %128 : vector<1x8x32xbf16> to vector<8x32xbf16>
    %130 = vector.shape_cast %127 : vector<8x32xbf16> to vector<1x8x32xbf16>
    tpu.vector_store %arg8[%c0_40, %c0_41, %c0_42], %130 {strides = array<i32>} : memref<1x8x32xbf16, #tpu.memory_space<vmem>>, vector<1x8x32xbf16>,
    return
  }
  func.func @transform_0(%arg0: i32) -> (i32, i32, i32) {
    %c0_i32 = arith.constant 0 : i32
    %c0_i32_0 = arith.constant 0 : i32
    %c0_i32_1 = arith.constant 0 : i32
    return %arg0, %c0_i32, %c0_i32_0 : i32, i32, i32
  }
  func.func @transform_1(%arg0: i32) -> (i32, i32) {
    %c0_i32 = arith.constant 0 : i32
    %c0_i32_0 = arith.constant 0 : i32
    %c0_i32_1 = arith.constant 0 : i32
    return %c0_i32, %c0_i32_0 : i32, i32
  }
  func.func @transform_2(%arg0: i32) -> (i32, i32) {
    %c0_i32 = arith.constant 0 : i32
    %c0_i32_0 = arith.constant 0 : i32
    %c0_i32_1 = arith.constant 0 : i32
    return %c0_i32, %c0_i32_0 : i32, i32
  }
  func.func @transform_3(%arg0: i32) -> (i32, i32) {
    %c0_i32 = arith.constant 0 : i32
    %c0_i32_0 = arith.constant 0 : i32
    %c0_i32_1 = arith.constant 0 : i32
    return %c0_i32, %c0_i32_0 : i32, i32
  }
  func.func @transform_4(%arg0: i32) -> (i32, i32) {
    %c0_i32 = arith.constant 0 : i32
    %c0_i32_0 = arith.constant 0 : i32
    %c0_i32_1 = arith.constant 0 : i32
    return %c0_i32, %c0_i32_0 : i32, i32
  }
  func.func @transform_5(%arg0: i32) -> (i32, i32) {
    %c0_i32 = arith.constant 0 : i32
    %c0_i32_0 = arith.constant 0 : i32
    %c0_i32_1 = arith.constant 0 : i32
    return %c0_i32, %c0_i32_0 : i32, i32
  }
  func.func @transform_6(%arg0: i32) -> (i32, i32) {
    %c0_i32 = arith.constant 0 : i32
    %c0_i32_0 = arith.constant 0 : i32
    %c0_i32_1 = arith.constant 0 : i32
    return %c0_i32, %c0_i32_0 : i32, i32
  }
  func.func @transform_7(%arg0: i32) -> (i32, i32, i32) {
    %c0_i32 = arith.constant 0 : i32
    %c0_i32_0 = arith.constant 0 : i32
    %c0_i32_1 = arith.constant 0 : i32
    return %arg0, %c0_i32, %c0_i32_0 : i32, i32, i32
  }
}

module attributes {stable_mosaic.version = 11 : i64} {
  func.func @_self_attn_kernel(%arg0: i32, %arg1: memref<1x8x32xbf16, #tpu.memory_space<vmem>>, %arg2: memref<32x96xbf16, #tpu.memory_space<vmem>>, %arg3: memref<1x96xf32, #tpu.memory_space<vmem>>, %arg4: memref<32x32xbf16, #tpu.memory_space<vmem>>, %arg5: memref<1x32xf32, #tpu.memory_space<vmem>>, %arg6: memref<1x32xf32, #tpu.memory_space<vmem>>, %arg7: memref<1x32xf32, #tpu.memory_space<vmem>>, %arg8: memref<1x8x32xbf16, #tpu.memory_space<vmem>>) attributes {dimension_semantics = [#tpu.dimension_semantics<parallel>], iteration_bounds = array<i64: 2>, scalar_prefetch = 0 : i64, scratch_operands = 0 : i64, tpu.core_type = #tpu.core_type<tc>, window_params = [{transform_indices = @transform_0, window_bounds = array<i64: 1, 8, 32>}, {pipeline_mode = #tpu.pipeline_mode<synchronous>, transform_indices = @transform_1, window_bounds = array<i64: 32, 96>}, {pipeline_mode = #tpu.pipeline_mode<synchronous>, transform_indices = @transform_2, window_bounds = array<i64: 1, 96>}, {pipeline_mode = #tpu.pipeline_mode<synchronous>, transform_indices = @transform_3, window_bounds = array<i64: 32, 32>}, {pipeline_mode = #tpu.pipeline_mode<synchronous>, transform_indices = @transform_4, window_bounds = array<i64: 1, 32>}, {pipeline_mode = #tpu.pipeline_mode<synchronous>, transform_indices = @transform_5, window_bounds = array<i64: 1, 32>}, {pipeline_mode = #tpu.pipeline_mode<synchronous>, transform_indices = @transform_6, window_bounds = array<i64: 1, 32>}, {transform_indices = @transform_7, window_bounds = array<i64: 1, 8, 32>}]} {
    %c0 = arith.constant 0 : index
    %c0_0 = arith.constant 0 : index
    %c0_1 = arith.constant 0 : index
    %0 = vector.load %arg1[%c0, %c0_0, %c0_1] : memref<1x8x32xbf16, #tpu.memory_space<vmem>>, vector<1x8x32xbf16>
    %1 = vector.shape_cast %0 : vector<1x8x32xbf16> to vector<8x32xbf16>
    %c0_2 = arith.constant 0 : index
    %c0_3 = arith.constant 0 : index
    %2 = vector.load %arg2[%c0_2, %c0_3] : memref<32x96xbf16, #tpu.memory_space<vmem>>, vector<32x96xbf16>
    %cst = arith.constant dense<0.000000e+00> : vector<8x96xf32>
    %3 = tpu.matmul %1, %2, %cst {dimension_numbers = #tpu.dot_dimension_numbers<[1], [0], [0], [1], [0, 0, 1, 1], [], []>} : vector<8x32xbf16>, vector<32x96xbf16>, vector<8x96xf32> -> vector<8x96xf32>
    %c0_4 = arith.constant 0 : index
    %c0_5 = arith.constant 0 : index
    %4 = vector.load %arg3[%c0_4, %c0_5] : memref<1x96xf32, #tpu.memory_space<vmem>>, vector<1x96xf32>
    %5 = vector.broadcast %4 : vector<1x96xf32> to vector<8x96xf32>
    %6 = arith.addf %3, %5 : vector<8x96xf32>
    %7 = arith.extf %1 : vector<8x32xbf16> to vector<8x32xf32>
    %8 = vector.extract_strided_slice %6 {offsets = [0, 0], sizes = [8, 32], strides = [1, 1]} : vector<8x96xf32> to vector<8x32xf32>
    %9 = vector.extract_strided_slice %6 {offsets = [0, 32], sizes = [8, 32], strides = [1, 1]} : vector<8x96xf32> to vector<8x32xf32>
    %10 = vector.extract_strided_slice %6 {offsets = [0, 64], sizes = [8, 32], strides = [1, 1]} : vector<8x96xf32> to vector<8x32xf32>
    %c0_6 = arith.constant 0 : index
    %c0_7 = arith.constant 0 : index
    %11 = vector.load %arg4[%c0_6, %c0_7] : memref<32x32xbf16, #tpu.memory_space<vmem>>, vector<32x32xbf16>
    %c0_8 = arith.constant 0 : index
    %c0_9 = arith.constant 0 : index
    %12 = vector.load %arg5[%c0_8, %c0_9] : memref<1x32xf32, #tpu.memory_space<vmem>>, vector<1x32xf32>
    %c0_10 = arith.constant 0 : index
    %c0_11 = arith.constant 0 : index
    %13 = vector.load %arg6[%c0_10, %c0_11] : memref<1x32xf32, #tpu.memory_space<vmem>>, vector<1x32xf32>
    %c0_12 = arith.constant 0 : index
    %c0_13 = arith.constant 0 : index
    %14 = vector.load %arg7[%c0_12, %c0_13] : memref<1x32xf32, #tpu.memory_space<vmem>>, vector<1x32xf32>
    %15 = vector.extract_strided_slice %8 {offsets = [0, 0], sizes = [8, 8], strides = [1, 1]} : vector<8x32xf32> to vector<8x8xf32>
    %16 = arith.truncf %15 : vector<8x8xf32> to vector<8x8xbf16>
    %17 = vector.extract_strided_slice %9 {offsets = [0, 0], sizes = [8, 8], strides = [1, 1]} : vector<8x32xf32> to vector<8x8xf32>
    %18 = arith.truncf %17 : vector<8x8xf32> to vector<8x8xbf16>
    %19 = vector.extract_strided_slice %10 {offsets = [0, 0], sizes = [8, 8], strides = [1, 1]} : vector<8x32xf32> to vector<8x8xf32>
    %20 = arith.truncf %19 : vector<8x8xf32> to vector<8x8xbf16>
    %cst_14 = arith.constant dense<0.000000e+00> : vector<8x8xf32>
    %21 = tpu.matmul %16, %18, %cst_14 {dimension_numbers = #tpu.dot_dimension_numbers<[1], [1], [0], [0], [0, 0, 1, 0], [], []>} : vector<8x8xbf16>, vector<8x8xbf16>, vector<8x8xf32> -> vector<8x8xf32>
    %cst_15 = arith.constant 0.353553385 : f32
    %22 = vector.broadcast %cst_15 : f32 to vector<8x8xf32>
    %23 = arith.mulf %21, %22 : vector<8x8xf32>
    %24 = tpu.iota {dimensions = array<i32: 0>} : vector<8x8xi32>
    %25 = tpu.iota {dimensions = array<i32: 1>} : vector<8x8xi32>
    %26 = arith.cmpi sge, %24, %25 : vector<8x8xi32>
    %cst_16 = arith.constant -1.000000e+30 : f32
    %27 = vector.broadcast %cst_16 : f32 to vector<8x8xf32>
    %28 = arith.select %26, %23, %27 : vector<8x8xi1>, vector<8x8xf32>
    %cst_17 = arith.constant dense<0xFF800000> : vector<8xf32>
    %29 = vector.multi_reduction <maximumf>, %28, %cst_17 [1] : vector<8x8xf32> to vector<8xf32>
    %30 = vector.shape_cast %29 : vector<8xf32> to vector<8x1xf32>
    %31 = vector.broadcast %30 : vector<8x1xf32> to vector<8x8xf32>
    %32 = arith.subf %28, %31 : vector<8x8xf32>
    %33 = math.exp %32 : vector<8x8xf32>
    %cst_18 = arith.constant dense<0.000000e+00> : vector<8xf32>
    %34 = vector.multi_reduction <add>, %33, %cst_18 [1] : vector<8x8xf32> to vector<8xf32>
    %35 = vector.shape_cast %34 : vector<8xf32> to vector<8x1xf32>
    %36 = tpu.reciprocal %35 {approx = true} : vector<8x1xf32> -> vector<8x1xf32>
    %37 = vector.broadcast %36 : vector<8x1xf32> to vector<8x8xf32>
    %38 = arith.mulf %33, %37 : vector<8x8xf32>
    %39 = arith.truncf %38 : vector<8x8xf32> to vector<8x8xbf16>
    %cst_19 = arith.constant dense<0.000000e+00> : vector<8x8xf32>
    %40 = tpu.matmul %39, %20, %cst_19 {dimension_numbers = #tpu.dot_dimension_numbers<[1], [0], [0], [1], [0, 0, 1, 1], [], []>} : vector<8x8xbf16>, vector<8x8xbf16>, vector<8x8xf32> -> vector<8x8xf32>
    %41 = vector.extract_strided_slice %8 {offsets = [0, 8], sizes = [8, 8], strides = [1, 1]} : vector<8x32xf32> to vector<8x8xf32>
    %42 = arith.truncf %41 : vector<8x8xf32> to vector<8x8xbf16>
    %43 = vector.extract_strided_slice %9 {offsets = [0, 8], sizes = [8, 8], strides = [1, 1]} : vector<8x32xf32> to vector<8x8xf32>
    %44 = arith.truncf %43 : vector<8x8xf32> to vector<8x8xbf16>
    %45 = vector.extract_strided_slice %10 {offsets = [0, 8], sizes = [8, 8], strides = [1, 1]} : vector<8x32xf32> to vector<8x8xf32>
    %46 = arith.truncf %45 : vector<8x8xf32> to vector<8x8xbf16>
    %cst_20 = arith.constant dense<0.000000e+00> : vector<8x8xf32>
    %47 = tpu.matmul %42, %44, %cst_20 {dimension_numbers = #tpu.dot_dimension_numbers<[1], [1], [0], [0], [0, 0, 1, 0], [], []>} : vector<8x8xbf16>, vector<8x8xbf16>, vector<8x8xf32> -> vector<8x8xf32>
    %cst_21 = arith.constant 0.353553385 : f32
    %48 = vector.broadcast %cst_21 : f32 to vector<8x8xf32>
    %49 = arith.mulf %47, %48 : vector<8x8xf32>
    %50 = tpu.iota {dimensions = array<i32: 0>} : vector<8x8xi32>
    %51 = tpu.iota {dimensions = array<i32: 1>} : vector<8x8xi32>
    %52 = arith.cmpi sge, %50, %51 : vector<8x8xi32>
    %cst_22 = arith.constant -1.000000e+30 : f32
    %53 = vector.broadcast %cst_22 : f32 to vector<8x8xf32>
    %54 = arith.select %52, %49, %53 : vector<8x8xi1>, vector<8x8xf32>
    %cst_23 = arith.constant dense<0xFF800000> : vector<8xf32>
    %55 = vector.multi_reduction <maximumf>, %54, %cst_23 [1] : vector<8x8xf32> to vector<8xf32>
    %56 = vector.shape_cast %55 : vector<8xf32> to vector<8x1xf32>
    %57 = vector.broadcast %56 : vector<8x1xf32> to vector<8x8xf32>
    %58 = arith.subf %54, %57 : vector<8x8xf32>
    %59 = math.exp %58 : vector<8x8xf32>
    %cst_24 = arith.constant dense<0.000000e+00> : vector<8xf32>
    %60 = vector.multi_reduction <add>, %59, %cst_24 [1] : vector<8x8xf32> to vector<8xf32>
    %61 = vector.shape_cast %60 : vector<8xf32> to vector<8x1xf32>
    %62 = tpu.reciprocal %61 {approx = true} : vector<8x1xf32> -> vector<8x1xf32>
    %63 = vector.broadcast %62 : vector<8x1xf32> to vector<8x8xf32>
    %64 = arith.mulf %59, %63 : vector<8x8xf32>
    %65 = arith.truncf %64 : vector<8x8xf32> to vector<8x8xbf16>
    %cst_25 = arith.constant dense<0.000000e+00> : vector<8x8xf32>
    %66 = tpu.matmul %65, %46, %cst_25 {dimension_numbers = #tpu.dot_dimension_numbers<[1], [0], [0], [1], [0, 0, 1, 1], [], []>} : vector<8x8xbf16>, vector<8x8xbf16>, vector<8x8xf32> -> vector<8x8xf32>
    %67 = vector.extract_strided_slice %8 {offsets = [0, 16], sizes = [8, 8], strides = [1, 1]} : vector<8x32xf32> to vector<8x8xf32>
    %68 = arith.truncf %67 : vector<8x8xf32> to vector<8x8xbf16>
    %69 = vector.extract_strided_slice %9 {offsets = [0, 16], sizes = [8, 8], strides = [1, 1]} : vector<8x32xf32> to vector<8x8xf32>
    %70 = arith.truncf %69 : vector<8x8xf32> to vector<8x8xbf16>
    %71 = vector.extract_strided_slice %10 {offsets = [0, 16], sizes = [8, 8], strides = [1, 1]} : vector<8x32xf32> to vector<8x8xf32>
    %72 = arith.truncf %71 : vector<8x8xf32> to vector<8x8xbf16>
    %cst_26 = arith.constant dense<0.000000e+00> : vector<8x8xf32>
    %73 = tpu.matmul %68, %70, %cst_26 {dimension_numbers = #tpu.dot_dimension_numbers<[1], [1], [0], [0], [0, 0, 1, 0], [], []>} : vector<8x8xbf16>, vector<8x8xbf16>, vector<8x8xf32> -> vector<8x8xf32>
    %cst_27 = arith.constant 0.353553385 : f32
    %74 = vector.broadcast %cst_27 : f32 to vector<8x8xf32>
    %75 = arith.mulf %73, %74 : vector<8x8xf32>
    %76 = tpu.iota {dimensions = array<i32: 0>} : vector<8x8xi32>
    %77 = tpu.iota {dimensions = array<i32: 1>} : vector<8x8xi32>
    %78 = arith.cmpi sge, %76, %77 : vector<8x8xi32>
    %cst_28 = arith.constant -1.000000e+30 : f32
    %79 = vector.broadcast %cst_28 : f32 to vector<8x8xf32>
    %80 = arith.select %78, %75, %79 : vector<8x8xi1>, vector<8x8xf32>
    %cst_29 = arith.constant dense<0xFF800000> : vector<8xf32>
    %81 = vector.multi_reduction <maximumf>, %80, %cst_29 [1] : vector<8x8xf32> to vector<8xf32>
    %82 = vector.shape_cast %81 : vector<8xf32> to vector<8x1xf32>
    %83 = vector.broadcast %82 : vector<8x1xf32> to vector<8x8xf32>
    %84 = arith.subf %80, %83 : vector<8x8xf32>
    %85 = math.exp %84 : vector<8x8xf32>
    %cst_30 = arith.constant dense<0.000000e+00> : vector<8xf32>
    %86 = vector.multi_reduction <add>, %85, %cst_30 [1] : vector<8x8xf32> to vector<8xf32>
    %87 = vector.shape_cast %86 : vector<8xf32> to vector<8x1xf32>
    %88 = tpu.reciprocal %87 {approx = true} : vector<8x1xf32> -> vector<8x1xf32>
    %89 = vector.broadcast %88 : vector<8x1xf32> to vector<8x8xf32>
    %90 = arith.mulf %85, %89 : vector<8x8xf32>
    %91 = arith.truncf %90 : vector<8x8xf32> to vector<8x8xbf16>
    %cst_31 = arith.constant dense<0.000000e+00> : vector<8x8xf32>
    %92 = tpu.matmul %91, %72, %cst_31 {dimension_numbers = #tpu.dot_dimension_numbers<[1], [0], [0], [1], [0, 0, 1, 1], [], []>} : vector<8x8xbf16>, vector<8x8xbf16>, vector<8x8xf32> -> vector<8x8xf32>
    %93 = vector.extract_strided_slice %8 {offsets = [0, 24], sizes = [8, 8], strides = [1, 1]} : vector<8x32xf32> to vector<8x8xf32>
    %94 = arith.truncf %93 : vector<8x8xf32> to vector<8x8xbf16>
    %95 = vector.extract_strided_slice %9 {offsets = [0, 24], sizes = [8, 8], strides = [1, 1]} : vector<8x32xf32> to vector<8x8xf32>
    %96 = arith.truncf %95 : vector<8x8xf32> to vector<8x8xbf16>
    %97 = vector.extract_strided_slice %10 {offsets = [0, 24], sizes = [8, 8], strides = [1, 1]} : vector<8x32xf32> to vector<8x8xf32>
    %98 = arith.truncf %97 : vector<8x8xf32> to vector<8x8xbf16>
    %cst_32 = arith.constant dense<0.000000e+00> : vector<8x8xf32>
    %99 = tpu.matmul %94, %96, %cst_32 {dimension_numbers = #tpu.dot_dimension_numbers<[1], [1], [0], [0], [0, 0, 1, 0], [], []>} : vector<8x8xbf16>, vector<8x8xbf16>, vector<8x8xf32> -> vector<8x8xf32>
    %cst_33 = arith.constant 0.353553385 : f32
    %100 = vector.broadcast %cst_33 : f32 to vector<8x8xf32>
    %101 = arith.mulf %99, %100 : vector<8x8xf32>
    %102 = tpu.iota {dimensions = array<i32: 0>} : vector<8x8xi32>
    %103 = tpu.iota {dimensions = array<i32: 1>} : vector<8x8xi32>
    %104 = arith.cmpi sge, %102, %103 : vector<8x8xi32>
    %cst_34 = arith.constant -1.000000e+30 : f32
    %105 = vector.broadcast %cst_34 : f32 to vector<8x8xf32>
    %106 = arith.select %104, %101, %105 : vector<8x8xi1>, vector<8x8xf32>
    %cst_35 = arith.constant dense<0xFF800000> : vector<8xf32>
    %107 = vector.multi_reduction <maximumf>, %106, %cst_35 [1] : vector<8x8xf32> to vector<8xf32>
    %108 = vector.shape_cast %107 : vector<8xf32> to vector<8x1xf32>
    %109 = vector.broadcast %108 : vector<8x1xf32> to vector<8x8xf32>
    %110 = arith.subf %106, %109 : vector<8x8xf32>
    %111 = math.exp %110 : vector<8x8xf32>
    %cst_36 = arith.constant dense<0.000000e+00> : vector<8xf32>
    %112 = vector.multi_reduction <add>, %111, %cst_36 [1] : vector<8x8xf32> to vector<8xf32>
    %113 = vector.shape_cast %112 : vector<8xf32> to vector<8x1xf32>
    %114 = tpu.reciprocal %113 {approx = true} : vector<8x1xf32> -> vector<8x1xf32>
    %115 = vector.broadcast %114 : vector<8x1xf32> to vector<8x8xf32>
    %116 = arith.mulf %111, %115 : vector<8x8xf32>
    %117 = arith.truncf %116 : vector<8x8xf32> to vector<8x8xbf16>
    %cst_37 = arith.constant dense<0.000000e+00> : vector<8x8xf32>
    %118 = tpu.matmul %117, %98, %cst_37 {dimension_numbers = #tpu.dot_dimension_numbers<[1], [0], [0], [1], [0, 0, 1, 1], [], []>} : vector<8x8xbf16>, vector<8x8xbf16>, vector<8x8xf32> -> vector<8x8xf32>
    %119 = tpu.concatenate %40, %66, %92, %118 in 1 : vector<8x8xf32>, vector<8x8xf32>, vector<8x8xf32>, vector<8x8xf32> -> vector<8x32xf32>
    %120 = arith.truncf %119 : vector<8x32xf32> to vector<8x32xbf16>
    %cst_38 = arith.constant dense<0.000000e+00> : vector<8x32xf32>
    %121 = tpu.matmul %120, %11, %cst_38 {dimension_numbers = #tpu.dot_dimension_numbers<[1], [0], [0], [1], [0, 0, 1, 1], [], []>} : vector<8x32xbf16>, vector<32x32xbf16>, vector<8x32xf32> -> vector<8x32xf32>
    %122 = vector.broadcast %12 : vector<1x32xf32> to vector<8x32xf32>
    %123 = arith.addf %121, %122 : vector<8x32xf32>
    %124 = arith.addf %123, %7 : vector<8x32xf32>
    %cst_39 = arith.constant dense<0.000000e+00> : vector<8xf32>
    %125 = vector.multi_reduction <add>, %124, %cst_39 [1] : vector<8x32xf32> to vector<8xf32>
    %126 = vector.shape_cast %125 : vector<8xf32> to vector<8x1xf32>
    %cst_40 = arith.constant 3.200000e+01 : f32
    %127 = vector.broadcast %cst_40 : f32 to vector<8x1xf32>
    %128 = arith.divf %126, %127 : vector<8x1xf32>
    %129 = vector.broadcast %128 : vector<8x1xf32> to vector<8x32xf32>
    %130 = arith.subf %124, %129 : vector<8x32xf32>
    %131 = arith.mulf %130, %130 : vector<8x32xf32>
    %cst_41 = arith.constant dense<0.000000e+00> : vector<8xf32>
    %132 = vector.multi_reduction <add>, %131, %cst_41 [1] : vector<8x32xf32> to vector<8xf32>
    %133 = vector.shape_cast %132 : vector<8xf32> to vector<8x1xf32>
    %cst_42 = arith.constant 3.200000e+01 : f32
    %134 = vector.broadcast %cst_42 : f32 to vector<8x1xf32>
    %135 = arith.divf %133, %134 : vector<8x1xf32>
    %136 = vector.broadcast %128 : vector<8x1xf32> to vector<8x32xf32>
    %137 = arith.subf %124, %136 : vector<8x32xf32>
    %cst_43 = arith.constant 9.99999974E-6 : f32
    %138 = vector.broadcast %cst_43 : f32 to vector<8x1xf32>
    %139 = arith.addf %135, %138 : vector<8x1xf32>
    %140 = math.rsqrt %139 : vector<8x1xf32>
    %141 = vector.broadcast %140 : vector<8x1xf32> to vector<8x32xf32>
    %142 = arith.mulf %137, %141 : vector<8x32xf32>
    %143 = vector.broadcast %13 : vector<1x32xf32> to vector<8x32xf32>
    %144 = arith.mulf %142, %143 : vector<8x32xf32>
    %145 = vector.broadcast %14 : vector<1x32xf32> to vector<8x32xf32>
    %146 = arith.addf %144, %145 : vector<8x32xf32>
    %147 = arith.truncf %146 : vector<8x32xf32> to vector<8x32xbf16>
    %c0_44 = arith.constant 0 : index
    %c0_45 = arith.constant 0 : index
    %c0_46 = arith.constant 0 : index
    %148 = vector.load %arg8[%c0_44, %c0_45, %c0_46] : memref<1x8x32xbf16, #tpu.memory_space<vmem>>, vector<1x8x32xbf16>
    %149 = vector.shape_cast %148 : vector<1x8x32xbf16> to vector<8x32xbf16>
    %150 = vector.shape_cast %147 : vector<8x32xbf16> to vector<1x8x32xbf16>
    tpu.vector_store %arg8[%c0_44, %c0_45, %c0_46], %150 {strides = array<i32>} : memref<1x8x32xbf16, #tpu.memory_space<vmem>>, vector<1x8x32xbf16>,
    return
  }
  func.func @transform_0(%arg0: i32) -> (i32, i32, i32) {
    %c0_i32 = arith.constant 0 : i32
    %c0_i32_0 = arith.constant 0 : i32
    %c0_i32_1 = arith.constant 0 : i32
    return %arg0, %c0_i32, %c0_i32_0 : i32, i32, i32
  }
  func.func @transform_1(%arg0: i32) -> (i32, i32) {
    %c0_i32 = arith.constant 0 : i32
    %c0_i32_0 = arith.constant 0 : i32
    %c0_i32_1 = arith.constant 0 : i32
    return %c0_i32, %c0_i32_0 : i32, i32
  }
  func.func @transform_2(%arg0: i32) -> (i32, i32) {
    %c0_i32 = arith.constant 0 : i32
    %c0_i32_0 = arith.constant 0 : i32
    %c0_i32_1 = arith.constant 0 : i32
    return %c0_i32, %c0_i32_0 : i32, i32
  }
  func.func @transform_3(%arg0: i32) -> (i32, i32) {
    %c0_i32 = arith.constant 0 : i32
    %c0_i32_0 = arith.constant 0 : i32
    %c0_i32_1 = arith.constant 0 : i32
    return %c0_i32, %c0_i32_0 : i32, i32
  }
  func.func @transform_4(%arg0: i32) -> (i32, i32) {
    %c0_i32 = arith.constant 0 : i32
    %c0_i32_0 = arith.constant 0 : i32
    %c0_i32_1 = arith.constant 0 : i32
    return %c0_i32, %c0_i32_0 : i32, i32
  }
  func.func @transform_5(%arg0: i32) -> (i32, i32) {
    %c0_i32 = arith.constant 0 : i32
    %c0_i32_0 = arith.constant 0 : i32
    %c0_i32_1 = arith.constant 0 : i32
    return %c0_i32, %c0_i32_0 : i32, i32
  }
  func.func @transform_6(%arg0: i32) -> (i32, i32) {
    %c0_i32 = arith.constant 0 : i32
    %c0_i32_0 = arith.constant 0 : i32
    %c0_i32_1 = arith.constant 0 : i32
    return %c0_i32, %c0_i32_0 : i32, i32
  }
  func.func @transform_7(%arg0: i32) -> (i32, i32, i32) {
    %c0_i32 = arith.constant 0 : i32
    %c0_i32_0 = arith.constant 0 : i32
    %c0_i32_1 = arith.constant 0 : i32
    return %arg0, %c0_i32, %c0_i32_0 : i32, i32, i32
  }
}

module attributes {stable_mosaic.version = 11 : i64} {
  func.func @_ffn_block_kernel(%arg0: i32, %arg1: memref<16x32xbf16, #tpu.memory_space<vmem>>, %arg2: memref<32x64xbf16, #tpu.memory_space<vmem>>, %arg3: memref<1x64xf32, #tpu.memory_space<vmem>>, %arg4: memref<64x32xbf16, #tpu.memory_space<vmem>>, %arg5: memref<1x32xf32, #tpu.memory_space<vmem>>, %arg6: memref<1x32xf32, #tpu.memory_space<vmem>>, %arg7: memref<1x32xf32, #tpu.memory_space<vmem>>, %arg8: memref<16x32xbf16, #tpu.memory_space<vmem>>) attributes {dimension_semantics = [#tpu.dimension_semantics<parallel>], iteration_bounds = array<i64: 1>, scalar_prefetch = 0 : i64, scratch_operands = 0 : i64, tpu.core_type = #tpu.core_type<tc>, window_params = [{transform_indices = @transform_0, window_bounds = array<i64: 16, 32>}, {pipeline_mode = #tpu.pipeline_mode<synchronous>, transform_indices = @transform_1, window_bounds = array<i64: 32, 64>}, {pipeline_mode = #tpu.pipeline_mode<synchronous>, transform_indices = @transform_2, window_bounds = array<i64: 1, 64>}, {pipeline_mode = #tpu.pipeline_mode<synchronous>, transform_indices = @transform_3, window_bounds = array<i64: 64, 32>}, {pipeline_mode = #tpu.pipeline_mode<synchronous>, transform_indices = @transform_4, window_bounds = array<i64: 1, 32>}, {pipeline_mode = #tpu.pipeline_mode<synchronous>, transform_indices = @transform_5, window_bounds = array<i64: 1, 32>}, {pipeline_mode = #tpu.pipeline_mode<synchronous>, transform_indices = @transform_6, window_bounds = array<i64: 1, 32>}, {transform_indices = @transform_7, window_bounds = array<i64: 16, 32>}]} {
    %c0 = arith.constant 0 : index
    %c0_0 = arith.constant 0 : index
    %0 = vector.load %arg1[%c0, %c0_0] : memref<16x32xbf16, #tpu.memory_space<vmem>>, vector<16x32xbf16>
    %c0_1 = arith.constant 0 : index
    %c0_2 = arith.constant 0 : index
    %1 = vector.load %arg2[%c0_1, %c0_2] : memref<32x64xbf16, #tpu.memory_space<vmem>>, vector<32x64xbf16>
    %cst = arith.constant dense<0.000000e+00> : vector<16x64xf32>
    %2 = tpu.matmul %0, %1, %cst {dimension_numbers = #tpu.dot_dimension_numbers<[1], [0], [0], [1], [0, 0, 1, 1], [], []>} : vector<16x32xbf16>, vector<32x64xbf16>, vector<16x64xf32> -> vector<16x64xf32>
    %c0_3 = arith.constant 0 : index
    %c0_4 = arith.constant 0 : index
    %3 = vector.load %arg3[%c0_3, %c0_4] : memref<1x64xf32, #tpu.memory_space<vmem>>, vector<1x64xf32>
    %4 = vector.broadcast %3 : vector<1x64xf32> to vector<16x64xf32>
    %5 = arith.addf %2, %4 : vector<16x64xf32>
    %cst_5 = arith.constant 0.000000e+00 : f32
    %6 = vector.broadcast %cst_5 : f32 to vector<16x64xf32>
    %7 = arith.cmpf oge, %5, %6 : vector<16x64xf32>
    %cst_6 = arith.constant 0.00999999977 : f32
    %8 = vector.broadcast %cst_6 : f32 to vector<16x64xf32>
    %9 = arith.mulf %8, %5 : vector<16x64xf32>
    %10 = arith.select %7, %5, %9 : vector<16x64xi1>, vector<16x64xf32>
    %11 = arith.truncf %10 : vector<16x64xf32> to vector<16x64xbf16>
    %c0_7 = arith.constant 0 : index
    %c0_8 = arith.constant 0 : index
    %12 = vector.load %arg4[%c0_7, %c0_8] : memref<64x32xbf16, #tpu.memory_space<vmem>>, vector<64x32xbf16>
    %cst_9 = arith.constant dense<0.000000e+00> : vector<16x32xf32>
    %13 = tpu.matmul %11, %12, %cst_9 {dimension_numbers = #tpu.dot_dimension_numbers<[1], [0], [0], [1], [0, 0, 1, 1], [], []>} : vector<16x64xbf16>, vector<64x32xbf16>, vector<16x32xf32> -> vector<16x32xf32>
    %c0_10 = arith.constant 0 : index
    %c0_11 = arith.constant 0 : index
    %14 = vector.load %arg5[%c0_10, %c0_11] : memref<1x32xf32, #tpu.memory_space<vmem>>, vector<1x32xf32>
    %15 = vector.broadcast %14 : vector<1x32xf32> to vector<16x32xf32>
    %16 = arith.addf %13, %15 : vector<16x32xf32>
    %17 = arith.extf %0 : vector<16x32xbf16> to vector<16x32xf32>
    %18 = arith.addf %16, %17 : vector<16x32xf32>
    %cst_12 = arith.constant dense<0.000000e+00> : vector<16xf32>
    %19 = vector.multi_reduction <add>, %18, %cst_12 [1] : vector<16x32xf32> to vector<16xf32>
    %20 = vector.shape_cast %19 : vector<16xf32> to vector<16x1xf32>
    %cst_13 = arith.constant 3.200000e+01 : f32
    %21 = vector.broadcast %cst_13 : f32 to vector<16x1xf32>
    %22 = arith.divf %20, %21 : vector<16x1xf32>
    %23 = vector.broadcast %22 : vector<16x1xf32> to vector<16x32xf32>
    %24 = arith.subf %18, %23 : vector<16x32xf32>
    %25 = arith.mulf %24, %24 : vector<16x32xf32>
    %cst_14 = arith.constant dense<0.000000e+00> : vector<16xf32>
    %26 = vector.multi_reduction <add>, %25, %cst_14 [1] : vector<16x32xf32> to vector<16xf32>
    %27 = vector.shape_cast %26 : vector<16xf32> to vector<16x1xf32>
    %cst_15 = arith.constant 3.200000e+01 : f32
    %28 = vector.broadcast %cst_15 : f32 to vector<16x1xf32>
    %29 = arith.divf %27, %28 : vector<16x1xf32>
    %30 = vector.broadcast %22 : vector<16x1xf32> to vector<16x32xf32>
    %31 = arith.subf %18, %30 : vector<16x32xf32>
    %cst_16 = arith.constant 9.99999974E-6 : f32
    %32 = vector.broadcast %cst_16 : f32 to vector<16x1xf32>
    %33 = arith.addf %29, %32 : vector<16x1xf32>
    %34 = math.rsqrt %33 : vector<16x1xf32>
    %35 = vector.broadcast %34 : vector<16x1xf32> to vector<16x32xf32>
    %36 = arith.mulf %31, %35 : vector<16x32xf32>
    %c0_17 = arith.constant 0 : index
    %c0_18 = arith.constant 0 : index
    %37 = vector.load %arg6[%c0_17, %c0_18] : memref<1x32xf32, #tpu.memory_space<vmem>>, vector<1x32xf32>
    %38 = vector.broadcast %37 : vector<1x32xf32> to vector<16x32xf32>
    %39 = arith.mulf %36, %38 : vector<16x32xf32>
    %c0_19 = arith.constant 0 : index
    %c0_20 = arith.constant 0 : index
    %40 = vector.load %arg7[%c0_19, %c0_20] : memref<1x32xf32, #tpu.memory_space<vmem>>, vector<1x32xf32>
    %41 = vector.broadcast %40 : vector<1x32xf32> to vector<16x32xf32>
    %42 = arith.addf %39, %41 : vector<16x32xf32>
    %43 = arith.truncf %42 : vector<16x32xf32> to vector<16x32xbf16>
    %c0_21 = arith.constant 0 : index
    %c0_22 = arith.constant 0 : index
    %44 = vector.load %arg8[%c0_21, %c0_22] : memref<16x32xbf16, #tpu.memory_space<vmem>>, vector<16x32xbf16>
    tpu.vector_store %arg8[%c0_21, %c0_22], %43 {strides = array<i32>} : memref<16x32xbf16, #tpu.memory_space<vmem>>, vector<16x32xbf16>,
    return
  }
  func.func @transform_0(%arg0: i32) -> (i32, i32) {
    %c0_i32 = arith.constant 0 : i32
    %c0_i32_0 = arith.constant 0 : i32
    return %arg0, %c0_i32 : i32, i32
  }
  func.func @transform_1(%arg0: i32) -> (i32, i32) {
    %c0_i32 = arith.constant 0 : i32
    %c0_i32_0 = arith.constant 0 : i32
    %c0_i32_1 = arith.constant 0 : i32
    return %c0_i32, %c0_i32_0 : i32, i32
  }
  func.func @transform_2(%arg0: i32) -> (i32, i32) {
    %c0_i32 = arith.constant 0 : i32
    %c0_i32_0 = arith.constant 0 : i32
    %c0_i32_1 = arith.constant 0 : i32
    return %c0_i32, %c0_i32_0 : i32, i32
  }
  func.func @transform_3(%arg0: i32) -> (i32, i32) {
    %c0_i32 = arith.constant 0 : i32
    %c0_i32_0 = arith.constant 0 : i32
    %c0_i32_1 = arith.constant 0 : i32
    return %c0_i32, %c0_i32_0 : i32, i32
  }
  func.func @transform_4(%arg0: i32) -> (i32, i32) {
    %c0_i32 = arith.constant 0 : i32
    %c0_i32_0 = arith.constant 0 : i32
    %c0_i32_1 = arith.constant 0 : i32
    return %c0_i32, %c0_i32_0 : i32, i32
  }
  func.func @transform_5(%arg0: i32) -> (i32, i32) {
    %c0_i32 = arith.constant 0 : i32
    %c0_i32_0 = arith.constant 0 : i32
    %c0_i32_1 = arith.constant 0 : i32
    return %c0_i32, %c0_i32_0 : i32, i32
  }
  func.func @transform_6(%arg0: i32) -> (i32, i32) {
    %c0_i32 = arith.constant 0 : i32
    %c0_i32_0 = arith.constant 0 : i32
    %c0_i32_1 = arith.constant 0 : i32
    return %c0_i32, %c0_i32_0 : i32, i32
  }
  func.func @transform_7(%arg0: i32) -> (i32, i32) {
    %c0_i32 = arith.constant 0 : i32
    %c0_i32_0 = arith.constant 0 : i32
    return %arg0, %c0_i32 : i32, i32
  }
}

module attributes {stable_mosaic.version = 11 : i64} {
  func.func @_ln_kernel(%arg0: i32, %arg1: memref<16x32xbf16, #tpu.memory_space<vmem>>, %arg2: memref<1x32xf32, #tpu.memory_space<vmem>>, %arg3: memref<1x32xf32, #tpu.memory_space<vmem>>, %arg4: memref<16x32xbf16, #tpu.memory_space<vmem>>) attributes {dimension_semantics = [#tpu.dimension_semantics<parallel>], iteration_bounds = array<i64: 1>, scalar_prefetch = 0 : i64, scratch_operands = 0 : i64, tpu.core_type = #tpu.core_type<tc>, window_params = [{transform_indices = @transform_0, window_bounds = array<i64: 16, 32>}, {pipeline_mode = #tpu.pipeline_mode<synchronous>, transform_indices = @transform_1, window_bounds = array<i64: 1, 32>}, {pipeline_mode = #tpu.pipeline_mode<synchronous>, transform_indices = @transform_2, window_bounds = array<i64: 1, 32>}, {transform_indices = @transform_3, window_bounds = array<i64: 16, 32>}]} {
    %c0 = arith.constant 0 : index
    %c0_0 = arith.constant 0 : index
    %0 = vector.load %arg1[%c0, %c0_0] : memref<16x32xbf16, #tpu.memory_space<vmem>>, vector<16x32xbf16>
    %1 = arith.extf %0 : vector<16x32xbf16> to vector<16x32xf32>
    %cst = arith.constant dense<0.000000e+00> : vector<16xf32>
    %2 = vector.multi_reduction <add>, %1, %cst [1] : vector<16x32xf32> to vector<16xf32>
    %3 = vector.shape_cast %2 : vector<16xf32> to vector<16x1xf32>
    %cst_1 = arith.constant 3.200000e+01 : f32
    %4 = vector.broadcast %cst_1 : f32 to vector<16x1xf32>
    %5 = arith.divf %3, %4 : vector<16x1xf32>
    %6 = vector.broadcast %5 : vector<16x1xf32> to vector<16x32xf32>
    %7 = arith.subf %1, %6 : vector<16x32xf32>
    %8 = arith.mulf %7, %7 : vector<16x32xf32>
    %cst_2 = arith.constant dense<0.000000e+00> : vector<16xf32>
    %9 = vector.multi_reduction <add>, %8, %cst_2 [1] : vector<16x32xf32> to vector<16xf32>
    %10 = vector.shape_cast %9 : vector<16xf32> to vector<16x1xf32>
    %cst_3 = arith.constant 3.200000e+01 : f32
    %11 = vector.broadcast %cst_3 : f32 to vector<16x1xf32>
    %12 = arith.divf %10, %11 : vector<16x1xf32>
    %13 = vector.broadcast %5 : vector<16x1xf32> to vector<16x32xf32>
    %14 = arith.subf %1, %13 : vector<16x32xf32>
    %cst_4 = arith.constant 9.99999974E-6 : f32
    %15 = vector.broadcast %cst_4 : f32 to vector<16x1xf32>
    %16 = arith.addf %12, %15 : vector<16x1xf32>
    %17 = math.rsqrt %16 : vector<16x1xf32>
    %18 = vector.broadcast %17 : vector<16x1xf32> to vector<16x32xf32>
    %19 = arith.mulf %14, %18 : vector<16x32xf32>
    %c0_5 = arith.constant 0 : index
    %c0_6 = arith.constant 0 : index
    %20 = vector.load %arg2[%c0_5, %c0_6] : memref<1x32xf32, #tpu.memory_space<vmem>>, vector<1x32xf32>
    %21 = vector.broadcast %20 : vector<1x32xf32> to vector<16x32xf32>
    %22 = arith.mulf %19, %21 : vector<16x32xf32>
    %c0_7 = arith.constant 0 : index
    %c0_8 = arith.constant 0 : index
    %23 = vector.load %arg3[%c0_7, %c0_8] : memref<1x32xf32, #tpu.memory_space<vmem>>, vector<1x32xf32>
    %24 = vector.broadcast %23 : vector<1x32xf32> to vector<16x32xf32>
    %25 = arith.addf %22, %24 : vector<16x32xf32>
    %26 = arith.truncf %25 : vector<16x32xf32> to vector<16x32xbf16>
    %c0_9 = arith.constant 0 : index
    %c0_10 = arith.constant 0 : index
    %27 = vector.load %arg4[%c0_9, %c0_10] : memref<16x32xbf16, #tpu.memory_space<vmem>>, vector<16x32xbf16>
    tpu.vector_store %arg4[%c0_9, %c0_10], %26 {strides = array<i32>} : memref<16x32xbf16, #tpu.memory_space<vmem>>, vector<16x32xbf16>,
    return
  }
  func.func @transform_0(%arg0: i32) -> (i32, i32) {
    %c0_i32 = arith.constant 0 : i32
    %c0_i32_0 = arith.constant 0 : i32
    return %arg0, %c0_i32 : i32, i32
  }
  func.func @transform_1(%arg0: i32) -> (i32, i32) {
    %c0_i32 = arith.constant 0 : i32
    %c0_i32_0 = arith.constant 0 : i32
    %c0_i32_1 = arith.constant 0 : i32
    return %c0_i32, %c0_i32_0 : i32, i32
  }
  func.func @transform_2(%arg0: i32) -> (i32, i32) {
    %c0_i32 = arith.constant 0 : i32
    %c0_i32_0 = arith.constant 0 : i32
    %c0_i32_1 = arith.constant 0 : i32
    return %c0_i32, %c0_i32_0 : i32, i32
  }
  func.func @transform_3(%arg0: i32) -> (i32, i32) {
    %c0_i32 = arith.constant 0 : i32
    %c0_i32_0 = arith.constant 0 : i32
    return %arg0, %c0_i32 : i32, i32
  }
}

module attributes {stable_mosaic.version = 11 : i64} {
  func.func @_cross_attn_kernel(%arg0: i32, %arg1: memref<1x8x32xbf16, #tpu.memory_space<vmem>>, %arg2: memref<1x8x32xbf16, #tpu.memory_space<vmem>>, %arg3: memref<32x32xbf16, #tpu.memory_space<vmem>>, %arg4: memref<1x32xf32, #tpu.memory_space<vmem>>, %arg5: memref<32x64xbf16, #tpu.memory_space<vmem>>, %arg6: memref<1x64xf32, #tpu.memory_space<vmem>>, %arg7: memref<32x32xbf16, #tpu.memory_space<vmem>>, %arg8: memref<1x32xf32, #tpu.memory_space<vmem>>, %arg9: memref<1x32xf32, #tpu.memory_space<vmem>>, %arg10: memref<1x32xf32, #tpu.memory_space<vmem>>, %arg11: memref<1x8x32xbf16, #tpu.memory_space<vmem>>) attributes {dimension_semantics = [#tpu.dimension_semantics<parallel>], iteration_bounds = array<i64: 2>, scalar_prefetch = 0 : i64, scratch_operands = 0 : i64, tpu.core_type = #tpu.core_type<tc>, window_params = [{transform_indices = @transform_0, window_bounds = array<i64: 1, 8, 32>}, {transform_indices = @transform_1, window_bounds = array<i64: 1, 8, 32>}, {pipeline_mode = #tpu.pipeline_mode<synchronous>, transform_indices = @transform_2, window_bounds = array<i64: 32, 32>}, {pipeline_mode = #tpu.pipeline_mode<synchronous>, transform_indices = @transform_3, window_bounds = array<i64: 1, 32>}, {pipeline_mode = #tpu.pipeline_mode<synchronous>, transform_indices = @transform_4, window_bounds = array<i64: 32, 64>}, {pipeline_mode = #tpu.pipeline_mode<synchronous>, transform_indices = @transform_5, window_bounds = array<i64: 1, 64>}, {pipeline_mode = #tpu.pipeline_mode<synchronous>, transform_indices = @transform_6, window_bounds = array<i64: 32, 32>}, {pipeline_mode = #tpu.pipeline_mode<synchronous>, transform_indices = @transform_7, window_bounds = array<i64: 1, 32>}, {pipeline_mode = #tpu.pipeline_mode<synchronous>, transform_indices = @transform_8, window_bounds = array<i64: 1, 32>}, {pipeline_mode = #tpu.pipeline_mode<synchronous>, transform_indices = @transform_9, window_bounds = array<i64: 1, 32>}, {transform_indices = @transform_10, window_bounds = array<i64: 1, 8, 32>}]} {
    %c0 = arith.constant 0 : index
    %c0_0 = arith.constant 0 : index
    %c0_1 = arith.constant 0 : index
    %0 = vector.load %arg1[%c0, %c0_0, %c0_1] : memref<1x8x32xbf16, #tpu.memory_space<vmem>>, vector<1x8x32xbf16>
    %1 = vector.shape_cast %0 : vector<1x8x32xbf16> to vector<8x32xbf16>
    %c0_2 = arith.constant 0 : index
    %c0_3 = arith.constant 0 : index
    %c0_4 = arith.constant 0 : index
    %2 = vector.load %arg2[%c0_2, %c0_3, %c0_4] : memref<1x8x32xbf16, #tpu.memory_space<vmem>>, vector<1x8x32xbf16>
    %3 = vector.shape_cast %2 : vector<1x8x32xbf16> to vector<8x32xbf16>
    %c0_5 = arith.constant 0 : index
    %c0_6 = arith.constant 0 : index
    %4 = vector.load %arg3[%c0_5, %c0_6] : memref<32x32xbf16, #tpu.memory_space<vmem>>, vector<32x32xbf16>
    %cst = arith.constant dense<0.000000e+00> : vector<8x32xf32>
    %5 = tpu.matmul %1, %4, %cst {dimension_numbers = #tpu.dot_dimension_numbers<[1], [0], [0], [1], [0, 0, 1, 1], [], []>} : vector<8x32xbf16>, vector<32x32xbf16>, vector<8x32xf32> -> vector<8x32xf32>
    %c0_7 = arith.constant 0 : index
    %c0_8 = arith.constant 0 : index
    %6 = vector.load %arg4[%c0_7, %c0_8] : memref<1x32xf32, #tpu.memory_space<vmem>>, vector<1x32xf32>
    %7 = vector.broadcast %6 : vector<1x32xf32> to vector<8x32xf32>
    %8 = arith.addf %5, %7 : vector<8x32xf32>
    %c0_9 = arith.constant 0 : index
    %c0_10 = arith.constant 0 : index
    %9 = vector.load %arg5[%c0_9, %c0_10] : memref<32x64xbf16, #tpu.memory_space<vmem>>, vector<32x64xbf16>
    %cst_11 = arith.constant dense<0.000000e+00> : vector<8x64xf32>
    %10 = tpu.matmul %3, %9, %cst_11 {dimension_numbers = #tpu.dot_dimension_numbers<[1], [0], [0], [1], [0, 0, 1, 1], [], []>} : vector<8x32xbf16>, vector<32x64xbf16>, vector<8x64xf32> -> vector<8x64xf32>
    %c0_12 = arith.constant 0 : index
    %c0_13 = arith.constant 0 : index
    %11 = vector.load %arg6[%c0_12, %c0_13] : memref<1x64xf32, #tpu.memory_space<vmem>>, vector<1x64xf32>
    %12 = vector.broadcast %11 : vector<1x64xf32> to vector<8x64xf32>
    %13 = arith.addf %10, %12 : vector<8x64xf32>
    %14 = arith.extf %1 : vector<8x32xbf16> to vector<8x32xf32>
    %15 = vector.extract_strided_slice %13 {offsets = [0, 0], sizes = [8, 32], strides = [1, 1]} : vector<8x64xf32> to vector<8x32xf32>
    %16 = vector.extract_strided_slice %13 {offsets = [0, 32], sizes = [8, 32], strides = [1, 1]} : vector<8x64xf32> to vector<8x32xf32>
    %c0_14 = arith.constant 0 : index
    %c0_15 = arith.constant 0 : index
    %17 = vector.load %arg7[%c0_14, %c0_15] : memref<32x32xbf16, #tpu.memory_space<vmem>>, vector<32x32xbf16>
    %c0_16 = arith.constant 0 : index
    %c0_17 = arith.constant 0 : index
    %18 = vector.load %arg8[%c0_16, %c0_17] : memref<1x32xf32, #tpu.memory_space<vmem>>, vector<1x32xf32>
    %c0_18 = arith.constant 0 : index
    %c0_19 = arith.constant 0 : index
    %19 = vector.load %arg9[%c0_18, %c0_19] : memref<1x32xf32, #tpu.memory_space<vmem>>, vector<1x32xf32>
    %c0_20 = arith.constant 0 : index
    %c0_21 = arith.constant 0 : index
    %20 = vector.load %arg10[%c0_20, %c0_21] : memref<1x32xf32, #tpu.memory_space<vmem>>, vector<1x32xf32>
    %21 = vector.extract_strided_slice %8 {offsets = [0, 0], sizes = [8, 8], strides = [1, 1]} : vector<8x32xf32> to vector<8x8xf32>
    %22 = arith.truncf %21 : vector<8x8xf32> to vector<8x8xbf16>
    %23 = vector.extract_strided_slice %15 {offsets = [0, 0], sizes = [8, 8], strides = [1, 1]} : vector<8x32xf32> to vector<8x8xf32>
    %24 = arith.truncf %23 : vector<8x8xf32> to vector<8x8xbf16>
    %25 = vector.extract_strided_slice %16 {offsets = [0, 0], sizes = [8, 8], strides = [1, 1]} : vector<8x32xf32> to vector<8x8xf32>
    %26 = arith.truncf %25 : vector<8x8xf32> to vector<8x8xbf16>
    %cst_22 = arith.constant dense<0.000000e+00> : vector<8x8xf32>
    %27 = tpu.matmul %22, %24, %cst_22 {dimension_numbers = #tpu.dot_dimension_numbers<[1], [1], [0], [0], [0, 0, 1, 0], [], []>} : vector<8x8xbf16>, vector<8x8xbf16>, vector<8x8xf32> -> vector<8x8xf32>
    %cst_23 = arith.constant 0.353553385 : f32
    %28 = vector.broadcast %cst_23 : f32 to vector<8x8xf32>
    %29 = arith.mulf %27, %28 : vector<8x8xf32>
    %cst_24 = arith.constant dense<0xFF800000> : vector<8xf32>
    %30 = vector.multi_reduction <maximumf>, %29, %cst_24 [1] : vector<8x8xf32> to vector<8xf32>
    %31 = vector.shape_cast %30 : vector<8xf32> to vector<8x1xf32>
    %32 = vector.broadcast %31 : vector<8x1xf32> to vector<8x8xf32>
    %33 = arith.subf %29, %32 : vector<8x8xf32>
    %34 = math.exp %33 : vector<8x8xf32>
    %cst_25 = arith.constant dense<0.000000e+00> : vector<8xf32>
    %35 = vector.multi_reduction <add>, %34, %cst_25 [1] : vector<8x8xf32> to vector<8xf32>
    %36 = vector.shape_cast %35 : vector<8xf32> to vector<8x1xf32>
    %37 = tpu.reciprocal %36 {approx = true} : vector<8x1xf32> -> vector<8x1xf32>
    %38 = vector.broadcast %37 : vector<8x1xf32> to vector<8x8xf32>
    %39 = arith.mulf %34, %38 : vector<8x8xf32>
    %40 = arith.truncf %39 : vector<8x8xf32> to vector<8x8xbf16>
    %cst_26 = arith.constant dense<0.000000e+00> : vector<8x8xf32>
    %41 = tpu.matmul %40, %26, %cst_26 {dimension_numbers = #tpu.dot_dimension_numbers<[1], [0], [0], [1], [0, 0, 1, 1], [], []>} : vector<8x8xbf16>, vector<8x8xbf16>, vector<8x8xf32> -> vector<8x8xf32>
    %42 = vector.extract_strided_slice %8 {offsets = [0, 8], sizes = [8, 8], strides = [1, 1]} : vector<8x32xf32> to vector<8x8xf32>
    %43 = arith.truncf %42 : vector<8x8xf32> to vector<8x8xbf16>
    %44 = vector.extract_strided_slice %15 {offsets = [0, 8], sizes = [8, 8], strides = [1, 1]} : vector<8x32xf32> to vector<8x8xf32>
    %45 = arith.truncf %44 : vector<8x8xf32> to vector<8x8xbf16>
    %46 = vector.extract_strided_slice %16 {offsets = [0, 8], sizes = [8, 8], strides = [1, 1]} : vector<8x32xf32> to vector<8x8xf32>
    %47 = arith.truncf %46 : vector<8x8xf32> to vector<8x8xbf16>
    %cst_27 = arith.constant dense<0.000000e+00> : vector<8x8xf32>
    %48 = tpu.matmul %43, %45, %cst_27 {dimension_numbers = #tpu.dot_dimension_numbers<[1], [1], [0], [0], [0, 0, 1, 0], [], []>} : vector<8x8xbf16>, vector<8x8xbf16>, vector<8x8xf32> -> vector<8x8xf32>
    %cst_28 = arith.constant 0.353553385 : f32
    %49 = vector.broadcast %cst_28 : f32 to vector<8x8xf32>
    %50 = arith.mulf %48, %49 : vector<8x8xf32>
    %cst_29 = arith.constant dense<0xFF800000> : vector<8xf32>
    %51 = vector.multi_reduction <maximumf>, %50, %cst_29 [1] : vector<8x8xf32> to vector<8xf32>
    %52 = vector.shape_cast %51 : vector<8xf32> to vector<8x1xf32>
    %53 = vector.broadcast %52 : vector<8x1xf32> to vector<8x8xf32>
    %54 = arith.subf %50, %53 : vector<8x8xf32>
    %55 = math.exp %54 : vector<8x8xf32>
    %cst_30 = arith.constant dense<0.000000e+00> : vector<8xf32>
    %56 = vector.multi_reduction <add>, %55, %cst_30 [1] : vector<8x8xf32> to vector<8xf32>
    %57 = vector.shape_cast %56 : vector<8xf32> to vector<8x1xf32>
    %58 = tpu.reciprocal %57 {approx = true} : vector<8x1xf32> -> vector<8x1xf32>
    %59 = vector.broadcast %58 : vector<8x1xf32> to vector<8x8xf32>
    %60 = arith.mulf %55, %59 : vector<8x8xf32>
    %61 = arith.truncf %60 : vector<8x8xf32> to vector<8x8xbf16>
    %cst_31 = arith.constant dense<0.000000e+00> : vector<8x8xf32>
    %62 = tpu.matmul %61, %47, %cst_31 {dimension_numbers = #tpu.dot_dimension_numbers<[1], [0], [0], [1], [0, 0, 1, 1], [], []>} : vector<8x8xbf16>, vector<8x8xbf16>, vector<8x8xf32> -> vector<8x8xf32>
    %63 = vector.extract_strided_slice %8 {offsets = [0, 16], sizes = [8, 8], strides = [1, 1]} : vector<8x32xf32> to vector<8x8xf32>
    %64 = arith.truncf %63 : vector<8x8xf32> to vector<8x8xbf16>
    %65 = vector.extract_strided_slice %15 {offsets = [0, 16], sizes = [8, 8], strides = [1, 1]} : vector<8x32xf32> to vector<8x8xf32>
    %66 = arith.truncf %65 : vector<8x8xf32> to vector<8x8xbf16>
    %67 = vector.extract_strided_slice %16 {offsets = [0, 16], sizes = [8, 8], strides = [1, 1]} : vector<8x32xf32> to vector<8x8xf32>
    %68 = arith.truncf %67 : vector<8x8xf32> to vector<8x8xbf16>
    %cst_32 = arith.constant dense<0.000000e+00> : vector<8x8xf32>
    %69 = tpu.matmul %64, %66, %cst_32 {dimension_numbers = #tpu.dot_dimension_numbers<[1], [1], [0], [0], [0, 0, 1, 0], [], []>} : vector<8x8xbf16>, vector<8x8xbf16>, vector<8x8xf32> -> vector<8x8xf32>
    %cst_33 = arith.constant 0.353553385 : f32
    %70 = vector.broadcast %cst_33 : f32 to vector<8x8xf32>
    %71 = arith.mulf %69, %70 : vector<8x8xf32>
    %cst_34 = arith.constant dense<0xFF800000> : vector<8xf32>
    %72 = vector.multi_reduction <maximumf>, %71, %cst_34 [1] : vector<8x8xf32> to vector<8xf32>
    %73 = vector.shape_cast %72 : vector<8xf32> to vector<8x1xf32>
    %74 = vector.broadcast %73 : vector<8x1xf32> to vector<8x8xf32>
    %75 = arith.subf %71, %74 : vector<8x8xf32>
    %76 = math.exp %75 : vector<8x8xf32>
    %cst_35 = arith.constant dense<0.000000e+00> : vector<8xf32>
    %77 = vector.multi_reduction <add>, %76, %cst_35 [1] : vector<8x8xf32> to vector<8xf32>
    %78 = vector.shape_cast %77 : vector<8xf32> to vector<8x1xf32>
    %79 = tpu.reciprocal %78 {approx = true} : vector<8x1xf32> -> vector<8x1xf32>
    %80 = vector.broadcast %79 : vector<8x1xf32> to vector<8x8xf32>
    %81 = arith.mulf %76, %80 : vector<8x8xf32>
    %82 = arith.truncf %81 : vector<8x8xf32> to vector<8x8xbf16>
    %cst_36 = arith.constant dense<0.000000e+00> : vector<8x8xf32>
    %83 = tpu.matmul %82, %68, %cst_36 {dimension_numbers = #tpu.dot_dimension_numbers<[1], [0], [0], [1], [0, 0, 1, 1], [], []>} : vector<8x8xbf16>, vector<8x8xbf16>, vector<8x8xf32> -> vector<8x8xf32>
    %84 = vector.extract_strided_slice %8 {offsets = [0, 24], sizes = [8, 8], strides = [1, 1]} : vector<8x32xf32> to vector<8x8xf32>
    %85 = arith.truncf %84 : vector<8x8xf32> to vector<8x8xbf16>
    %86 = vector.extract_strided_slice %15 {offsets = [0, 24], sizes = [8, 8], strides = [1, 1]} : vector<8x32xf32> to vector<8x8xf32>
    %87 = arith.truncf %86 : vector<8x8xf32> to vector<8x8xbf16>
    %88 = vector.extract_strided_slice %16 {offsets = [0, 24], sizes = [8, 8], strides = [1, 1]} : vector<8x32xf32> to vector<8x8xf32>
    %89 = arith.truncf %88 : vector<8x8xf32> to vector<8x8xbf16>
    %cst_37 = arith.constant dense<0.000000e+00> : vector<8x8xf32>
    %90 = tpu.matmul %85, %87, %cst_37 {dimension_numbers = #tpu.dot_dimension_numbers<[1], [1], [0], [0], [0, 0, 1, 0], [], []>} : vector<8x8xbf16>, vector<8x8xbf16>, vector<8x8xf32> -> vector<8x8xf32>
    %cst_38 = arith.constant 0.353553385 : f32
    %91 = vector.broadcast %cst_38 : f32 to vector<8x8xf32>
    %92 = arith.mulf %90, %91 : vector<8x8xf32>
    %cst_39 = arith.constant dense<0xFF800000> : vector<8xf32>
    %93 = vector.multi_reduction <maximumf>, %92, %cst_39 [1] : vector<8x8xf32> to vector<8xf32>
    %94 = vector.shape_cast %93 : vector<8xf32> to vector<8x1xf32>
    %95 = vector.broadcast %94 : vector<8x1xf32> to vector<8x8xf32>
    %96 = arith.subf %92, %95 : vector<8x8xf32>
    %97 = math.exp %96 : vector<8x8xf32>
    %cst_40 = arith.constant dense<0.000000e+00> : vector<8xf32>
    %98 = vector.multi_reduction <add>, %97, %cst_40 [1] : vector<8x8xf32> to vector<8xf32>
    %99 = vector.shape_cast %98 : vector<8xf32> to vector<8x1xf32>
    %100 = tpu.reciprocal %99 {approx = true} : vector<8x1xf32> -> vector<8x1xf32>
    %101 = vector.broadcast %100 : vector<8x1xf32> to vector<8x8xf32>
    %102 = arith.mulf %97, %101 : vector<8x8xf32>
    %103 = arith.truncf %102 : vector<8x8xf32> to vector<8x8xbf16>
    %cst_41 = arith.constant dense<0.000000e+00> : vector<8x8xf32>
    %104 = tpu.matmul %103, %89, %cst_41 {dimension_numbers = #tpu.dot_dimension_numbers<[1], [0], [0], [1], [0, 0, 1, 1], [], []>} : vector<8x8xbf16>, vector<8x8xbf16>, vector<8x8xf32> -> vector<8x8xf32>
    %105 = tpu.concatenate %41, %62, %83, %104 in 1 : vector<8x8xf32>, vector<8x8xf32>, vector<8x8xf32>, vector<8x8xf32> -> vector<8x32xf32>
    %106 = arith.truncf %105 : vector<8x32xf32> to vector<8x32xbf16>
    %cst_42 = arith.constant dense<0.000000e+00> : vector<8x32xf32>
    %107 = tpu.matmul %106, %17, %cst_42 {dimension_numbers = #tpu.dot_dimension_numbers<[1], [0], [0], [1], [0, 0, 1, 1], [], []>} : vector<8x32xbf16>, vector<32x32xbf16>, vector<8x32xf32> -> vector<8x32xf32>
    %108 = vector.broadcast %18 : vector<1x32xf32> to vector<8x32xf32>
    %109 = arith.addf %107, %108 : vector<8x32xf32>
    %110 = arith.addf %109, %14 : vector<8x32xf32>
    %cst_43 = arith.constant dense<0.000000e+00> : vector<8xf32>
    %111 = vector.multi_reduction <add>, %110, %cst_43 [1] : vector<8x32xf32> to vector<8xf32>
    %112 = vector.shape_cast %111 : vector<8xf32> to vector<8x1xf32>
    %cst_44 = arith.constant 3.200000e+01 : f32
    %113 = vector.broadcast %cst_44 : f32 to vector<8x1xf32>
    %114 = arith.divf %112, %113 : vector<8x1xf32>
    %115 = vector.broadcast %114 : vector<8x1xf32> to vector<8x32xf32>
    %116 = arith.subf %110, %115 : vector<8x32xf32>
    %117 = arith.mulf %116, %116 : vector<8x32xf32>
    %cst_45 = arith.constant dense<0.000000e+00> : vector<8xf32>
    %118 = vector.multi_reduction <add>, %117, %cst_45 [1] : vector<8x32xf32> to vector<8xf32>
    %119 = vector.shape_cast %118 : vector<8xf32> to vector<8x1xf32>
    %cst_46 = arith.constant 3.200000e+01 : f32
    %120 = vector.broadcast %cst_46 : f32 to vector<8x1xf32>
    %121 = arith.divf %119, %120 : vector<8x1xf32>
    %122 = vector.broadcast %114 : vector<8x1xf32> to vector<8x32xf32>
    %123 = arith.subf %110, %122 : vector<8x32xf32>
    %cst_47 = arith.constant 9.99999974E-6 : f32
    %124 = vector.broadcast %cst_47 : f32 to vector<8x1xf32>
    %125 = arith.addf %121, %124 : vector<8x1xf32>
    %126 = math.rsqrt %125 : vector<8x1xf32>
    %127 = vector.broadcast %126 : vector<8x1xf32> to vector<8x32xf32>
    %128 = arith.mulf %123, %127 : vector<8x32xf32>
    %129 = vector.broadcast %19 : vector<1x32xf32> to vector<8x32xf32>
    %130 = arith.mulf %128, %129 : vector<8x32xf32>
    %131 = vector.broadcast %20 : vector<1x32xf32> to vector<8x32xf32>
    %132 = arith.addf %130, %131 : vector<8x32xf32>
    %133 = arith.truncf %132 : vector<8x32xf32> to vector<8x32xbf16>
    %c0_48 = arith.constant 0 : index
    %c0_49 = arith.constant 0 : index
    %c0_50 = arith.constant 0 : index
    %134 = vector.load %arg11[%c0_48, %c0_49, %c0_50] : memref<1x8x32xbf16, #tpu.memory_space<vmem>>, vector<1x8x32xbf16>
    %135 = vector.shape_cast %134 : vector<1x8x32xbf16> to vector<8x32xbf16>
    %136 = vector.shape_cast %133 : vector<8x32xbf16> to vector<1x8x32xbf16>
    tpu.vector_store %arg11[%c0_48, %c0_49, %c0_50], %136 {strides = array<i32>} : memref<1x8x32xbf16, #tpu.memory_space<vmem>>, vector<1x8x32xbf16>,
    return
  }
  func.func @transform_0(%arg0: i32) -> (i32, i32, i32) {
    %c0_i32 = arith.constant 0 : i32
    %c0_i32_0 = arith.constant 0 : i32
    %c0_i32_1 = arith.constant 0 : i32
    return %arg0, %c0_i32, %c0_i32_0 : i32, i32, i32
  }
  func.func @transform_1(%arg0: i32) -> (i32, i32, i32) {
    %c0_i32 = arith.constant 0 : i32
    %c0_i32_0 = arith.constant 0 : i32
    %c0_i32_1 = arith.constant 0 : i32
    return %arg0, %c0_i32, %c0_i32_0 : i32, i32, i32
  }
  func.func @transform_2(%arg0: i32) -> (i32, i32) {
    %c0_i32 = arith.constant 0 : i32
    %c0_i32_0 = arith.constant 0 : i32
    %c0_i32_1 = arith.constant 0 : i32
    return %c0_i32, %c0_i32_0 : i32, i32
  }
  func.func @transform_3(%arg0: i32) -> (i32, i32) {
    %c0_i32 = arith.constant 0 : i32
    %c0_i32_0 = arith.constant 0 : i32
    %c0_i32_1 = arith.constant 0 : i32
    return %c0_i32, %c0_i32_0 : i32, i32
  }
  func.func @transform_4(%arg0: i32) -> (i32, i32) {
    %c0_i32 = arith.constant 0 : i32
    %c0_i32_0 = arith.constant 0 : i32
    %c0_i32_1 = arith.constant 0 : i32
    return %c0_i32, %c0_i32_0 : i32, i32
  }
  func.func @transform_5(%arg0: i32) -> (i32, i32) {
    %c0_i32 = arith.constant 0 : i32
    %c0_i32_0 = arith.constant 0 : i32
    %c0_i32_1 = arith.constant 0 : i32
    return %c0_i32, %c0_i32_0 : i32, i32
  }
  func.func @transform_6(%arg0: i32) -> (i32, i32) {
    %c0_i32 = arith.constant 0 : i32
    %c0_i32_0 = arith.constant 0 : i32
    %c0_i32_1 = arith.constant 0 : i32
    return %c0_i32, %c0_i32_0 : i32, i32
  }
  func.func @transform_7(%arg0: i32) -> (i32, i32) {
    %c0_i32 = arith.constant 0 : i32
    %c0_i32_0 = arith.constant 0 : i32
    %c0_i32_1 = arith.constant 0 : i32
    return %c0_i32, %c0_i32_0 : i32, i32
  }
  func.func @transform_8(%arg0: i32) -> (i32, i32) {
    %c0_i32 = arith.constant 0 : i32
    %c0_i32_0 = arith.constant 0 : i32
    %c0_i32_1 = arith.constant 0 : i32
    return %c0_i32, %c0_i32_0 : i32, i32
  }
  func.func @transform_9(%arg0: i32) -> (i32, i32) {
    %c0_i32 = arith.constant 0 : i32
    %c0_i32_0 = arith.constant 0 : i32
    %c0_i32_1 = arith.constant 0 : i32
    return %c0_i32, %c0_i32_0 : i32, i32
  }
  func.func @transform_10(%arg0: i32) -> (i32, i32, i32) {
    %c0_i32 = arith.constant 0 : i32
    %c0_i32_0 = arith.constant 0 : i32
    %c0_i32_1 = arith.constant 0 : i32
    return %arg0, %c0_i32, %c0_i32_0 : i32, i32, i32
  }
}

module attributes {stable_mosaic.version = 11 : i64} {
  func.func @_ln_logits_kernel(%arg0: i32, %arg1: i32, %arg2: memref<16x32xbf16, #tpu.memory_space<vmem>>, %arg3: memref<1x32xf32, #tpu.memory_space<vmem>>, %arg4: memref<1x32xf32, #tpu.memory_space<vmem>>, %arg5: memref<1x32xf32, #tpu.memory_space<vmem>>, %arg6: memref<128x32xbf16, #tpu.memory_space<vmem>>, %arg7: memref<16x128xf32, #tpu.memory_space<vmem>>, %arg8: memref<16x32xbf16, #tpu.memory_space<vmem>>) attributes {dimension_semantics = [#tpu.dimension_semantics<parallel>, #tpu.dimension_semantics<arbitrary>], iteration_bounds = array<i64: 1, 1>, scalar_prefetch = 0 : i64, scratch_operands = 1 : i64, tpu.core_type = #tpu.core_type<tc>, window_params = [{transform_indices = @transform_0, window_bounds = array<i64: 16, 32>}, {pipeline_mode = #tpu.pipeline_mode<synchronous>, transform_indices = @transform_1, window_bounds = array<i64: 1, 32>}, {pipeline_mode = #tpu.pipeline_mode<synchronous>, transform_indices = @transform_2, window_bounds = array<i64: 1, 32>}, {pipeline_mode = #tpu.pipeline_mode<synchronous>, transform_indices = @transform_3, window_bounds = array<i64: 1, 32>}, {transform_indices = @transform_4, window_bounds = array<i64: 128, 32>}, {transform_indices = @transform_5, window_bounds = array<i64: 16, 128>}]} {
    %c0_i32 = arith.constant 0 : i32
    %0 = arith.cmpi eq, %arg1, %c0_i32 : i32
    %1 = arith.extui %0 : i1 to i32
    %c0_i32_0 = arith.constant 0 : i32
    %2 = arith.cmpi ne, %1, %c0_i32_0 : i32
    scf.if %2 {
      %c0_11 = arith.constant 0 : index
      %c0_12 = arith.constant 0 : index
      %19 = vector.load %arg2[%c0_11, %c0_12] : memref<16x32xbf16, #tpu.memory_space<vmem>>, vector<16x32xbf16>
      %20 = arith.extf %19 : vector<16x32xbf16> to vector<16x32xf32>
      %cst_13 = arith.constant dense<0.000000e+00> : vector<16xf32>
      %21 = vector.multi_reduction <add>, %20, %cst_13 [1] : vector<16x32xf32> to vector<16xf32>
      %22 = vector.shape_cast %21 : vector<16xf32> to vector<16x1xf32>
      %cst_14 = arith.constant 3.200000e+01 : f32
      %23 = vector.broadcast %cst_14 : f32 to vector<16x1xf32>
      %24 = arith.divf %22, %23 : vector<16x1xf32>
      %25 = vector.broadcast %24 : vector<16x1xf32> to vector<16x32xf32>
      %26 = arith.subf %20, %25 : vector<16x32xf32>
      %27 = arith.mulf %26, %26 : vector<16x32xf32>
      %cst_15 = arith.constant dense<0.000000e+00> : vector<16xf32>
      %28 = vector.multi_reduction <add>, %27, %cst_15 [1] : vector<16x32xf32> to vector<16xf32>
      %29 = vector.shape_cast %28 : vector<16xf32> to vector<16x1xf32>
      %cst_16 = arith.constant 3.200000e+01 : f32
      %30 = vector.broadcast %cst_16 : f32 to vector<16x1xf32>
      %31 = arith.divf %29, %30 : vector<16x1xf32>
      %32 = vector.broadcast %24 : vector<16x1xf32> to vector<16x32xf32>
      %33 = arith.subf %20, %32 : vector<16x32xf32>
      %cst_17 = arith.constant 9.99999974E-6 : f32
      %34 = vector.broadcast %cst_17 : f32 to vector<16x1xf32>
      %35 = arith.addf %31, %34 : vector<16x1xf32>
      %36 = math.rsqrt %35 : vector<16x1xf32>
      %37 = vector.broadcast %36 : vector<16x1xf32> to vector<16x32xf32>
      %38 = arith.mulf %33, %37 : vector<16x32xf32>
      %c0_18 = arith.constant 0 : index
      %c0_19 = arith.constant 0 : index
      %39 = vector.load %arg3[%c0_18, %c0_19] : memref<1x32xf32, #tpu.memory_space<vmem>>, vector<1x32xf32>
      %40 = vector.broadcast %39 : vector<1x32xf32> to vector<16x32xf32>
      %41 = arith.mulf %38, %40 : vector<16x32xf32>
      %c0_20 = arith.constant 0 : index
      %c0_21 = arith.constant 0 : index
      %42 = vector.load %arg4[%c0_20, %c0_21] : memref<1x32xf32, #tpu.memory_space<vmem>>, vector<1x32xf32>
      %43 = vector.broadcast %42 : vector<1x32xf32> to vector<16x32xf32>
      %44 = arith.addf %41, %43 : vector<16x32xf32>
      %45 = arith.truncf %44 : vector<16x32xf32> to vector<16x32xbf16>
      %c0_22 = arith.constant 0 : index
      %c0_23 = arith.constant 0 : index
      %46 = vector.load %arg8[%c0_22, %c0_23] : memref<16x32xbf16, #tpu.memory_space<vmem>>, vector<16x32xbf16>
      tpu.vector_store %arg8[%c0_22, %c0_23], %45 {strides = array<i32>} : memref<16x32xbf16, #tpu.memory_space<vmem>>, vector<16x32xbf16>,
    } else {
    }
    %c0 = arith.constant 0 : index
    %c0_1 = arith.constant 0 : index
    %3 = vector.load %arg8[%c0, %c0_1] : memref<16x32xbf16, #tpu.memory_space<vmem>>, vector<16x32xbf16>
    %c0_2 = arith.constant 0 : index
    %c0_3 = arith.constant 0 : index
    %4 = vector.load %arg6[%c0_2, %c0_3] : memref<128x32xbf16, #tpu.memory_space<vmem>>, vector<128x32xbf16>
    %cst = arith.constant dense<0.000000e+00> : vector<16x128xf32>
    %5 = tpu.matmul %3, %4, %cst {dimension_numbers = #tpu.dot_dimension_numbers<[1], [1], [0], [0], [0, 0, 1, 0], [], []>} : vector<16x32xbf16>, vector<128x32xbf16>, vector<16x128xf32> -> vector<16x128xf32>
    %cst_4 = arith.constant 0.176776692 : f32
    %6 = vector.broadcast %cst_4 : f32 to vector<16x128xf32>
    %7 = arith.mulf %5, %6 : vector<16x128xf32>
    %8 = arith.extf %3 : vector<16x32xbf16> to vector<16x32xf32>
    %c0_5 = arith.constant 0 : index
    %c0_6 = arith.constant 0 : index
    %9 = vector.load %arg5[%c0_5, %c0_6] : memref<1x32xf32, #tpu.memory_space<vmem>>, vector<1x32xf32>
    %10 = vector.broadcast %9 : vector<1x32xf32> to vector<16x32xf32>
    %11 = arith.mulf %8, %10 : vector<16x32xf32>
    %cst_7 = arith.constant dense<0.000000e+00> : vector<16xf32>
    %12 = vector.multi_reduction <add>, %11, %cst_7 [1] : vector<16x32xf32> to vector<16xf32>
    %13 = vector.shape_cast %12 : vector<16xf32> to vector<16x1xf32>
    %cst_8 = arith.constant 0.176776692 : f32
    %14 = vector.broadcast %cst_8 : f32 to vector<16x1xf32>
    %15 = arith.mulf %13, %14 : vector<16x1xf32>
    %16 = vector.broadcast %15 : vector<16x1xf32> to vector<16x128xf32>
    %17 = arith.subf %7, %16 : vector<16x128xf32>
    %c0_9 = arith.constant 0 : index
    %c0_10 = arith.constant 0 : index
    %18 = vector.load %arg7[%c0_9, %c0_10] : memref<16x128xf32, #tpu.memory_space<vmem>>, vector<16x128xf32>
    tpu.vector_store %arg7[%c0_9, %c0_10], %17 {strides = array<i32>} : memref<16x128xf32, #tpu.memory_space<vmem>>, vector<16x128xf32>,
    return
  }
  func.func @transform_0(%arg0: i32, %arg1: i32) -> (i32, i32) {
    %c0_i32 = arith.constant 0 : i32
    %c0_i32_0 = arith.constant 0 : i32
    return %arg0, %c0_i32 : i32, i32
  }
  func.func @transform_1(%arg0: i32, %arg1: i32) -> (i32, i32) {
    %c0_i32 = arith.constant 0 : i32
    %c0_i32_0 = arith.constant 0 : i32
    %c0_i32_1 = arith.constant 0 : i32
    return %c0_i32, %c0_i32_0 : i32, i32
  }
  func.func @transform_2(%arg0: i32, %arg1: i32) -> (i32, i32) {
    %c0_i32 = arith.constant 0 : i32
    %c0_i32_0 = arith.constant 0 : i32
    %c0_i32_1 = arith.constant 0 : i32
    return %c0_i32, %c0_i32_0 : i32, i32
  }
  func.func @transform_3(%arg0: i32, %arg1: i32) -> (i32, i32) {
    %c0_i32 = arith.constant 0 : i32
    %c0_i32_0 = arith.constant 0 : i32
    %c0_i32_1 = arith.constant 0 : i32
    return %c0_i32, %c0_i32_0 : i32, i32
  }
  func.func @transform_4(%arg0: i32, %arg1: i32) -> (i32, i32) {
    %c0_i32 = arith.constant 0 : i32
    %c0_i32_0 = arith.constant 0 : i32
    return %arg1, %c0_i32 : i32, i32
  }
  func.func @transform_5(%arg0: i32, %arg1: i32) -> (i32, i32) {
    %c0_i32 = arith.constant 0 : i32
    return %arg0, %arg1 : i32, i32
  }
}

</mosaic_0001>

<llo_original>
// kernel: seq2seq_transformer.16
$region0: #{seq2seq_transformer.16}
  #allocation0 [shape = 'u32[]', space=smem, size = 0x4, offset = 0x4, fixed_abs, tag = 'smem constant byte address 0x4 - core index']
  #allocation1 [shape = 'u32[144,128]{1,0:T(1,128)}', space=vmem, size = 0x12000, scoped, tag = 'internal scratch']
  %s0 = inlined_call_operand.vmem [shape: bf16[16,32], index: 0, kind: input, shape index: {}]
  %s1 = inlined_call_operand.vmem [shape: f32[1,32], index: 1, kind: input, shape index: {}]
  %s2 = inlined_call_operand.vmem [shape: f32[1,32], index: 2, kind: input, shape index: {}]
  %s3 = inlined_call_operand.vmem [shape: bf16[16,32], index: 3, kind: output, shape index: {}]
  %s4 = sld [smem:[#allocation0]]
  $region22: #{seq2seq_transformer.16} parent=0
    _
  %s6 = ssub.s32 1, %s4
  %s7 = scalar_select 0, %s6, %s4
  // Predicated region
  $region2: #{seq2seq_transformer.16} parent=0 // pred_check
    _
  $region3: #{seq2seq_transformer.16} parent=0 // pred_check_branch
    %9 = sbr.rel (0) target = $region5
  $region4: #{seq2seq_transformer.16} parent=0 // pred_region
    _
  $region5: #{seq2seq_transformer.16} parent=0 // pred_fallthru
    _
  // Predicated region
  $region6: #{seq2seq_transformer.16} parent=0 // pred_check
    _
  $region7: #{seq2seq_transformer.16} parent=0 // pred_check_branch
    %11 = sbr.rel (0) target = $region9
  $region8: #{seq2seq_transformer.16} parent=0 // pred_region
    _
  $region9: #{seq2seq_transformer.16} parent=0 // pred_fallthru
    _
  // Predicated region
  $region10: #{seq2seq_transformer.16} parent=0 // pred_check
    _
  $region11: #{seq2seq_transformer.16} parent=0 // pred_check_branch
    %13 = sbr.rel (0) target = $region13
  $region12: #{seq2seq_transformer.16} parent=0 // pred_region
    _
  $region13: #{seq2seq_transformer.16} parent=0 // pred_fallthru
    _
  %v14 = vld [vmem:[%s0] sm:$0xf]
  %v15 = vld [vmem:[%s0 + $0x4] sm:$0xf]
  %v16 = vunpack.c.l.bf16 %v14
  %v17 = vunpack.c.l.bf16 %v15
  %vm18 = vcmask 261120
  %v19 = vsel %vm18, %v16, 0.0
  %20 = vadd.xlane.f32.xlu0 %v19
  %v21 = vpop.xlane.xlu0 %20
  %v22 = vsel %vm18, %v17, 0.0
  %23 = vadd.xlane.f32.xlu0 %v22
  %v24 = vpop.xlane.xlu0 %23
  %v25 = vrcp.pop 32.0
  %v26 = vmul.f32 %v21, %v25
  %v27 = vmul.f32 %v24, %v25
  %v28 = vsub.f32 %v16, %v26
  %v29 = vsub.f32 %v17, %v27
  %v30 = vmul.f32 %v28, %v28
  %v31 = vmul.f32 %v29, %v29
  %v32 = vsel %vm18, %v30, 0.0
  %33 = vadd.xlane.f32.xlu0 %v32
  %v34 = vpop.xlane.xlu0 %33
  %v35 = vsel %vm18, %v31, 0.0
  %36 = vadd.xlane.f32.xlu0 %v35
  %v37 = vpop.xlane.xlu0 %36
  %v38 = vmul.f32 %v34, %v25
  %v39 = vmul.f32 %v37, %v25
  %v40 = vadd.f32 %v38, 1e-05
  %v41 = vadd.f32 %v39, 1e-05
  %v42 = vrsqrt.pop %v40
  %v43 = vrsqrt.pop %v41
  %v44 = vmul.f32 %v28, %v42
  %v45 = vmul.f32 %v29, %v43
  %v46 = vld [vmem:[%s1] sm:$0x1]
  %v48 = vlaneseq
  %v49 = vshrl.u32 %v48, 7
  %v50 = vsub.s32 0, %v49
  %v51 = vrot.slane %v46, %v50
  %v53 = vmul.f32 %v44, %v51
  %v54 = vmul.f32 %v45, %v51
  %v55 = vld [vmem:[%s2] sm:$0x1]
  %v57 = vlaneseq
  %v58 = vshrl.u32 %v57, 7
  %v59 = vsub.s32 0, %v58
  %v60 = vrot.slane %v55, %v59
  %v62 = vadd.f32 %v53, %v60
  %v63 = vadd.f32 %v54, %v60
  %v64 = vpack.c.bf16 %v63, %v62
  %v66 = vunpack.c.l.b16 %v64
  %v67 = vunpack.c.h.b16 %v64
  %v68 = vpack.c.b16 %v66, %v66
  %v69 = vpack.c.b16 %v67, %v67
  %vm72 = vcmask 257024
  %73 = vst.msk [vmem:[%s3] sm:$0xf] %vm72, %v68
  %74 = vst.msk [vmem:[%s3 + $0x4] sm:$0xf] %vm72, %v69
  // Predicated region
  $region14: #{seq2seq_transformer.16} parent=0 // pred_check
    _
  $region15: #{seq2seq_transformer.16} parent=0 // pred_check_branch
    %76 = sbr.rel (0) target = $region17
  $region16: #{seq2seq_transformer.16} parent=0 // pred_region
    _
  $region17: #{seq2seq_transformer.16} parent=0 // pred_fallthru
    _
  // Predicated region
  $region18: #{seq2seq_transformer.16} parent=0 // pred_check
    _
  $region19: #{seq2seq_transformer.16} parent=0 // pred_check_branch
    %78 = sbr.rel (0) target = $region21
  $region20: #{seq2seq_transformer.16} parent=0 // pred_region
    _
  $region21: #{seq2seq_transformer.16} parent=0 // pred_fallthru
    _

// kernel: seq2seq_transformer.13
$region0: #{seq2seq_transformer.13}
  #allocation0 [shape = 'u32[]', space=smem, size = 0x4, offset = 0x4, fixed_abs, tag = 'smem constant byte address 0x4 - core index']
  #allocation1 [shape = 'u32[144,128]{1,0:T(1,128)}', space=vmem, size = 0x12000, scoped, tag = 'internal scratch']
  %s0 = inlined_call_operand.vmem [shape: bf16[16,32], index: 0, kind: input, shape index: {}]
  %s1 = inlined_call_operand.vmem [shape: bf16[32,64], index: 1, kind: input, shape index: {}]
  %s2 = inlined_call_operand.vmem [shape: f32[1,64], index: 2, kind: input, shape index: {}]
  %s3 = inlined_call_operand.vmem [shape: bf16[64,32], index: 3, kind: input, shape index: {}]
  %s4 = inlined_call_operand.vmem [shape: f32[1,32], index: 4, kind: input, shape index: {}]
  %s5 = inlined_call_operand.vmem [shape: f32[1,32], index: 5, kind: input, shape index: {}]
  %s6 = inlined_call_operand.vmem [shape: f32[1,32], index: 6, kind: input, shape index: {}]
  %s7 = inlined_call_operand.vmem [shape: bf16[16,32], index: 7, kind: output, shape index: {}]
  %s8 = sld [smem:[#allocation0]]
  $region38: #{seq2seq_transformer.13} parent=0
    _
  %s10 = ssub.s32 1, %s8
  %s11 = scalar_select 0, %s10, %s8
  // Predicated region
  $region2: #{seq2seq_transformer.13} parent=0 // pred_check
    _
  $region3: #{seq2seq_transformer.13} parent=0 // pred_check_branch
    %13 = sbr.rel (0) target = $region5
  $region4: #{seq2seq_transformer.13} parent=0 // pred_region
    _
  $region5: #{seq2seq_transformer.13} parent=0 // pred_fallthru
    _
  // Predicated region
  $region6: #{seq2seq_transformer.13} parent=0 // pred_check
    _
  $region7: #{seq2seq_transformer.13} parent=0 // pred_check_branch
    %15 = sbr.rel (0) target = $region9
  $region8: #{seq2seq_transformer.13} parent=0 // pred_region
    _
  $region9: #{seq2seq_transformer.13} parent=0 // pred_fallthru
    _
  // Predicated region
  $region10: #{seq2seq_transformer.13} parent=0 // pred_check
    _
  $region11: #{seq2seq_transformer.13} parent=0 // pred_check_branch
    %17 = sbr.rel (0) target = $region13
  $region12: #{seq2seq_transformer.13} parent=0 // pred_region
    _
  $region13: #{seq2seq_transformer.13} parent=0 // pred_fallthru
    _
  // Predicated region
  $region14: #{seq2seq_transformer.13} parent=0 // pred_check
    _
  $region15: #{seq2seq_transformer.13} parent=0 // pred_check_branch
    %19 = sbr.rel (0) target = $region17
  $region16: #{seq2seq_transformer.13} parent=0 // pred_region
    _
  $region17: #{seq2seq_transformer.13} parent=0 // pred_fallthru
    _
  // Predicated region
  $region18: #{seq2seq_transformer.13} parent=0 // pred_check
    _
  $region19: #{seq2seq_transformer.13} parent=0 // pred_check_branch
    %21 = sbr.rel (0) target = $region21
  $region20: #{seq2seq_transformer.13} parent=0 // pred_region
    _
  $region21: #{seq2seq_transformer.13} parent=0 // pred_fallthru
    _
  // Predicated region
  $region22: #{seq2seq_transformer.13} parent=0 // pred_check
    _
  $region23: #{seq2seq_transformer.13} parent=0 // pred_check_branch
    %23 = sbr.rel (0) target = $region25
  $region24: #{seq2seq_transformer.13} parent=0 // pred_region
    _
  $region25: #{seq2seq_transformer.13} parent=0 // pred_fallthru
    _
  // Predicated region
  $region26: #{seq2seq_transformer.13} parent=0 // pred_check
    _
  $region27: #{seq2seq_transformer.13} parent=0 // pred_check_branch
    %25 = sbr.rel (0) target = $region29
  $region28: #{seq2seq_transformer.13} parent=0 // pred_region
    _
  $region29: #{seq2seq_transformer.13} parent=0 // pred_fallthru
    _
  %v27 = vld [vmem:[%s0] sm:$0xf]
  %v28 = vld [vmem:[%s0 + $0x4] sm:$0xf]
  %v29 = vld [vmem:[%s1] sm:$0xf]
  %v30 = vld [vmem:[%s1 + $0x4] sm:$0xf]
  %v31 = vld [vmem:[%s1 + $0x8] sm:$0xf]
  %v32 = vld [vmem:[%s1 + $0xc] sm:$0xf]
  %v33 = vld [vmem:[%s2] sm:$0x1]
  %v35 = vlaneseq
  %v36 = vshrl.u32 %v35, 7
  %v37 = vsub.s32 0, %v36
  %v38 = vrot.slane %v33, %v37
  %v42 = vunpack.c.l.b16 %v27
  %v43 = vunpack.c.l.b16 %v28
  %v44 = vpack.c.b16 %v43, %v42
  %v49 = vunpack.c.l.b16 %v29
  %v50 = vunpack.c.l.b16 %v30
  %v51 = vunpack.c.l.b16 %v31
  %v52 = vunpack.c.l.b16 %v32
  %v53 = vpack.c.b16 %v50, %v49
  %v54 = vpack.c.b16 %v52, %v51
  %vm57 = vcmask 261120
  %v59 = vsel %vm57, %v44, 0
  %61 = vmatprep.subr.bf16.mxu0 0
  %62 = vmatpush1.bf16.msra.mxu0 %v53
  %63 = vmatprep.subr.bf16.mxu0 0
  %64 = vmatpush1.bf16.msra.mxu0 %v54
  %65 = vmatprep.subr.bf16.mxu0 0
  %66 = vmatpush1.bf16.msra.mxu0 0
  %67 = vmatprep.subr.bf16.mxu0 0
  %68 = vmatpush1.bf16.msra.mxu0 0
  %69 = vmatprep.subr.bf16.mxu0 0
  %70 = vmatpush1.bf16.msra.mxu0 0
  %71 = vmatprep.subr.bf16.mxu0 0
  %72 = vmatpush1.bf16.msra.mxu0 0
  %73 = vmatprep.subr.bf16.mxu0 0
  %74 = vmatpush1.bf16.msra.mxu0 0
  %75 = vmatprep.subr.bf16.mxu0 0
  %76 = vmatpush1.bf16.msra.mxu0 0
  %77 = vmatprep.subr.bf16.mxu0 0
  %78 = vmatpush1.bf16.msra.mxu0 0
  %79 = vmatprep.subr.bf16.mxu0 0
  %80 = vmatpush1.bf16.msra.mxu0 0
  %81 = vmatprep.subr.bf16.mxu0 0
  %82 = vmatpush1.bf16.msra.mxu0 0
  %83 = vmatprep.subr.bf16.mxu0 0
  %84 = vmatpush1.bf16.msra.mxu0 0
  %85 = vmatprep.subr.bf16.mxu0 0
  %86 = vmatpush1.bf16.msra.mxu0 0
  %87 = vmatprep.subr.bf16.mxu0 0
  %88 = vmatpush1.bf16.msra.mxu0 0
  %89 = vmatprep.subr.bf16.mxu0 0
  %90 = vmatpush1.bf16.msra.mxu0 0
  %91 = vmatprep.subr.bf16.mxu0 0
  %92 = vmatpush1.bf16.msra.mxu0 0
  %93 = vmatprep.mubr.bf16.mxu0 0
  %94 = vmatmul.mubr.bf16.gmra.mrb[0].mxu0 %v59
  %v95 = vpop.f32.mrb[0].mxu0
  %v96 = vadd.f32 %v38, %v95
  %v97 = vpop.f32.mrb[0].mxu0
  %v98 = vpop.f32.mrb[0].mxu0
  %v99 = vadd.f32 %v38, %v98
  %v100 = vpop.f32.mrb[0].mxu0
  %101 = vdwg.mxu0
  %vm102 = vcmp.ge.f32.partialorder %v96, 0.0
  %vm103 = vcmp.ge.f32.partialorder %v99, 0.0
  %v104 = vmul.f32 %v96, 0.01
  %v105 = vmul.f32 %v99, 0.01
  %v106 = vsel %vm102, %v96, %v104
  %v107 = vsel %vm103, %v99, %v105
  %v108 = vpack.c.bf16 %v107, %v106
  %v109 = vld [vmem:[%s3] sm:$0xf]
  %v110 = vld [vmem:[%s3 + $0x4] sm:$0xf]
  %v111 = vld [vmem:[%s3 + $0x8] sm:$0xf]
  %v112 = vld [vmem:[%s3 + $0xc] sm:$0xf]
  %v113 = vld [vmem:[%s3 + $0x10] sm:$0xf]
  %v114 = vld [vmem:[%s3 + $0x14] sm:$0xf]
  %v115 = vld [vmem:[%s3 + $0x18] sm:$0xf]
  %v116 = vld [vmem:[%s3 + $0x1c] sm:$0xf]
  %v117 = vld [vmem:[%s4] sm:$0x1]
  %v119 = vlaneseq
  %v120 = vshrl.u32 %v119, 7
  %v121 = vsub.s32 0, %v120
  %v122 = vrot.slane %v117, %v121
  %v132 = vunpack.c.l.b16 %v109
  %v133 = vunpack.c.l.b16 %v110
  %v134 = vunpack.c.l.b16 %v111
  %v135 = vunpack.c.l.b16 %v112
  %v136 = vunpack.c.l.b16 %v113
  %v137 = vunpack.c.l.b16 %v114
  %v138 = vunpack.c.l.b16 %v115
  %v139 = vunpack.c.l.b16 %v116
  %v140 = vpack.c.b16 %v133, %v132
  %v141 = vpack.c.b16 %v135, %v134
  %v142 = vpack.c.b16 %v137, %v136
  %v143 = vpack.c.b16 %v139, %v138
  %vm148 = vcmask 523264
  %v150 = vsel %vm148, %v108, 0
  %152 = vmatprep.subr.bf16.mxu0 0
  %153 = vmatpush1.bf16.msra.mxu0 %v140
  %154 = vmatprep.subr.bf16.mxu0 0
  %155 = vmatpush1.bf16.msra.mxu0 %v141
  %156 = vmatprep.subr.bf16.mxu0 0
  %157 = vmatpush1.bf16.msra.mxu0 %v142
  %158 = vmatprep.subr.bf16.mxu0 0
  %159 = vmatpush1.bf16.msra.mxu0 %v143
  %160 = vmatprep.subr.bf16.mxu0 0
  %161 = vmatpush1.bf16.msra.mxu0 0
  %162 = vmatprep.subr.bf16.mxu0 0
  %163 = vmatpush1.bf16.msra.mxu0 0
  %164 = vmatprep.subr.bf16.mxu0 0
  %165 = vmatpush1.bf16.msra.mxu0 0
  %166 = vmatprep.subr.bf16.mxu0 0
  %167 = vmatpush1.bf16.msra.mxu0 0
  %168 = vmatprep.subr.bf16.mxu0 0
  %169 = vmatpush1.bf16.msra.mxu0 0
  %170 = vmatprep.subr.bf16.mxu0 0
  %171 = vmatpush1.bf16.msra.mxu0 0
  %172 = vmatprep.subr.bf16.mxu0 0
  %173 = vmatpush1.bf16.msra.mxu0 0
  %174 = vmatprep.subr.bf16.mxu0 0
  %175 = vmatpush1.bf16.msra.mxu0 0
  %176 = vmatprep.subr.bf16.mxu0 0
  %177 = vmatpush1.bf16.msra.mxu0 0
  %178 = vmatprep.subr.bf16.mxu0 0
  %179 = vmatpush1.bf16.msra.mxu0 0
  %180 = vmatprep.subr.bf16.mxu0 0
  %181 = vmatpush1.bf16.msra.mxu0 0
  %182 = vmatprep.subr.bf16.mxu0 0
  %183 = vmatpush1.bf16.msra.mxu0 0
  %184 = vmatprep.mubr.bf16.mxu0 0
  %185 = vmatmul.mubr.bf16.gmra.mrb[0].mxu0 %v150
  %v186 = vpop.f32.mrb[0].mxu0
  %v187 = vadd.f32 %v122, %v186
  %v188 = vpop.f32.mrb[0].mxu0
  %v189 = vpop.f32.mrb[0].mxu0
  %v190 = vadd.f32 %v122, %v189
  %v191 = vpop.f32.mrb[0].mxu0
  %192 = vdwg.mxu0
  %v193 = vunpack.c.l.bf16 %v27
  %v194 = vunpack.c.l.bf16 %v28
  %v195 = vadd.f32 %v187, %v193
  %v196 = vadd.f32 %v190, %v194
  %v197 = vsel %vm57, %v195, 0.0
  %198 = vadd.xlane.f32.xlu0 %v197
  %v199 = vpop.xlane.xlu0 %198
  %v200 = vsel %vm57, %v196, 0.0
  %201 = vadd.xlane.f32.xlu0 %v200
  %v202 = vpop.xlane.xlu0 %201
  %v203 = vrcp.pop 32.0
  %v204 = vmul.f32 %v199, %v203
  %v205 = vmul.f32 %v202, %v203
  %v206 = vsub.f32 %v195, %v204
  %v207 = vsub.f32 %v196, %v205
  %v208 = vmul.f32 %v206, %v206
  %v209 = vmul.f32 %v207, %v207
  %v210 = vsel %vm57, %v208, 0.0
  %211 = vadd.xlane.f32.xlu0 %v210
  %v212 = vpop.xlane.xlu0 %211
  %v213 = vsel %vm57, %v209, 0.0
  %214 = vadd.xlane.f32.xlu0 %v213
  %v215 = vpop.xlane.xlu0 %214
  %v216 = vmul.f32 %v212, %v203
  %v217 = vmul.f32 %v215, %v203
  %v218 = vadd.f32 %v216, 1e-05
  %v219 = vadd.f32 %v217, 1e-05
  %v220 = vrsqrt.pop %v218
  %v221 = vrsqrt.pop %v219
  %v222 = vmul.f32 %v206, %v220
  %v223 = vmul.f32 %v207, %v221
  %v224 = vld [vmem:[%s5] sm:$0x1]
  %v226 = vlaneseq
  %v227 = vshrl.u32 %v226, 7
  %v228 = vsub.s32 0, %v227
  %v229 = vrot.slane %v224, %v228
  %v231 = vmul.f32 %v222, %v229
  %v232 = vmul.f32 %v223, %v229
  %v233 = vld [vmem:[%s6] sm:$0x1]
  %v235 = vlaneseq
  %v236 = vshrl.u32 %v235, 7
  %v237 = vsub.s32 0, %v236
  %v238 = vrot.slane %v233, %v237
  %v240 = vadd.f32 %v231, %v238
  %v241 = vadd.f32 %v232, %v238
  %v242 = vpack.c.bf16 %v241, %v240
  %v244 = vunpack.c.l.b16 %v242
  %v245 = vunpack.c.h.b16 %v242
  %v246 = vpack.c.b16 %v244, %v244
  %v247 = vpack.c.b16 %v245, %v245
  %vm250 = vcmask 257024
  %251 = vst.msk [vmem:[%s7] sm:$0xf] %vm250, %v246
  %252 = vst.msk [vmem:[%s7 + $0x4] sm:$0xf] %vm250, %v247
  // Predicated region
  $region30: #{seq2seq_transformer.13} parent=0 // pred_check
    _
  $region31: #{seq2seq_transformer.13} parent=0 // pred_check_branch
    %254 = sbr.rel (0) target = $region33
  $region32: #{seq2seq_transformer.13} parent=0 // pred_region
    _
  $region33: #{seq2seq_transformer.13} parent=0 // pred_fallthru
    _
  // Predicated region
  $region34: #{seq2seq_transformer.13} parent=0 // pred_check
    _
  $region35: #{seq2seq_transformer.13} parent=0 // pred_check_branch
    %256 = sbr.rel (0) target = $region37
  $region36: #{seq2seq_transformer.13} parent=0 // pred_region
    _
  $region37: #{seq2seq_transformer.13} parent=0 // pred_fallthru
    _

// kernel: seq2seq_transformer.12
$region0: #{seq2seq_transformer.12}
  #allocation0 [shape = 'u32[]', space=smem, size = 0x4, offset = 0x4, fixed_abs, tag = 'smem constant byte address 0x4 - core index']
  #allocation1 [shape = 'u32[144,128]{1,0:T(1,128)}', space=vmem, size = 0x12000, scoped, tag = 'internal scratch']
  %s0 = inlined_call_operand.vmem [shape: bf16[2,8,32], index: 0, kind: input, shape index: {}]
  %s1 = inlined_call_operand.vmem [shape: bf16[32,96], index: 1, kind: input, shape index: {}]
  %s2 = inlined_call_operand.vmem [shape: f32[1,96], index: 2, kind: input, shape index: {}]
  %s3 = inlined_call_operand.vmem [shape: bf16[32,32], index: 3, kind: input, shape index: {}]
  %s4 = inlined_call_operand.vmem [shape: f32[1,32], index: 4, kind: input, shape index: {}]
  %s5 = inlined_call_operand.vmem [shape: f32[1,32], index: 5, kind: input, shape index: {}]
  %s6 = inlined_call_operand.vmem [shape: f32[1,32], index: 6, kind: input, shape index: {}]
  %s7 = inlined_call_operand.vmem [shape: bf16[2,8,32], index: 7, kind: output, shape index: {}]
  %s8 = sld [smem:[#allocation0]]
  $region61: #{seq2seq_transformer.12} parent=0
    _
  %s10 = ssub.s32 1, %s8
  %s11 = scalar_select 0, %s10, %s8
  loop: start=0, step=1, limit=4
  $region2: #{seq2seq_transformer.12} parent=0 // loop_pre_header
    _
  $region3: #{seq2seq_transformer.12} parent=0 // loop_header
    %s13 = sphi 0, %s17
    %p14 = scmp.ge.s32.totalorder %s13, 4
    %s23 = sphi 0, %s25
    %s26 = sphi 0, %s23
    %s27 = sphi 0, %s26
    %s43 = sphi 0, %s27
    %s47 = sphi 0, %s47
    %s49 = sphi 0, %s47
    %s50 = sphi 0, %s49
    %s64 = sphi 0, %s50
    %s68 = sphi 0, %s68
    %s70 = sphi 0, %s68
    %s71 = sphi 0, %s70
    %s85 = sphi 0, %s71
    %s89 = sphi 0, %s89
    %s91 = sphi 0, %s89
    %s92 = sphi 0, %s91
    %s106 = sphi 0, %s92
    %s110 = sphi 0, %s110
    %s112 = sphi 0, %s110
    %s113 = sphi 0, %s112
    %s127 = sphi 0, %s113
    %s131 = sphi 0, %s131
    %s133 = sphi 0, %s131
    %s134 = sphi 0, %s133
    %s148 = sphi 0, %s134
    %s152 = sphi 0, %s152
    %s154 = sphi 0, %s152
    %s155 = sphi 0, %s154
    %s169 = sphi 0, %s155
    %s175 = sphi 0, %s177
    %s178 = sphi 0, %s175
    %s179 = sphi 0, %s178
    %s195 = sphi 0, %s179
  $region4: #{seq2seq_transformer.12} parent=0 // loop_header_branch
    %16 = sbr.rel (%p14) target = $region8
  $region5: #{seq2seq_transformer.12} parent=0 // loop_body
    %s18 = ssub.s32 %s13, 1
    %s19 = ssub.s32 %s13, 2
    %s20 = sadd.s32 %s13, 1
    %s21 = ssub.s32 %s13, %s20
    %p22 = scmp.eq.s32.totalorder %s21, 0
    %s24 = sadd.s32 %s23, 1
    %s25 = scalar_select %p22, %s23, %s24
    %p28 = pneg %p22
    %p29 = scmp.eq.s32.totalorder %s13, 1
    %p30 = por %p28, %p29
    %p31 = scmp.ne.s32.totalorder %s23, %s26
    %p32 = scmp.eq.s32.totalorder %s13, 0
    %p33 = por %p31, %p32
    %p34 = scmp.ne.s32.totalorder %s23, %s26
    %p35 = scmp.eq.s32.totalorder %s18, 1
    %p36 = por %p34, %p35
    %p37 = scmp.ne.s32.totalorder %s26, %s27
    %p38 = scmp.eq.s32.totalorder %s18, 0
    %p39 = por %p37, %p38
    %p40 = scmp.ne.s32.totalorder %s26, %s27
    %p41 = scmp.eq.s32.totalorder %s19, 1
    %p42 = por %p40, %p41
    %p44 = scmp.ne.s32.totalorder %s27, %s43
    %p45 = scmp.eq.s32.totalorder %s19, 0
    %p46 = por %p44, %p45
    %s48 = sadd.s32 %s47, 1
    %p51 = scmp.eq.s32.totalorder %s13, 1
    %p52 = scmp.ne.s32.totalorder %s47, %s49
    %p53 = scmp.eq.s32.totalorder %s13, 0
    %p54 = por %p52, %p53
    %p55 = scmp.ne.s32.totalorder %s47, %s49
    %p56 = scmp.eq.s32.totalorder %s18, 1
    %p57 = por %p55, %p56
    %p58 = scmp.ne.s32.totalorder %s49, %s50
    %p59 = scmp.eq.s32.totalorder %s18, 0
    %p60 = por %p58, %p59
    %p61 = scmp.ne.s32.totalorder %s49, %s50
    %p62 = scmp.eq.s32.totalorder %s19, 1
    %p63 = por %p61, %p62
    %p65 = scmp.ne.s32.totalorder %s50, %s64
    %p66 = scmp.eq.s32.totalorder %s19, 0
    %p67 = por %p65, %p66
    %s69 = sadd.s32 %s68, 1
    %p72 = scmp.eq.s32.totalorder %s13, 1
    %p73 = scmp.ne.s32.totalorder %s68, %s70
    %p74 = scmp.eq.s32.totalorder %s13, 0
    %p75 = por %p73, %p74
    %p76 = scmp.ne.s32.totalorder %s68, %s70
    %p77 = scmp.eq.s32.totalorder %s18, 1
    %p78 = por %p76, %p77
    %p79 = scmp.ne.s32.totalorder %s70, %s71
    %p80 = scmp.eq.s32.totalorder %s18, 0
    %p81 = por %p79, %p80
    %p82 = scmp.ne.s32.totalorder %s70, %s71
    %p83 = scmp.eq.s32.totalorder %s19, 1
    %p84 = por %p82, %p83
    %p86 = scmp.ne.s32.totalorder %s71, %s85
    %p87 = scmp.eq.s32.totalorder %s19, 0
    %p88 = por %p86, %p87
    %s90 = sadd.s32 %s89, 1
    %p93 = scmp.eq.s32.totalorder %s13, 1
    %p94 = scmp.ne.s32.totalorder %s89, %s91
    %p95 = scmp.eq.s32.totalorder %s13, 0
    %p96 = por %p94, %p95
    %p97 = scmp.ne.s32.totalorder %s89, %s91
    %p98 = scmp.eq.s32.totalorder %s18, 1
    %p99 = por %p97, %p98
    %p100 = scmp.ne.s32.totalorder %s91, %s92
    %p101 = scmp.eq.s32.totalorder %s18, 0
    %p102 = por %p100, %p101
    %p103 = scmp.ne.s32.totalorder %s91, %s92
    %p104 = scmp.eq.s32.totalorder %s19, 1
    %p105 = por %p103, %p104
    %p107 = scmp.ne.s32.totalorder %s92, %s106
    %p108 = scmp.eq.s32.totalorder %s19, 0
    %p109 = por %p107, %p108
    %s111 = sadd.s32 %s110, 1
    %p114 = scmp.eq.s32.totalorder %s13, 1
    %p115 = scmp.ne.s32.totalorder %s110, %s112
    %p116 = scmp.eq.s32.totalorder %s13, 0
    %p117 = por %p115, %p116
    %p118 = scmp.ne.s32.totalorder %s110, %s112
    %p119 = scmp.eq.s32.totalorder %s18, 1
    %p120 = por %p118, %p119
    %p121 = scmp.ne.s32.totalorder %s112, %s113
    %p122 = scmp.eq.s32.totalorder %s18, 0
    %p123 = por %p121, %p122
    %p124 = scmp.ne.s32.totalorder %s112, %s113
    %p125 = scmp.eq.s32.totalorder %s19, 1
    %p126 = por %p124, %p125
    %p128 = scmp.ne.s32.totalorder %s113, %s127
    %p129 = scmp.eq.s32.totalorder %s19, 0
    %p130 = por %p128, %p129
    %s132 = sadd.s32 %s131, 1
    %p135 = scmp.eq.s32.totalorder %s13, 1
    %p136 = scmp.ne.s32.totalorder %s131, %s133
    %p137 = scmp.eq.s32.totalorder %s13, 0
    %p138 = por %p136, %p137
    %p139 = scmp.ne.s32.totalorder %s131, %s133
    %p140 = scmp.eq.s32.totalorder %s18, 1
    %p141 = por %p139, %p140
    %p142 = scmp.ne.s32.totalorder %s133, %s134
    %p143 = scmp.eq.s32.totalorder %s18, 0
    %p144 = por %p142, %p143
    %p145 = scmp.ne.s32.totalorder %s133, %s134
    %p146 = scmp.eq.s32.totalorder %s19, 1
    %p147 = por %p145, %p146
    %p149 = scmp.ne.s32.totalorder %s134, %s148
    %p150 = scmp.eq.s32.totalorder %s19, 0
    %p151 = por %p149, %p150
    %s153 = sadd.s32 %s152, 1
    %p156 = scmp.eq.s32.totalorder %s13, 1
    %p157 = scmp.ne.s32.totalorder %s152, %s154
    %p158 = scmp.eq.s32.totalorder %s13, 0
    %p159 = por %p157, %p158
    %p160 = scmp.ne.s32.totalorder %s152, %s154
    %p161 = scmp.eq.s32.totalorder %s18, 1
    %p162 = por %p160, %p161
    %p163 = scmp.ne.s32.totalorder %s154, %s155
    %p164 = scmp.eq.s32.totalorder %s18, 0
    %p165 = por %p163, %p164
    %p166 = scmp.ne.s32.totalorder %s154, %s155
    %p167 = scmp.eq.s32.totalorder %s19, 1
    %p168 = por %p166, %p167
    %p170 = scmp.ne.s32.totalorder %s155, %s169
    %p171 = scmp.eq.s32.totalorder %s19, 0
    %p172 = por %p170, %p171
    %s173 = ssub.s32 %s13, %s20
    %p174 = scmp.eq.s32.totalorder %s173, 0
    %s176 = sadd.s32 %s175, 1
    %s177 = scalar_select %p174, %s175, %s176
    %p180 = pneg %p174
    %p181 = scmp.eq.s32.totalorder %s13, 1
    %p182 = por %p180, %p181
    %p183 = scmp.ne.s32.totalorder %s175, %s178
    %p184 = scmp.eq.s32.totalorder %s13, 0
    %p185 = por %p183, %p184
    %p186 = scmp.ne.s32.totalorder %s175, %s178
    %p187 = scmp.eq.s32.totalorder %s18, 1
    %p188 = por %p186, %p187
    %p189 = scmp.ne.s32.totalorder %s178, %s179
    %p190 = scmp.eq.s32.totalorder %s18, 0
    %p191 = por %p189, %p190
    %p192 = scmp.ne.s32.totalorder %s178, %s179
    %p193 = scmp.eq.s32.totalorder %s19, 1
    %p194 = por %p192, %p193
    %p196 = scmp.ne.s32.totalorder %s179, %s195
    %p197 = scmp.eq.s32.totalorder %s19, 0
    %p198 = por %p196, %p197
    %p199 = scmp.le.s32.totalorder 1, %s13
    %p200 = scmp.lt.s32.totalorder %s13, 3
    %p201 = pnand %p199, %p200
    %p202 = pneg %p201
    // Predicated region
    $region9: #{seq2seq_transformer.12} parent=5 // pred_check
      _
    $region10: #{seq2seq_transformer.12} parent=5 // pred_check_branch
      %204 = sbr.rel (%p201) target = $region12
    $region11: #{seq2seq_transformer.12} parent=5 // pred_region
      %s205 = ssub.s32 %s13, 1
      // Predicated region
      $region13: #{seq2seq_transformer.12} parent=11 // pred_check
        %p206 = pneg %p60
      $region14: #{seq2seq_transformer.12} parent=11 // pred_check_branch
        %208 = sbr.rel (%p206) target = $region16
      $region15: #{seq2seq_transformer.12} parent=11 // pred_region
        _
      $region16: #{seq2seq_transformer.12} parent=11 // pred_fallthru
        _
      // Predicated region
      $region17: #{seq2seq_transformer.12} parent=11 // pred_check
        %p209 = pneg %p81
      $region18: #{seq2seq_transformer.12} parent=11 // pred_check_branch
        %211 = sbr.rel (%p209) target = $region20
      $region19: #{seq2seq_transformer.12} parent=11 // pred_region
        _
      $region20: #{seq2seq_transformer.12} parent=11 // pred_fallthru
        _
      // Predicated region
      $region21: #{seq2seq_transformer.12} parent=11 // pred_check
        %p212 = pneg %p102
      $region22: #{seq2seq_transformer.12} parent=11 // pred_check_branch
        %214 = sbr.rel (%p212) target = $region24
      $region23: #{seq2seq_transformer.12} parent=11 // pred_region
        _
      $region24: #{seq2seq_transformer.12} parent=11 // pred_fallthru
        _
      // Predicated region
      $region25: #{seq2seq_transformer.12} parent=11 // pred_check
        %p215 = pneg %p123
      $region26: #{seq2seq_transformer.12} parent=11 // pred_check_branch
        %217 = sbr.rel (%p215) target = $region28
      $region27: #{seq2seq_transformer.12} parent=11 // pred_region
        _
      $region28: #{seq2seq_transformer.12} parent=11 // pred_fallthru
        _
      // Predicated region
      $region29: #{seq2seq_transformer.12} parent=11 // pred_check
        %p218 = pneg %p144
      $region30: #{seq2seq_transformer.12} parent=11 // pred_check_branch
        %220 = sbr.rel (%p218) target = $region32
      $region31: #{seq2seq_transformer.12} parent=11 // pred_region
        _
      $region32: #{seq2seq_transformer.12} parent=11 // pred_fallthru
        _
      // Predicated region
      $region33: #{seq2seq_transformer.12} parent=11 // pred_check
        %p221 = pneg %p165
      $region34: #{seq2seq_transformer.12} parent=11 // pred_check_branch
        %223 = sbr.rel (%p221) target = $region36
      $region35: #{seq2seq_transformer.12} parent=11 // pred_region
        _
      $region36: #{seq2seq_transformer.12} parent=11 // pred_fallthru
        _
    $region12: #{seq2seq_transformer.12} parent=5 // pred_fallthru
      _
    %p224 = scmp.lt.s32.totalorder %s13, 2
    // Predicated region
    $region37: #{seq2seq_transformer.12} parent=5 // pred_check
      %p225 = pneg %p224
    $region38: #{seq2seq_transformer.12} parent=5 // pred_check_branch
      %227 = sbr.rel (%p225) target = $region40
    $region39: #{seq2seq_transformer.12} parent=5 // pred_region
      // Predicated region
      $region41: #{seq2seq_transformer.12} parent=39 // pred_check
        %p228 = pneg %p33
      $region42: #{seq2seq_transformer.12} parent=39 // pred_check_branch
        %230 = sbr.rel (%p228) target = $region44
      $region43: #{seq2seq_transformer.12} parent=39 // pred_region
        %p231 = scmp.lt.s32.totalorder %s13, 1
        %s232 = scalar_select %p231, %s13, 1
        %s233 = smul.addr %s232, 4
        %s234 = scalar_lea.vmem %s0, %s233
      $region44: #{seq2seq_transformer.12} parent=39 // pred_fallthru
        _
    $region40: #{seq2seq_transformer.12} parent=5 // pred_fallthru
      _
    %p235 = scmp.le.s32.totalorder 1, %s13
    %p236 = scmp.lt.s32.totalorder %s13, 3
    %p237 = pnand %p235, %p236
    %p238 = pneg %p237
    // Predicated region
    $region45: #{seq2seq_transformer.12} parent=5 // pred_check
      _
    $region46: #{seq2seq_transformer.12} parent=5 // pred_check_branch
      %240 = sbr.rel (%p237) target = $region48
    $region47: #{seq2seq_transformer.12} parent=5 // pred_region
      %s241 = ssub.s32 %s13, 1
      %p242 = scmp.lt.s32.totalorder %s18, 1
      %s243 = scalar_select %p242, %s18, 1
      %s244 = smul.addr %s243, 4
      %s245 = scalar_lea.vmem %s0, %s244
      %p246 = pneg %p39
      %p247 = pneg %p36
      %p248 = pneg %p60
      %p249 = pneg %p57
      %p250 = pneg %p81
      %p251 = pneg %p78
      %p252 = pneg %p102
      %p253 = pneg %p99
      %p254 = pneg %p123
      %p255 = pneg %p120
      %p256 = pneg %p144
      %p257 = pneg %p141
      %p258 = pneg %p165
      %p259 = pneg %p162
      %p260 = pneg %p191
      %p261 = pneg %p188
      %p262 = scmp.lt.s32.totalorder %s18, 1
      %s263 = scalar_select %p262, %s18, 1
      %s264 = smul.addr %s263, 4
      %s265 = scalar_lea.vmem %s7, %s264
      %p266 = scmp.lt.s32.totalorder %s18, 1
      %s267 = scalar_select %p266, %s18, 1
      %s268 = smul.addr %s267, 4
      %s269 = scalar_lea.vmem %s0, %s268
      %p270 = scmp.lt.s32.totalorder %s18, 1
      %s271 = scalar_select %p270, %s18, 1
      %s272 = smul.addr %s271, 4
      %s273 = scalar_lea.vmem %s7, %s272
      %v275 = vld [vmem:[%s269] sm:$0xf]
      %v276 = vld [vmem:[%s1] sm:$0xf]
      %v277 = vld [vmem:[%s1 + $0x4] sm:$0xf]
      %v278 = vld [vmem:[%s1 + $0x8] sm:$0xf]
      %v279 = vld [vmem:[%s1 + $0xc] sm:$0xf]
      %v280 = vld [vmem:[%s2] sm:$0x1]
      %v282 = vlaneseq
      %v283 = vshrl.u32 %v282, 7
      %v284 = vsub.s32 0, %v283
      %v285 = vrot.slane %v280, %v284
      %v291 = vunpack.c.l.b16 %v276
      %v292 = vunpack.c.l.b16 %v277
      %v293 = vunpack.c.l.b16 %v278
      %v294 = vunpack.c.l.b16 %v279
      %v295 = vpack.c.b16 %v292, %v291
      %v296 = vpack.c.b16 %v294, %v293
      %vm299 = vcmask 261120
      %v301 = vsel %vm299, %v275, 0
      %303 = vmatprep.subr.bf16.mxu0 0
      %304 = vmatpush1.bf16.msra.mxu0 %v295
      %305 = vmatprep.subr.bf16.mxu0 0
      %306 = vmatpush1.bf16.msra.mxu0 %v296
      %307 = vmatprep.subr.bf16.mxu0 0
      %308 = vmatpush1.bf16.msra.mxu0 0
      %309 = vmatprep.subr.bf16.mxu0 0
      %310 = vmatpush1.bf16.msra.mxu0 0
      %311 = vmatprep.subr.bf16.mxu0 0
      %312 = vmatpush1.bf16.msra.mxu0 0
      %313 = vmatprep.subr.bf16.mxu0 0
      %314 = vmatpush1.bf16.msra.mxu0 0
      %315 = vmatprep.subr.bf16.mxu0 0
      %316 = vmatpush1.bf16.msra.mxu0 0
      %317 = vmatprep.subr.bf16.mxu0 0
      %318 = vmatpush1.bf16.msra.mxu0 0
      %319 = vmatprep.subr.bf16.mxu0 0
      %320 = vmatpush1.bf16.msra.mxu0 0
      %321 = vmatprep.subr.bf16.mxu0 0
      %322 = vmatpush1.bf16.msra.mxu0 0
      %323 = vmatprep.subr.bf16.mxu0 0
      %324 = vmatpush1.bf16.msra.mxu0 0
      %325 = vmatprep.subr.bf16.mxu0 0
      %326 = vmatpush1.bf16.msra.mxu0 0
      %327 = vmatprep.subr.bf16.mxu0 0
      %328 = vmatpush1.bf16.msra.mxu0 0
      %329 = vmatprep.subr.bf16.mxu0 0
      %330 = vmatpush1.bf16.msra.mxu0 0
      %331 = vmatprep.subr.bf16.mxu0 0
      %332 = vmatpush1.bf16.msra.mxu0 0
      %333 = vmatprep.subr.bf16.mxu0 0
      %334 = vmatpush1.bf16.msra.mxu0 0
      %335 = vmatprep.mubr.bf16.mxu0 0
      %336 = vmatmul.mubr.bf16.gmra.mrb[0].mxu0 %v301
      %v337 = vpop.f32.mrb[0].mxu0
      %v338 = vadd.f32 %v285, %v337
      %v339 = vpop.f32.mrb[0].mxu0
      %v340 = vpop.f32.mrb[0].mxu0
      %v341 = vpop.f32.mrb[0].mxu0
      %342 = vdwg.mxu0
      %v343 = vunpack.c.l.bf16 %v275
      %v344 = vld [vmem:[%s3] sm:$0xf]
      %v345 = vld [vmem:[%s3 + $0x4] sm:$0xf]
      %v346 = vld [vmem:[%s3 + $0x8] sm:$0xf]
      %v347 = vld [vmem:[%s3 + $0xc] sm:$0xf]
      %v348 = vld [vmem:[%s4] sm:$0x1]
      %v349 = vld [vmem:[%s5] sm:$0x1]
      %v350 = vld [vmem:[%s6] sm:$0x1]
      %v351 = vpack.c.bf16 %v338, %v338
      %353 = vrot.lane.b32.xlu0 %v351, 96
      %v354 = vpop.permute.xlu0 %353
      %vm355 = vcmask 64512
      %v357 = vsel %vm355, %v351, 0
      %v360 = vsel %vm355, %v354, 0
      %362 = vmatprep.subr.bf16.mxu0 0
      %363 = vmatpush1.bf16.xpose.msra.mxu0 %v360
      %364 = vmatprep.subr.bf16.mxu0 0
      %365 = vmatpush1.bf16.xpose.msra.mxu0 0
      %366 = vmatprep.subr.bf16.mxu0 0
      %367 = vmatpush1.bf16.xpose.msra.mxu0 0
      %368 = vmatprep.subr.bf16.mxu0 0
      %369 = vmatpush1.bf16.xpose.msra.mxu0 0
      %370 = vmatprep.subr.bf16.mxu0 0
      %371 = vmatpush1.bf16.xpose.msra.mxu0 0
      %372 = vmatprep.subr.bf16.mxu0 0
      %373 = vmatpush1.bf16.xpose.msra.mxu0 0
      %374 = vmatprep.subr.bf16.mxu0 0
      %375 = vmatpush1.bf16.xpose.msra.mxu0 0
      %376 = vmatprep.subr.bf16.mxu0 0
      %377 = vmatpush1.bf16.xpose.msra.mxu0 0
      %378 = vmatprep.subr.bf16.mxu0 0
      %379 = vmatpush1.bf16.xpose.msra.mxu0 0
      %380 = vmatprep.subr.bf16.mxu0 0
      %381 = vmatpush1.bf16.xpose.msra.mxu0 0
      %382 = vmatprep.subr.bf16.mxu0 0
      %383 = vmatpush1.bf16.xpose.msra.mxu0 0
      %384 = vmatprep.subr.bf16.mxu0 0
      %385 = vmatpush1.bf16.xpose.msra.mxu0 0
      %386 = vmatprep.subr.bf16.mxu0 0
      %387 = vmatpush1.bf16.xpose.msra.mxu0 0
      %388 = vmatprep.subr.bf16.mxu0 0
      %389 = vmatpush1.bf16.xpose.msra.mxu0 0
      %390 = vmatprep.subr.bf16.mxu0 0
      %391 = vmatpush1.bf16.xpose.msra.mxu0 0
      %392 = vmatprep.subr.bf16.mxu0 0
      %393 = vmatpush1.bf16.xpose.msra.mxu0 0
      %394 = vmatprep.mubr.bf16.mxu0 0
      %395 = vmatmul.mubr.bf16.gmra.mrb[0].mxu0 %v357
      %v396 = vpop.f32.mrb[0].mxu0
      %v397 = vadd.f32 0.0, %v396
      %v398 = vpop.f32.mrb[0].mxu0
      %v399 = vpop.f32.mrb[0].mxu0
      %v400 = vpop.f32.mrb[0].mxu0
      %401 = vdwg.mxu0
      %v402 = vmul.f32 %v397, 0.35355338
      %v403 = vsel %vm355, %v402, -inf
      %404 = vmax.xlane.f32.xlu0 %v403
      %v405 = vpop.xlane.xlu0 %404
      %v406 = vsub.f32 %v402, %v405
      %v407 = vmul.f32 %v406, 1.442695
      %v408 = vpow.pop %v407
      %v409 = vsel %vm355, %v408, 0.0
      %410 = vadd.xlane.f32.xlu0 %v409
      %v411 = vpop.xlane.xlu0 %410
      %v412 = vrcp.pop %v411
      %v413 = vmul.f32 %v408, %v412
      %v414 = vpack.c.bf16 %v413, %v413
      %415 = vrot.lane.b32.xlu0 %v351, 64
      %v416 = vpop.permute.xlu0 %415
      %v418 = vsel %vm355, %v414, 0
      %vm420 = vcmask 1043456
      %v422 = vsel %vm420, %v416, 0
      %424 = vmatprep.subr.bf16.mxu0 0
      %425 = vmatpush1.bf16.msra.mxu0 %v422
      %426 = vmatprep.subr.bf16.mxu0 0
      %427 = vmatpush1.bf16.msra.mxu0 0
      %428 = vmatprep.subr.bf16.mxu0 0
      %429 = vmatpush1.bf16.msra.mxu0 0
      %430 = vmatprep.subr.bf16.mxu0 0
      %431 = vmatpush1.bf16.msra.mxu0 0
      %432 = vmatprep.subr.bf16.mxu0 0
      %433 = vmatpush1.bf16.msra.mxu0 0
      %434 = vmatprep.subr.bf16.mxu0 0
      %435 = vmatpush1.bf16.msra.mxu0 0
      %436 = vmatprep.subr.bf16.mxu0 0
      %437 = vmatpush1.bf16.msra.mxu0 0
      %438 = vmatprep.subr.bf16.mxu0 0
      %439 = vmatpush1.bf16.msra.mxu0 0
      %440 = vmatprep.subr.bf16.mxu0 0
      %441 = vmatpush1.bf16.msra.mxu0 0
      %442 = vmatprep.subr.bf16.mxu0 0
      %443 = vmatpush1.bf16.msra.mxu0 0
      %444 = vmatprep.subr.bf16.mxu0 0
      %445 = vmatpush1.bf16.msra.mxu0 0
      %446 = vmatprep.subr.bf16.mxu0 0
      %447 = vmatpush1.bf16.msra.mxu0 0
      %448 = vmatprep.subr.bf16.mxu0 0
      %449 = vmatpush1.bf16.msra.mxu0 0
      %450 = vmatprep.subr.bf16.mxu0 0
      %451 = vmatpush1.bf16.msra.mxu0 0
      %452 = vmatprep.subr.bf16.mxu0 0
      %453 = vmatpush1.bf16.msra.mxu0 0
      %454 = vmatprep.subr.bf16.mxu0 0
      %455 = vmatpush1.bf16.msra.mxu0 0
      %456 = vmatprep.mubr.bf16.mxu0 0
      %457 = vmatmul.mubr.bf16.gmra.mrb[0].mxu0 %v418
      %v458 = vpop.f32.mrb[0].mxu0
      %v459 = vadd.f32 0.0, %v458
      %v460 = vpop.f32.mrb[0].mxu0
      %v461 = vpop.f32.mrb[0].mxu0
      %v462 = vpop.f32.mrb[0].mxu0
      %463 = vdwg.mxu0
      %464 = vrot.lane.b32.xlu0 %v351, 120
      %v465 = vpop.permute.xlu0 %464
      %466 = vrot.lane.b32.xlu0 %v351, 88
      %v467 = vpop.permute.xlu0 %466
      %v469 = vsel %vm355, %v465, 0
      %v472 = vsel %vm355, %v467, 0
      %474 = vmatprep.subr.bf16.mxu0 0
      %475 = vmatpush1.bf16.xpose.msra.mxu0 %v472
      %476 = vmatprep.subr.bf16.mxu0 0
      %477 = vmatpush1.bf16.xpose.msra.mxu0 0
      %478 = vmatprep.subr.bf16.mxu0 0
      %479 = vmatpush1.bf16.xpose.msra.mxu0 0
      %480 = vmatprep.subr.bf16.mxu0 0
      %481 = vmatpush1.bf16.xpose.msra.mxu0 0
      %482 = vmatprep.subr.bf16.mxu0 0
      %483 = vmatpush1.bf16.xpose.msra.mxu0 0
      %484 = vmatprep.subr.bf16.mxu0 0
      %485 = vmatpush1.bf16.xpose.msra.mxu0 0
      %486 = vmatprep.subr.bf16.mxu0 0
      %487 = vmatpush1.bf16.xpose.msra.mxu0 0
      %488 = vmatprep.subr.bf16.mxu0 0
      %489 = vmatpush1.bf16.xpose.msra.mxu0 0
      %490 = vmatprep.subr.bf16.mxu0 0
      %491 = vmatpush1.bf16.xpose.msra.mxu0 0
      %492 = vmatprep.subr.bf16.mxu0 0
      %493 = vmatpush1.bf16.xpose.msra.mxu0 0
      %494 = vmatprep.subr.bf16.mxu0 0
      %495 = vmatpush1.bf16.xpose.msra.mxu0 0
      %496 = vmatprep.subr.bf16.mxu0 0
      %497 = vmatpush1.bf16.xpose.msra.mxu0 0
      %498 = vmatprep.subr.bf16.mxu0 0
      %499 = vmatpush1.bf16.xpose.msra.mxu0 0
      %500 = vmatprep.subr.bf16.mxu0 0
      %501 = vmatpush1.bf16.xpose.msra.mxu0 0
      %502 = vmatprep.subr.bf16.mxu0 0
      %503 = vmatpush1.bf16.xpose.msra.mxu0 0
      %504 = vmatprep.subr.bf16.mxu0 0
      %505 = vmatpush1.bf16.xpose.msra.mxu0 0
      %506 = vmatprep.mubr.bf16.mxu0 0
      %507 = vmatmul.mubr.bf16.gmra.mrb[0].mxu0 %v469
      %v508 = vpop.f32.mrb[0].mxu0
      %v509 = vadd.f32 0.0, %v508
      %v510 = vpop.f32.mrb[0].mxu0
      %v511 = vpop.f32.mrb[0].mxu0
      %v512 = vpop.f32.mrb[0].mxu0
      %513 = vdwg.mxu0
      %v514 = vmul.f32 %v509, 0.35355338
      %v515 = vsel %vm355, %v514, -inf
      %516 = vmax.xlane.f32.xlu0 %v515
      %v517 = vpop.xlane.xlu0 %516
      %v518 = vsub.f32 %v514, %v517
      %v519 = vmul.f32 %v518, 1.442695
      %v520 = vpow.pop %v519
      %v521 = vsel %vm355, %v520, 0.0
      %522 = vadd.xlane.f32.xlu0 %v521
      %v523 = vpop.xlane.xlu0 %522
      %v524 = vrcp.pop %v523
      %v525 = vmul.f32 %v520, %v524
      %v526 = vpack.c.bf16 %v525, %v525
      %527 = vrot.lane.b32.xlu0 %v351, 56
      %v528 = vpop.permute.xlu0 %527
      %v530 = vsel %vm355, %v526, 0
      %v533 = vsel %vm420, %v528, 0
      %535 = vmatprep.subr.bf16.mxu0 0
      %536 = vmatpush1.bf16.msra.mxu0 %v533
      %537 = vmatprep.subr.bf16.mxu0 0
      %538 = vmatpush1.bf16.msra.mxu0 0
      %539 = vmatprep.subr.bf16.mxu0 0
      %540 = vmatpush1.bf16.msra.mxu0 0
      %541 = vmatprep.subr.bf16.mxu0 0
      %542 = vmatpush1.bf16.msra.mxu0 0
      %543 = vmatprep.subr.bf16.mxu0 0
      %544 = vmatpush1.bf16.msra.mxu0 0
      %545 = vmatprep.subr.bf16.mxu0 0
      %546 = vmatpush1.bf16.msra.mxu0 0
      %547 = vmatprep.subr.bf16.mxu0 0
      %548 = vmatpush1.bf16.msra.mxu0 0
      %549 = vmatprep.subr.bf16.mxu0 0
      %550 = vmatpush1.bf16.msra.mxu0 0
      %551 = vmatprep.subr.bf16.mxu0 0
      %552 = vmatpush1.bf16.msra.mxu0 0
      %553 = vmatprep.subr.bf16.mxu0 0
      %554 = vmatpush1.bf16.msra.mxu0 0
      %555 = vmatprep.subr.bf16.mxu0 0
      %556 = vmatpush1.bf16.msra.mxu0 0
      %557 = vmatprep.subr.bf16.mxu0 0
      %558 = vmatpush1.bf16.msra.mxu0 0
      %559 = vmatprep.subr.bf16.mxu0 0
      %560 = vmatpush1.bf16.msra.mxu0 0
      %561 = vmatprep.subr.bf16.mxu0 0
      %562 = vmatpush1.bf16.msra.mxu0 0
      %563 = vmatprep.subr.bf16.mxu0 0
      %564 = vmatpush1.bf16.msra.mxu0 0
      %565 = vmatprep.subr.bf16.mxu0 0
      %566 = vmatpush1.bf16.msra.mxu0 0
      %567 = vmatprep.mubr.bf16.mxu0 0
      %568 = vmatmul.mubr.bf16.gmra.mrb[0].mxu0 %v530
      %v569 = vpop.f32.mrb[0].mxu0
      %v570 = vadd.f32 0.0, %v569
      %v571 = vpop.f32.mrb[0].mxu0
      %v572 = vpop.f32.mrb[0].mxu0
      %v573 = vpop.f32.mrb[0].mxu0
      %574 = vdwg.mxu0
      %575 = vrot.lane.b32.xlu0 %v351, 112
      %v576 = vpop.permute.xlu0 %575
      %577 = vrot.lane.b32.xlu0 %v351, 80
      %v578 = vpop.permute.xlu0 %577
      %v580 = vsel %vm355, %v576, 0
      %v583 = vsel %vm355, %v578, 0
      %585 = vmatprep.subr.bf16.mxu0 0
      %586 = vmatpush1.bf16.xpose.msra.mxu0 %v583
      %587 = vmatprep.subr.bf16.mxu0 0
      %588 = vmatpush1.bf16.xpose.msra.mxu0 0
      %589 = vmatprep.subr.bf16.mxu0 0
      %590 = vmatpush1.bf16.xpose.msra.mxu0 0
      %591 = vmatprep.subr.bf16.mxu0 0
      %592 = vmatpush1.bf16.xpose.msra.mxu0 0
      %593 = vmatprep.subr.bf16.mxu0 0
      %594 = vmatpush1.bf16.xpose.msra.mxu0 0
      %595 = vmatprep.subr.bf16.mxu0 0
      %596 = vmatpush1.bf16.xpose.msra.mxu0 0
      %597 = vmatprep.subr.bf16.mxu0 0
      %598 = vmatpush1.bf16.xpose.msra.mxu0 0
      %599 = vmatprep.subr.bf16.mxu0 0
      %600 = vmatpush1.bf16.xpose.msra.mxu0 0
      %601 = vmatprep.subr.bf16.mxu0 0
      %602 = vmatpush1.bf16.xpose.msra.mxu0 0
      %603 = vmatprep.subr.bf16.mxu0 0
      %604 = vmatpush1.bf16.xpose.msra.mxu0 0
      %605 = vmatprep.subr.bf16.mxu0 0
      %606 = vmatpush1.bf16.xpose.msra.mxu0 0
      %607 = vmatprep.subr.bf16.mxu0 0
      %608 = vmatpush1.bf16.xpose.msra.mxu0 0
      %609 = vmatprep.subr.bf16.mxu0 0
      %610 = vmatpush1.bf16.xpose.msra.mxu0 0
      %611 = vmatprep.subr.bf16.mxu0 0
      %612 = vmatpush1.bf16.xpose.msra.mxu0 0
      %613 = vmatprep.subr.bf16.mxu0 0
      %614 = vmatpush1.bf16.xpose.msra.mxu0 0
      %615 = vmatprep.subr.bf16.mxu0 0
      %616 = vmatpush1.bf16.xpose.msra.mxu0 0
      %617 = vmatprep.mubr.bf16.mxu0 0
      %618 = vmatmul.mubr.bf16.gmra.mrb[0].mxu0 %v580
      %v619 = vpop.f32.mrb[0].mxu0
      %v620 = vadd.f32 0.0, %v619
      %v621 = vpop.f32.mrb[0].mxu0
      %v622 = vpop.f32.mrb[0].mxu0
      %v623 = vpop.f32.mrb[0].mxu0
      %624 = vdwg.mxu0
      %v625 = vmul.f32 %v620, 0.35355338
      %v626 = vsel %vm355, %v625, -inf
      %627 = vmax.xlane.f32.xlu0 %v626
      %v628 = vpop.xlane.xlu0 %627
      %v629 = vsub.f32 %v625, %v628
      %v630 = vmul.f32 %v629, 1.442695
      %v631 = vpow.pop %v630
      %v632 = vsel %vm355, %v631, 0.0
      %633 = vadd.xlane.f32.xlu0 %v632
      %v634 = vpop.xlane.xlu0 %633
      %v635 = vrcp.pop %v634
      %v636 = vmul.f32 %v631, %v635
      %v637 = vpack.c.bf16 %v636, %v636
      %638 = vrot.lane.b32.xlu0 %v351, 48
      %v639 = vpop.permute.xlu0 %638
      %v641 = vsel %vm355, %v637, 0
      %v644 = vsel %vm420, %v639, 0
      %646 = vmatprep.subr.bf16.mxu0 0
      %647 = vmatpush1.bf16.msra.mxu0 %v644
      %648 = vmatprep.subr.bf16.mxu0 0
      %649 = vmatpush1.bf16.msra.mxu0 0
      %650 = vmatprep.subr.bf16.mxu0 0
      %651 = vmatpush1.bf16.msra.mxu0 0
      %652 = vmatprep.subr.bf16.mxu0 0
      %653 = vmatpush1.bf16.msra.mxu0 0
      %654 = vmatprep.subr.bf16.mxu0 0
      %655 = vmatpush1.bf16.msra.mxu0 0
      %656 = vmatprep.subr.bf16.mxu0 0
      %657 = vmatpush1.bf16.msra.mxu0 0
      %658 = vmatprep.subr.bf16.mxu0 0
      %659 = vmatpush1.bf16.msra.mxu0 0
      %660 = vmatprep.subr.bf16.mxu0 0
      %661 = vmatpush1.bf16.msra.mxu0 0
      %662 = vmatprep.subr.bf16.mxu0 0
      %663 = vmatpush1.bf16.msra.mxu0 0
      %664 = vmatprep.subr.bf16.mxu0 0
      %665 = vmatpush1.bf16.msra.mxu0 0
      %666 = vmatprep.subr.bf16.mxu0 0
      %667 = vmatpush1.bf16.msra.mxu0 0
      %668 = vmatprep.subr.bf16.mxu0 0
      %669 = vmatpush1.bf16.msra.mxu0 0
      %670 = vmatprep.subr.bf16.mxu0 0
      %671 = vmatpush1.bf16.msra.mxu0 0
      %672 = vmatprep.subr.bf16.mxu0 0
      %673 = vmatpush1.bf16.msra.mxu0 0
      %674 = vmatprep.subr.bf16.mxu0 0
      %675 = vmatpush1.bf16.msra.mxu0 0
      %676 = vmatprep.subr.bf16.mxu0 0
      %677 = vmatpush1.bf16.msra.mxu0 0
      %678 = vmatprep.mubr.bf16.mxu0 0
      %679 = vmatmul.mubr.bf16.gmra.mrb[0].mxu0 %v641
      %v680 = vpop.f32.mrb[0].mxu0
      %v681 = vadd.f32 0.0, %v680
      %v682 = vpop.f32.mrb[0].mxu0
      %v683 = vpop.f32.mrb[0].mxu0
      %v684 = vpop.f32.mrb[0].mxu0
      %685 = vdwg.mxu0
      %686 = vrot.lane.b32.xlu0 %v351, 104
      %v687 = vpop.permute.xlu0 %686
      %688 = vrot.lane.b32.xlu0 %v351, 72
      %v689 = vpop.permute.xlu0 %688
      %v691 = vsel %vm355, %v687, 0
      %v694 = vsel %vm355, %v689, 0
      %696 = vmatprep.subr.bf16.mxu0 0
      %697 = vmatpush1.bf16.xpose.msra.mxu0 %v694
      %698 = vmatprep.subr.bf16.mxu0 0
      %699 = vmatpush1.bf16.xpose.msra.mxu0 0
      %700 = vmatprep.subr.bf16.mxu0 0
      %701 = vmatpush1.bf16.xpose.msra.mxu0 0
      %702 = vmatprep.subr.bf16.mxu0 0
      %703 = vmatpush1.bf16.xpose.msra.mxu0 0
      %704 = vmatprep.subr.bf16.mxu0 0
      %705 = vmatpush1.bf16.xpose.msra.mxu0 0
      %706 = vmatprep.subr.bf16.mxu0 0
      %707 = vmatpush1.bf16.xpose.msra.mxu0 0
      %708 = vmatprep.subr.bf16.mxu0 0
      %709 = vmatpush1.bf16.xpose.msra.mxu0 0
      %710 = vmatprep.subr.bf16.mxu0 0
      %711 = vmatpush1.bf16.xpose.msra.mxu0 0
      %712 = vmatprep.subr.bf16.mxu0 0
      %713 = vmatpush1.bf16.xpose.msra.mxu0 0
      %714 = vmatprep.subr.bf16.mxu0 0
      %715 = vmatpush1.bf16.xpose.msra.mxu0 0
      %716 = vmatprep.subr.bf16.mxu0 0
      %717 = vmatpush1.bf16.xpose.msra.mxu0 0
      %718 = vmatprep.subr.bf16.mxu0 0
      %719 = vmatpush1.bf16.xpose.msra.mxu0 0
      %720 = vmatprep.subr.bf16.mxu0 0
      %721 = vmatpush1.bf16.xpose.msra.mxu0 0
      %722 = vmatprep.subr.bf16.mxu0 0
      %723 = vmatpush1.bf16.xpose.msra.mxu0 0
      %724 = vmatprep.subr.bf16.mxu0 0
      %725 = vmatpush1.bf16.xpose.msra.mxu0 0
      %726 = vmatprep.subr.bf16.mxu0 0
      %727 = vmatpush1.bf16.xpose.msra.mxu0 0
      %728 = vmatprep.mubr.bf16.mxu0 0
      %729 = vmatmul.mubr.bf16.gmra.mrb[0].mxu0 %v691
      %v730 = vpop.f32.mrb[0].mxu0
      %v731 = vadd.f32 0.0, %v730
      %v732 = vpop.f32.mrb[0].mxu0
      %v733 = vpop.f32.mrb[0].mxu0
      %v734 = vpop.f32.mrb[0].mxu0
      %735 = vdwg.mxu0
      %v736 = vmul.f32 %v731, 0.35355338
      %v737 = vsel %vm355, %v736, -inf
      %738 = vmax.xlane.f32.xlu0 %v737
      %v739 = vpop.xlane.xlu0 %738
      %v740 = vsub.f32 %v736, %v739
      %v741 = vmul.f32 %v740, 1.442695
      %v742 = vpow.pop %v741
      %v743 = vsel %vm355, %v742, 0.0
      %744 = vadd.xlane.f32.xlu0 %v743
      %v745 = vpop.xlane.xlu0 %744
      %v746 = vrcp.pop %v745
      %v747 = vmul.f32 %v742, %v746
      %v748 = vpack.c.bf16 %v747, %v747
      %749 = vrot.lane.b32.xlu0 %v351, 40
      %v750 = vpop.permute.xlu0 %749
      %v752 = vsel %vm355, %v748, 0
      %v755 = vsel %vm420, %v750, 0
      %757 = vmatprep.subr.bf16.mxu0 0
      %758 = vmatpush1.bf16.msra.mxu0 %v755
      %759 = vmatprep.subr.bf16.mxu0 0
      %760 = vmatpush1.bf16.msra.mxu0 0
      %761 = vmatprep.subr.bf16.mxu0 0
      %762 = vmatpush1.bf16.msra.mxu0 0
      %763 = vmatprep.subr.bf16.mxu0 0
      %764 = vmatpush1.bf16.msra.mxu0 0
      %765 = vmatprep.subr.bf16.mxu0 0
      %766 = vmatpush1.bf16.msra.mxu0 0
      %767 = vmatprep.subr.bf16.mxu0 0
      %768 = vmatpush1.bf16.msra.mxu0 0
      %769 = vmatprep.subr.bf16.mxu0 0
      %770 = vmatpush1.bf16.msra.mxu0 0
      %771 = vmatprep.subr.bf16.mxu0 0
      %772 = vmatpush1.bf16.msra.mxu0 0
      %773 = vmatprep.subr.bf16.mxu0 0
      %774 = vmatpush1.bf16.msra.mxu0 0
      %775 = vmatprep.subr.bf16.mxu0 0
      %776 = vmatpush1.bf16.msra.mxu0 0
      %777 = vmatprep.subr.bf16.mxu0 0
      %778 = vmatpush1.bf16.msra.mxu0 0
      %779 = vmatprep.subr.bf16.mxu0 0
      %780 = vmatpush1.bf16.msra.mxu0 0
      %781 = vmatprep.subr.bf16.mxu0 0
      %782 = vmatpush1.bf16.msra.mxu0 0
      %783 = vmatprep.subr.bf16.mxu0 0
      %784 = vmatpush1.bf16.msra.mxu0 0
      %785 = vmatprep.subr.bf16.mxu0 0
      %786 = vmatpush1.bf16.msra.mxu0 0
      %787 = vmatprep.subr.bf16.mxu0 0
      %788 = vmatpush1.bf16.msra.mxu0 0
      %789 = vmatprep.mubr.bf16.mxu0 0
      %790 = vmatmul.mubr.bf16.gmra.mrb[0].mxu0 %v752
      %v791 = vpop.f32.mrb[0].mxu0
      %v792 = vadd.f32 0.0, %v791
      %v793 = vpop.f32.mrb[0].mxu0
      %v794 = vpop.f32.mrb[0].mxu0
      %v795 = vpop.f32.mrb[0].mxu0
      %796 = vdwg.mxu0
      %798 = vrot.lane.b32.xlu0 %v570, 8
      %v799 = vpop.permute.xlu0 %798
      %802 = vrot.lane.b32.xlu0 %v681, 16
      %v803 = vpop.permute.xlu0 %802
      %806 = vrot.lane.b32.xlu0 %v792, 24
      %v807 = vpop.permute.xlu0 %806
      %v809 = vsel %vm355, %v459, %v799
      %vm810 = vcmask 130048
      %v811 = vsel %vm810, %v809, %v803
      %vm812 = vcmask 195584
      %v813 = vsel %vm812, %v811, %v807
      %v814 = vpack.c.bf16 %v813, %v813
      %v816 = vlaneseq
      %v817 = vshrl.u32 %v816, 7
      %v818 = vsub.s32 0, %v817
      %v819 = vrot.slane %v348, %v818
      %v825 = vunpack.c.l.b16 %v344
      %v826 = vunpack.c.l.b16 %v345
      %v827 = vunpack.c.l.b16 %v346
      %v828 = vunpack.c.l.b16 %v347
      %v829 = vpack.c.b16 %v826, %v825
      %v830 = vpack.c.b16 %v828, %v827
      %v834 = vsel %vm299, %v814, 0
      %836 = vmatprep.subr.bf16.mxu0 0
      %837 = vmatpush1.bf16.msra.mxu0 %v829
      %838 = vmatprep.subr.bf16.mxu0 0
      %839 = vmatpush1.bf16.msra.mxu0 %v830
      %840 = vmatprep.subr.bf16.mxu0 0
      %841 = vmatpush1.bf16.msra.mxu0 0
      %842 = vmatprep.subr.bf16.mxu0 0
      %843 = vmatpush1.bf16.msra.mxu0 0
      %844 = vmatprep.subr.bf16.mxu0 0
      %845 = vmatpush1.bf16.msra.mxu0 0
      %846 = vmatprep.subr.bf16.mxu0 0
      %847 = vmatpush1.bf16.msra.mxu0 0
      %848 = vmatprep.subr.bf16.mxu0 0
      %849 = vmatpush1.bf16.msra.mxu0 0
      %850 = vmatprep.subr.bf16.mxu0 0
      %851 = vmatpush1.bf16.msra.mxu0 0
      %852 = vmatprep.subr.bf16.mxu0 0
      %853 = vmatpush1.bf16.msra.mxu0 0
      %854 = vmatprep.subr.bf16.mxu0 0
      %855 = vmatpush1.bf16.msra.mxu0 0
      %856 = vmatprep.subr.bf16.mxu0 0
      %857 = vmatpush1.bf16.msra.mxu0 0
      %858 = vmatprep.subr.bf16.mxu0 0
      %859 = vmatpush1.bf16.msra.mxu0 0
      %860 = vmatprep.subr.bf16.mxu0 0
      %861 = vmatpush1.bf16.msra.mxu0 0
      %862 = vmatprep.subr.bf16.mxu0 0
      %863 = vmatpush1.bf16.msra.mxu0 0
      %864 = vmatprep.subr.bf16.mxu0 0
      %865 = vmatpush1.bf16.msra.mxu0 0
      %866 = vmatprep.subr.bf16.mxu0 0
      %867 = vmatpush1.bf16.msra.mxu0 0
      %868 = vmatprep.mubr.bf16.mxu0 0
      %869 = vmatmul.mubr.bf16.gmra.mrb[0].mxu0 %v834
      %v870 = vpop.f32.mrb[0].mxu0
      %v871 = vadd.f32 %v819, %v870
      %v872 = vpop.f32.mrb[0].mxu0
      %v873 = vpop.f32.mrb[0].mxu0
      %v874 = vpop.f32.mrb[0].mxu0
      %875 = vdwg.mxu0
      %v876 = vadd.f32 %v871, %v343
      %v877 = vsel %vm299, %v876, 0.0
      %878 = vadd.xlane.f32.xlu0 %v877
      %v879 = vpop.xlane.xlu0 %878
      %v880 = vrcp.pop 32.0
      %v881 = vmul.f32 %v879, %v880
      %v882 = vsub.f32 %v876, %v881
      %v883 = vmul.f32 %v882, %v882
      %v884 = vsel %vm299, %v883, 0.0
      %885 = vadd.xlane.f32.xlu0 %v884
      %v886 = vpop.xlane.xlu0 %885
      %v887 = vmul.f32 %v886, %v880
      %v888 = vadd.f32 %v887, 1e-05
      %v889 = vrsqrt.pop %v888
      %v890 = vmul.f32 %v882, %v889
      %v892 = vlaneseq
      %v893 = vshrl.u32 %v892, 7
      %v894 = vsub.s32 0, %v893
      %v895 = vrot.slane %v349, %v894
      %v897 = vmul.f32 %v890, %v895
      %v899 = vlaneseq
      %v900 = vshrl.u32 %v899, 7
      %v901 = vsub.s32 0, %v900
      %v902 = vrot.slane %v350, %v901
      %v904 = vadd.f32 %v897, %v902
      %v905 = vpack.c.bf16 %v904, %v904
      %vm906 = vcmask 257024
      %907 = vst.msk [vmem:[%s273] sm:$0xf] %vm906, %v905
      %p908 = scmp.lt.s32.totalorder %s18, 1
      %s909 = scalar_select %p908, %s18, 1
      %s910 = smul.addr %s909, 4
      %s911 = scalar_lea.vmem %s7, %s910
      // Predicated region
      $region49: #{seq2seq_transformer.12} parent=47 // pred_check
        %p912 = pneg %p188
      $region50: #{seq2seq_transformer.12} parent=47 // pred_check_branch
        %914 = sbr.rel (%p912) target = $region52
      $region51: #{seq2seq_transformer.12} parent=47 // pred_region
        _
      $region52: #{seq2seq_transformer.12} parent=47 // pred_fallthru
        _
    $region48: #{seq2seq_transformer.12} parent=5 // pred_fallthru
      _
    %p915 = scmp.le.s32.totalorder 2, %s13
    // Predicated region
    $region53: #{seq2seq_transformer.12} parent=5 // pred_check
      %p916 = pneg %p915
    $region54: #{seq2seq_transformer.12} parent=5 // pred_check_branch
      %918 = sbr.rel (%p916) target = $region56
    $region55: #{seq2seq_transformer.12} parent=5 // pred_region
      %s919 = ssub.s32 %s13, 2
      // Predicated region
      $region57: #{seq2seq_transformer.12} parent=55 // pred_check
        %p920 = pneg %p194
      $region58: #{seq2seq_transformer.12} parent=55 // pred_check_branch
        %922 = sbr.rel (%p920) target = $region60
      $region59: #{seq2seq_transformer.12} parent=55 // pred_region
        %p923 = scmp.lt.s32.totalorder %s19, 1
        %s924 = scalar_select %p923, %s19, 1
        %s925 = smul.addr %s924, 4
        %s926 = scalar_lea.vmem %s7, %s925
      $region60: #{seq2seq_transformer.12} parent=55 // pred_fallthru
        _
    $region56: #{seq2seq_transformer.12} parent=5 // pred_fallthru
      _
  $region6: #{seq2seq_transformer.12} parent=0 // loop_footer
    %s17 = sadd.s32 1, %s13
  $region7: #{seq2seq_transformer.12} parent=0 // loop_footer_branch
    %12 = sbr.rel target = $region3
  $region8: #{seq2seq_transformer.12} parent=0 // loop_exit
    _

// kernel: seq2seq_transformer.17
$region0: #{seq2seq_transformer.17}
  #allocation0 [shape = 'u32[]', space=smem, size = 0x4, offset = 0x4, fixed_abs, tag = 'smem constant byte address 0x4 - core index']
  #allocation1 [shape = 'u32[144,128]{1,0:T(1,128)}', space=vmem, size = 0x12000, scoped, tag = 'internal scratch']
  %s0 = inlined_call_operand.vmem [shape: bf16[2,8,32], index: 0, kind: input, shape index: {}]
  %s1 = inlined_call_operand.vmem [shape: bf16[32,96], index: 1, kind: input, shape index: {}]
  %s2 = inlined_call_operand.vmem [shape: f32[1,96], index: 2, kind: input, shape index: {}]
  %s3 = inlined_call_operand.vmem [shape: bf16[32,32], index: 3, kind: input, shape index: {}]
  %s4 = inlined_call_operand.vmem [shape: f32[1,32], index: 4, kind: input, shape index: {}]
  %s5 = inlined_call_operand.vmem [shape: f32[1,32], index: 5, kind: input, shape index: {}]
  %s6 = inlined_call_operand.vmem [shape: f32[1,32], index: 6, kind: input, shape index: {}]
  %s7 = inlined_call_operand.vmem [shape: bf16[2,8,32], index: 7, kind: output, shape index: {}]
  %s8 = sld [smem:[#allocation0]]
  $region61: #{seq2seq_transformer.17} parent=0
    _
  %s10 = ssub.s32 1, %s8
  %s11 = scalar_select 0, %s10, %s8
  loop: start=0, step=1, limit=4
  $region2: #{seq2seq_transformer.17} parent=0 // loop_pre_header
    _
  $region3: #{seq2seq_transformer.17} parent=0 // loop_header
    %s13 = sphi 0, %s17
    %p14 = scmp.ge.s32.totalorder %s13, 4
    %s23 = sphi 0, %s25
    %s26 = sphi 0, %s23
    %s27 = sphi 0, %s26
    %s43 = sphi 0, %s27
    %s47 = sphi 0, %s47
    %s49 = sphi 0, %s47
    %s50 = sphi 0, %s49
    %s64 = sphi 0, %s50
    %s68 = sphi 0, %s68
    %s70 = sphi 0, %s68
    %s71 = sphi 0, %s70
    %s85 = sphi 0, %s71
    %s89 = sphi 0, %s89
    %s91 = sphi 0, %s89
    %s92 = sphi 0, %s91
    %s106 = sphi 0, %s92
    %s110 = sphi 0, %s110
    %s112 = sphi 0, %s110
    %s113 = sphi 0, %s112
    %s127 = sphi 0, %s113
    %s131 = sphi 0, %s131
    %s133 = sphi 0, %s131
    %s134 = sphi 0, %s133
    %s148 = sphi 0, %s134
    %s152 = sphi 0, %s152
    %s154 = sphi 0, %s152
    %s155 = sphi 0, %s154
    %s169 = sphi 0, %s155
    %s175 = sphi 0, %s177
    %s178 = sphi 0, %s175
    %s179 = sphi 0, %s178
    %s195 = sphi 0, %s179
  $region4: #{seq2seq_transformer.17} parent=0 // loop_header_branch
    %16 = sbr.rel (%p14) target = $region8
  $region5: #{seq2seq_transformer.17} parent=0 // loop_body
    %s18 = ssub.s32 %s13, 1
    %s19 = ssub.s32 %s13, 2
    %s20 = sadd.s32 %s13, 1
    %s21 = ssub.s32 %s13, %s20
    %p22 = scmp.eq.s32.totalorder %s21, 0
    %s24 = sadd.s32 %s23, 1
    %s25 = scalar_select %p22, %s23, %s24
    %p28 = pneg %p22
    %p29 = scmp.eq.s32.totalorder %s13, 1
    %p30 = por %p28, %p29
    %p31 = scmp.ne.s32.totalorder %s23, %s26
    %p32 = scmp.eq.s32.totalorder %s13, 0
    %p33 = por %p31, %p32
    %p34 = scmp.ne.s32.totalorder %s23, %s26
    %p35 = scmp.eq.s32.totalorder %s18, 1
    %p36 = por %p34, %p35
    %p37 = scmp.ne.s32.totalorder %s26, %s27
    %p38 = scmp.eq.s32.totalorder %s18, 0
    %p39 = por %p37, %p38
    %p40 = scmp.ne.s32.totalorder %s26, %s27
    %p41 = scmp.eq.s32.totalorder %s19, 1
    %p42 = por %p40, %p41
    %p44 = scmp.ne.s32.totalorder %s27, %s43
    %p45 = scmp.eq.s32.totalorder %s19, 0
    %p46 = por %p44, %p45
    %s48 = sadd.s32 %s47, 1
    %p51 = scmp.eq.s32.totalorder %s13, 1
    %p52 = scmp.ne.s32.totalorder %s47, %s49
    %p53 = scmp.eq.s32.totalorder %s13, 0
    %p54 = por %p52, %p53
    %p55 = scmp.ne.s32.totalorder %s47, %s49
    %p56 = scmp.eq.s32.totalorder %s18, 1
    %p57 = por %p55, %p56
    %p58 = scmp.ne.s32.totalorder %s49, %s50
    %p59 = scmp.eq.s32.totalorder %s18, 0
    %p60 = por %p58, %p59
    %p61 = scmp.ne.s32.totalorder %s49, %s50
    %p62 = scmp.eq.s32.totalorder %s19, 1
    %p63 = por %p61, %p62
    %p65 = scmp.ne.s32.totalorder %s50, %s64
    %p66 = scmp.eq.s32.totalorder %s19, 0
    %p67 = por %p65, %p66
    %s69 = sadd.s32 %s68, 1
    %p72 = scmp.eq.s32.totalorder %s13, 1
    %p73 = scmp.ne.s32.totalorder %s68, %s70
    %p74 = scmp.eq.s32.totalorder %s13, 0
    %p75 = por %p73, %p74
    %p76 = scmp.ne.s32.totalorder %s68, %s70
    %p77 = scmp.eq.s32.totalorder %s18, 1
    %p78 = por %p76, %p77
    %p79 = scmp.ne.s32.totalorder %s70, %s71
    %p80 = scmp.eq.s32.totalorder %s18, 0
    %p81 = por %p79, %p80
    %p82 = scmp.ne.s32.totalorder %s70, %s71
    %p83 = scmp.eq.s32.totalorder %s19, 1
    %p84 = por %p82, %p83
    %p86 = scmp.ne.s32.totalorder %s71, %s85
    %p87 = scmp.eq.s32.totalorder %s19, 0
    %p88 = por %p86, %p87
    %s90 = sadd.s32 %s89, 1
    %p93 = scmp.eq.s32.totalorder %s13, 1
    %p94 = scmp.ne.s32.totalorder %s89, %s91
    %p95 = scmp.eq.s32.totalorder %s13, 0
    %p96 = por %p94, %p95
    %p97 = scmp.ne.s32.totalorder %s89, %s91
    %p98 = scmp.eq.s32.totalorder %s18, 1
    %p99 = por %p97, %p98
    %p100 = scmp.ne.s32.totalorder %s91, %s92
    %p101 = scmp.eq.s32.totalorder %s18, 0
    %p102 = por %p100, %p101
    %p103 = scmp.ne.s32.totalorder %s91, %s92
    %p104 = scmp.eq.s32.totalorder %s19, 1
    %p105 = por %p103, %p104
    %p107 = scmp.ne.s32.totalorder %s92, %s106
    %p108 = scmp.eq.s32.totalorder %s19, 0
    %p109 = por %p107, %p108
    %s111 = sadd.s32 %s110, 1
    %p114 = scmp.eq.s32.totalorder %s13, 1
    %p115 = scmp.ne.s32.totalorder %s110, %s112
    %p116 = scmp.eq.s32.totalorder %s13, 0
    %p117 = por %p115, %p116
    %p118 = scmp.ne.s32.totalorder %s110, %s112
    %p119 = scmp.eq.s32.totalorder %s18, 1
    %p120 = por %p118, %p119
    %p121 = scmp.ne.s32.totalorder %s112, %s113
    %p122 = scmp.eq.s32.totalorder %s18, 0
    %p123 = por %p121, %p122
    %p124 = scmp.ne.s32.totalorder %s112, %s113
    %p125 = scmp.eq.s32.totalorder %s19, 1
    %p126 = por %p124, %p125
    %p128 = scmp.ne.s32.totalorder %s113, %s127
    %p129 = scmp.eq.s32.totalorder %s19, 0
    %p130 = por %p128, %p129
    %s132 = sadd.s32 %s131, 1
    %p135 = scmp.eq.s32.totalorder %s13, 1
    %p136 = scmp.ne.s32.totalorder %s131, %s133
    %p137 = scmp.eq.s32.totalorder %s13, 0
    %p138 = por %p136, %p137
    %p139 = scmp.ne.s32.totalorder %s131, %s133
    %p140 = scmp.eq.s32.totalorder %s18, 1
    %p141 = por %p139, %p140
    %p142 = scmp.ne.s32.totalorder %s133, %s134
    %p143 = scmp.eq.s32.totalorder %s18, 0
    %p144 = por %p142, %p143
    %p145 = scmp.ne.s32.totalorder %s133, %s134
    %p146 = scmp.eq.s32.totalorder %s19, 1
    %p147 = por %p145, %p146
    %p149 = scmp.ne.s32.totalorder %s134, %s148
    %p150 = scmp.eq.s32.totalorder %s19, 0
    %p151 = por %p149, %p150
    %s153 = sadd.s32 %s152, 1
    %p156 = scmp.eq.s32.totalorder %s13, 1
    %p157 = scmp.ne.s32.totalorder %s152, %s154
    %p158 = scmp.eq.s32.totalorder %s13, 0
    %p159 = por %p157, %p158
    %p160 = scmp.ne.s32.totalorder %s152, %s154
    %p161 = scmp.eq.s32.totalorder %s18, 1
    %p162 = por %p160, %p161
    %p163 = scmp.ne.s32.totalorder %s154, %s155
    %p164 = scmp.eq.s32.totalorder %s18, 0
    %p165 = por %p163, %p164
    %p166 = scmp.ne.s32.totalorder %s154, %s155
    %p167 = scmp.eq.s32.totalorder %s19, 1
    %p168 = por %p166, %p167
    %p170 = scmp.ne.s32.totalorder %s155, %s169
    %p171 = scmp.eq.s32.totalorder %s19, 0
    %p172 = por %p170, %p171
    %s173 = ssub.s32 %s13, %s20
    %p174 = scmp.eq.s32.totalorder %s173, 0
    %s176 = sadd.s32 %s175, 1
    %s177 = scalar_select %p174, %s175, %s176
    %p180 = pneg %p174
    %p181 = scmp.eq.s32.totalorder %s13, 1
    %p182 = por %p180, %p181
    %p183 = scmp.ne.s32.totalorder %s175, %s178
    %p184 = scmp.eq.s32.totalorder %s13, 0
    %p185 = por %p183, %p184
    %p186 = scmp.ne.s32.totalorder %s175, %s178
    %p187 = scmp.eq.s32.totalorder %s18, 1
    %p188 = por %p186, %p187
    %p189 = scmp.ne.s32.totalorder %s178, %s179
    %p190 = scmp.eq.s32.totalorder %s18, 0
    %p191 = por %p189, %p190
    %p192 = scmp.ne.s32.totalorder %s178, %s179
    %p193 = scmp.eq.s32.totalorder %s19, 1
    %p194 = por %p192, %p193
    %p196 = scmp.ne.s32.totalorder %s179, %s195
    %p197 = scmp.eq.s32.totalorder %s19, 0
    %p198 = por %p196, %p197
    %p199 = scmp.le.s32.totalorder 1, %s13
    %p200 = scmp.lt.s32.totalorder %s13, 3
    %p201 = pnand %p199, %p200
    %p202 = pneg %p201
    // Predicated region
    $region9: #{seq2seq_transformer.17} parent=5 // pred_check
      _
    $region10: #{seq2seq_transformer.17} parent=5 // pred_check_branch
      %204 = sbr.rel (%p201) target = $region12
    $region11: #{seq2seq_transformer.17} parent=5 // pred_region
      %s205 = ssub.s32 %s13, 1
      // Predicated region
      $region13: #{seq2seq_transformer.17} parent=11 // pred_check
        %p206 = pneg %p60
      $region14: #{seq2seq_transformer.17} parent=11 // pred_check_branch
        %208 = sbr.rel (%p206) target = $region16
      $region15: #{seq2seq_transformer.17} parent=11 // pred_region
        _
      $region16: #{seq2seq_transformer.17} parent=11 // pred_fallthru
        _
      // Predicated region
      $region17: #{seq2seq_transformer.17} parent=11 // pred_check
        %p209 = pneg %p81
      $region18: #{seq2seq_transformer.17} parent=11 // pred_check_branch
        %211 = sbr.rel (%p209) target = $region20
      $region19: #{seq2seq_transformer.17} parent=11 // pred_region
        _
      $region20: #{seq2seq_transformer.17} parent=11 // pred_fallthru
        _
      // Predicated region
      $region21: #{seq2seq_transformer.17} parent=11 // pred_check
        %p212 = pneg %p102
      $region22: #{seq2seq_transformer.17} parent=11 // pred_check_branch
        %214 = sbr.rel (%p212) target = $region24
      $region23: #{seq2seq_transformer.17} parent=11 // pred_region
        _
      $region24: #{seq2seq_transformer.17} parent=11 // pred_fallthru
        _
      // Predicated region
      $region25: #{seq2seq_transformer.17} parent=11 // pred_check
        %p215 = pneg %p123
      $region26: #{seq2seq_transformer.17} parent=11 // pred_check_branch
        %217 = sbr.rel (%p215) target = $region28
      $region27: #{seq2seq_transformer.17} parent=11 // pred_region
        _
      $region28: #{seq2seq_transformer.17} parent=11 // pred_fallthru
        _
      // Predicated region
      $region29: #{seq2seq_transformer.17} parent=11 // pred_check
        %p218 = pneg %p144
      $region30: #{seq2seq_transformer.17} parent=11 // pred_check_branch
        %220 = sbr.rel (%p218) target = $region32
      $region31: #{seq2seq_transformer.17} parent=11 // pred_region
        _
      $region32: #{seq2seq_transformer.17} parent=11 // pred_fallthru
        _
      // Predicated region
      $region33: #{seq2seq_transformer.17} parent=11 // pred_check
        %p221 = pneg %p165
      $region34: #{seq2seq_transformer.17} parent=11 // pred_check_branch
        %223 = sbr.rel (%p221) target = $region36
      $region35: #{seq2seq_transformer.17} parent=11 // pred_region
        _
      $region36: #{seq2seq_transformer.17} parent=11 // pred_fallthru
        _
    $region12: #{seq2seq_transformer.17} parent=5 // pred_fallthru
      _
    %p224 = scmp.lt.s32.totalorder %s13, 2
    // Predicated region
    $region37: #{seq2seq_transformer.17} parent=5 // pred_check
      %p225 = pneg %p224
    $region38: #{seq2seq_transformer.17} parent=5 // pred_check_branch
      %227 = sbr.rel (%p225) target = $region40
    $region39: #{seq2seq_transformer.17} parent=5 // pred_region
      // Predicated region
      $region41: #{seq2seq_transformer.17} parent=39 // pred_check
        %p228 = pneg %p33
      $region42: #{seq2seq_transformer.17} parent=39 // pred_check_branch
        %230 = sbr.rel (%p228) target = $region44
      $region43: #{seq2seq_transformer.17} parent=39 // pred_region
        %p231 = scmp.lt.s32.totalorder %s13, 1
        %s232 = scalar_select %p231, %s13, 1
        %s233 = smul.addr %s232, 4
        %s234 = scalar_lea.vmem %s0, %s233
      $region44: #{seq2seq_transformer.17} parent=39 // pred_fallthru
        _
    $region40: #{seq2seq_transformer.17} parent=5 // pred_fallthru
      _
    %p235 = scmp.le.s32.totalorder 1, %s13
    %p236 = scmp.lt.s32.totalorder %s13, 3
    %p237 = pnand %p235, %p236
    %p238 = pneg %p237
    // Predicated region
    $region45: #{seq2seq_transformer.17} parent=5 // pred_check
      _
    $region46: #{seq2seq_transformer.17} parent=5 // pred_check_branch
      %240 = sbr.rel (%p237) target = $region48
    $region47: #{seq2seq_transformer.17} parent=5 // pred_region
      %s241 = ssub.s32 %s13, 1
      %p242 = scmp.lt.s32.totalorder %s18, 1
      %s243 = scalar_select %p242, %s18, 1
      %s244 = smul.addr %s243, 4
      %s245 = scalar_lea.vmem %s0, %s244
      %p246 = pneg %p39
      %p247 = pneg %p36
      %p248 = pneg %p60
      %p249 = pneg %p57
      %p250 = pneg %p81
      %p251 = pneg %p78
      %p252 = pneg %p102
      %p253 = pneg %p99
      %p254 = pneg %p123
      %p255 = pneg %p120
      %p256 = pneg %p144
      %p257 = pneg %p141
      %p258 = pneg %p165
      %p259 = pneg %p162
      %p260 = pneg %p191
      %p261 = pneg %p188
      %p262 = scmp.lt.s32.totalorder %s18, 1
      %s263 = scalar_select %p262, %s18, 1
      %s264 = smul.addr %s263, 4
      %s265 = scalar_lea.vmem %s7, %s264
      %p266 = scmp.lt.s32.totalorder %s18, 1
      %s267 = scalar_select %p266, %s18, 1
      %s268 = smul.addr %s267, 4
      %s269 = scalar_lea.vmem %s0, %s268
      %p270 = scmp.lt.s32.totalorder %s18, 1
      %s271 = scalar_select %p270, %s18, 1
      %s272 = smul.addr %s271, 4
      %s273 = scalar_lea.vmem %s7, %s272
      %v275 = vld [vmem:[%s269] sm:$0xf]
      %v276 = vld [vmem:[%s1] sm:$0xf]
      %v277 = vld [vmem:[%s1 + $0x4] sm:$0xf]
      %v278 = vld [vmem:[%s1 + $0x8] sm:$0xf]
      %v279 = vld [vmem:[%s1 + $0xc] sm:$0xf]
      %v280 = vld [vmem:[%s2] sm:$0x1]
      %v282 = vlaneseq
      %v283 = vshrl.u32 %v282, 7
      %v284 = vsub.s32 0, %v283
      %v285 = vrot.slane %v280, %v284
      %v291 = vunpack.c.l.b16 %v276
      %v292 = vunpack.c.l.b16 %v277
      %v293 = vunpack.c.l.b16 %v278
      %v294 = vunpack.c.l.b16 %v279
      %v295 = vpack.c.b16 %v292, %v291
      %v296 = vpack.c.b16 %v294, %v293
      %vm299 = vcmask 261120
      %v301 = vsel %vm299, %v275, 0
      %303 = vmatprep.subr.bf16.mxu0 0
      %304 = vmatpush1.bf16.msra.mxu0 %v295
      %305 = vmatprep.subr.bf16.mxu0 0
      %306 = vmatpush1.bf16.msra.mxu0 %v296
      %307 = vmatprep.subr.bf16.mxu0 0
      %308 = vmatpush1.bf16.msra.mxu0 0
      %309 = vmatprep.subr.bf16.mxu0 0
      %310 = vmatpush1.bf16.msra.mxu0 0
      %311 = vmatprep.subr.bf16.mxu0 0
      %312 = vmatpush1.bf16.msra.mxu0 0
      %313 = vmatprep.subr.bf16.mxu0 0
      %314 = vmatpush1.bf16.msra.mxu0 0
      %315 = vmatprep.subr.bf16.mxu0 0
      %316 = vmatpush1.bf16.msra.mxu0 0
      %317 = vmatprep.subr.bf16.mxu0 0
      %318 = vmatpush1.bf16.msra.mxu0 0
      %319 = vmatprep.subr.bf16.mxu0 0
      %320 = vmatpush1.bf16.msra.mxu0 0
      %321 = vmatprep.subr.bf16.mxu0 0
      %322 = vmatpush1.bf16.msra.mxu0 0
      %323 = vmatprep.subr.bf16.mxu0 0
      %324 = vmatpush1.bf16.msra.mxu0 0
      %325 = vmatprep.subr.bf16.mxu0 0
      %326 = vmatpush1.bf16.msra.mxu0 0
      %327 = vmatprep.subr.bf16.mxu0 0
      %328 = vmatpush1.bf16.msra.mxu0 0
      %329 = vmatprep.subr.bf16.mxu0 0
      %330 = vmatpush1.bf16.msra.mxu0 0
      %331 = vmatprep.subr.bf16.mxu0 0
      %332 = vmatpush1.bf16.msra.mxu0 0
      %333 = vmatprep.subr.bf16.mxu0 0
      %334 = vmatpush1.bf16.msra.mxu0 0
      %335 = vmatprep.mubr.bf16.mxu0 0
      %336 = vmatmul.mubr.bf16.gmra.mrb[0].mxu0 %v301
      %v337 = vpop.f32.mrb[0].mxu0
      %v338 = vadd.f32 %v285, %v337
      %v339 = vpop.f32.mrb[0].mxu0
      %v340 = vpop.f32.mrb[0].mxu0
      %v341 = vpop.f32.mrb[0].mxu0
      %342 = vdwg.mxu0
      %v343 = vunpack.c.l.bf16 %v275
      %v344 = vld [vmem:[%s3] sm:$0xf]
      %v345 = vld [vmem:[%s3 + $0x4] sm:$0xf]
      %v346 = vld [vmem:[%s3 + $0x8] sm:$0xf]
      %v347 = vld [vmem:[%s3 + $0xc] sm:$0xf]
      %v348 = vld [vmem:[%s4] sm:$0x1]
      %v349 = vld [vmem:[%s5] sm:$0x1]
      %v350 = vld [vmem:[%s6] sm:$0x1]
      %v351 = vpack.c.bf16 %v338, %v338
      %353 = vrot.lane.b32.xlu0 %v351, 96
      %v354 = vpop.permute.xlu0 %353
      %vm355 = vcmask 64512
      %v357 = vsel %vm355, %v351, 0
      %v360 = vsel %vm355, %v354, 0
      %362 = vmatprep.subr.bf16.mxu0 0
      %363 = vmatpush1.bf16.xpose.msra.mxu0 %v360
      %364 = vmatprep.subr.bf16.mxu0 0
      %365 = vmatpush1.bf16.xpose.msra.mxu0 0
      %366 = vmatprep.subr.bf16.mxu0 0
      %367 = vmatpush1.bf16.xpose.msra.mxu0 0
      %368 = vmatprep.subr.bf16.mxu0 0
      %369 = vmatpush1.bf16.xpose.msra.mxu0 0
      %370 = vmatprep.subr.bf16.mxu0 0
      %371 = vmatpush1.bf16.xpose.msra.mxu0 0
      %372 = vmatprep.subr.bf16.mxu0 0
      %373 = vmatpush1.bf16.xpose.msra.mxu0 0
      %374 = vmatprep.subr.bf16.mxu0 0
      %375 = vmatpush1.bf16.xpose.msra.mxu0 0
      %376 = vmatprep.subr.bf16.mxu0 0
      %377 = vmatpush1.bf16.xpose.msra.mxu0 0
      %378 = vmatprep.subr.bf16.mxu0 0
      %379 = vmatpush1.bf16.xpose.msra.mxu0 0
      %380 = vmatprep.subr.bf16.mxu0 0
      %381 = vmatpush1.bf16.xpose.msra.mxu0 0
      %382 = vmatprep.subr.bf16.mxu0 0
      %383 = vmatpush1.bf16.xpose.msra.mxu0 0
      %384 = vmatprep.subr.bf16.mxu0 0
      %385 = vmatpush1.bf16.xpose.msra.mxu0 0
      %386 = vmatprep.subr.bf16.mxu0 0
      %387 = vmatpush1.bf16.xpose.msra.mxu0 0
      %388 = vmatprep.subr.bf16.mxu0 0
      %389 = vmatpush1.bf16.xpose.msra.mxu0 0
      %390 = vmatprep.subr.bf16.mxu0 0
      %391 = vmatpush1.bf16.xpose.msra.mxu0 0
      %392 = vmatprep.subr.bf16.mxu0 0
      %393 = vmatpush1.bf16.xpose.msra.mxu0 0
      %394 = vmatprep.mubr.bf16.mxu0 0
      %395 = vmatmul.mubr.bf16.gmra.mrb[0].mxu0 %v357
      %v396 = vpop.f32.mrb[0].mxu0
      %v397 = vadd.f32 0.0, %v396
      %v398 = vpop.f32.mrb[0].mxu0
      %v399 = vpop.f32.mrb[0].mxu0
      %v400 = vpop.f32.mrb[0].mxu0
      %401 = vdwg.mxu0
      %v402 = vmul.f32 %v397, 0.35355338
      %v403 = vlaneseq
      %v404 = vshrl.u32 %v403, 7
      %v405 = vlaneseq
      %v406 = vand.u32 %v405, 127
      %vm407 = vcmp.ge.s32.totalorder %v404, %v406
      %v408 = vsel %vm407, %v402, -1e+30
      %v409 = vsel %vm355, %v408, -inf
      %410 = vmax.xlane.f32.xlu0 %v409
      %v411 = vpop.xlane.xlu0 %410
      %v412 = vsub.f32 %v408, %v411
      %v413 = vmul.f32 %v412, 1.442695
      %v414 = vpow.pop %v413
      %v415 = vsel %vm355, %v414, 0.0
      %416 = vadd.xlane.f32.xlu0 %v415
      %v417 = vpop.xlane.xlu0 %416
      %v418 = vrcp.pop %v417
      %v419 = vmul.f32 %v414, %v418
      %v420 = vpack.c.bf16 %v419, %v419
      %421 = vrot.lane.b32.xlu0 %v351, 64
      %v422 = vpop.permute.xlu0 %421
      %v424 = vsel %vm355, %v420, 0
      %vm426 = vcmask 1043456
      %v428 = vsel %vm426, %v422, 0
      %430 = vmatprep.subr.bf16.mxu0 0
      %431 = vmatpush1.bf16.msra.mxu0 %v428
      %432 = vmatprep.subr.bf16.mxu0 0
      %433 = vmatpush1.bf16.msra.mxu0 0
      %434 = vmatprep.subr.bf16.mxu0 0
      %435 = vmatpush1.bf16.msra.mxu0 0
      %436 = vmatprep.subr.bf16.mxu0 0
      %437 = vmatpush1.bf16.msra.mxu0 0
      %438 = vmatprep.subr.bf16.mxu0 0
      %439 = vmatpush1.bf16.msra.mxu0 0
      %440 = vmatprep.subr.bf16.mxu0 0
      %441 = vmatpush1.bf16.msra.mxu0 0
      %442 = vmatprep.subr.bf16.mxu0 0
      %443 = vmatpush1.bf16.msra.mxu0 0
      %444 = vmatprep.subr.bf16.mxu0 0
      %445 = vmatpush1.bf16.msra.mxu0 0
      %446 = vmatprep.subr.bf16.mxu0 0
      %447 = vmatpush1.bf16.msra.mxu0 0
      %448 = vmatprep.subr.bf16.mxu0 0
      %449 = vmatpush1.bf16.msra.mxu0 0
      %450 = vmatprep.subr.bf16.mxu0 0
      %451 = vmatpush1.bf16.msra.mxu0 0
      %452 = vmatprep.subr.bf16.mxu0 0
      %453 = vmatpush1.bf16.msra.mxu0 0
      %454 = vmatprep.subr.bf16.mxu0 0
      %455 = vmatpush1.bf16.msra.mxu0 0
      %456 = vmatprep.subr.bf16.mxu0 0
      %457 = vmatpush1.bf16.msra.mxu0 0
      %458 = vmatprep.subr.bf16.mxu0 0
      %459 = vmatpush1.bf16.msra.mxu0 0
      %460 = vmatprep.subr.bf16.mxu0 0
      %461 = vmatpush1.bf16.msra.mxu0 0
      %462 = vmatprep.mubr.bf16.mxu0 0
      %463 = vmatmul.mubr.bf16.gmra.mrb[0].mxu0 %v424
      %v464 = vpop.f32.mrb[0].mxu0
      %v465 = vadd.f32 0.0, %v464
      %v466 = vpop.f32.mrb[0].mxu0
      %v467 = vpop.f32.mrb[0].mxu0
      %v468 = vpop.f32.mrb[0].mxu0
      %469 = vdwg.mxu0
      %470 = vrot.lane.b32.xlu0 %v351, 120
      %v471 = vpop.permute.xlu0 %470
      %472 = vrot.lane.b32.xlu0 %v351, 88
      %v473 = vpop.permute.xlu0 %472
      %v475 = vsel %vm355, %v471, 0
      %v478 = vsel %vm355, %v473, 0
      %480 = vmatprep.subr.bf16.mxu0 0
      %481 = vmatpush1.bf16.xpose.msra.mxu0 %v478
      %482 = vmatprep.subr.bf16.mxu0 0
      %483 = vmatpush1.bf16.xpose.msra.mxu0 0
      %484 = vmatprep.subr.bf16.mxu0 0
      %485 = vmatpush1.bf16.xpose.msra.mxu0 0
      %486 = vmatprep.subr.bf16.mxu0 0
      %487 = vmatpush1.bf16.xpose.msra.mxu0 0
      %488 = vmatprep.subr.bf16.mxu0 0
      %489 = vmatpush1.bf16.xpose.msra.mxu0 0
      %490 = vmatprep.subr.bf16.mxu0 0
      %491 = vmatpush1.bf16.xpose.msra.mxu0 0
      %492 = vmatprep.subr.bf16.mxu0 0
      %493 = vmatpush1.bf16.xpose.msra.mxu0 0
      %494 = vmatprep.subr.bf16.mxu0 0
      %495 = vmatpush1.bf16.xpose.msra.mxu0 0
      %496 = vmatprep.subr.bf16.mxu0 0
      %497 = vmatpush1.bf16.xpose.msra.mxu0 0
      %498 = vmatprep.subr.bf16.mxu0 0
      %499 = vmatpush1.bf16.xpose.msra.mxu0 0
      %500 = vmatprep.subr.bf16.mxu0 0
      %501 = vmatpush1.bf16.xpose.msra.mxu0 0
      %502 = vmatprep.subr.bf16.mxu0 0
      %503 = vmatpush1.bf16.xpose.msra.mxu0 0
      %504 = vmatprep.subr.bf16.mxu0 0
      %505 = vmatpush1.bf16.xpose.msra.mxu0 0
      %506 = vmatprep.subr.bf16.mxu0 0
      %507 = vmatpush1.bf16.xpose.msra.mxu0 0
      %508 = vmatprep.subr.bf16.mxu0 0
      %509 = vmatpush1.bf16.xpose.msra.mxu0 0
      %510 = vmatprep.subr.bf16.mxu0 0
      %511 = vmatpush1.bf16.xpose.msra.mxu0 0
      %512 = vmatprep.mubr.bf16.mxu0 0
      %513 = vmatmul.mubr.bf16.gmra.mrb[0].mxu0 %v475
      %v514 = vpop.f32.mrb[0].mxu0
      %v515 = vadd.f32 0.0, %v514
      %v516 = vpop.f32.mrb[0].mxu0
      %v517 = vpop.f32.mrb[0].mxu0
      %v518 = vpop.f32.mrb[0].mxu0
      %519 = vdwg.mxu0
      %v520 = vmul.f32 %v515, 0.35355338
      %v521 = vsel %vm407, %v520, -1e+30
      %v522 = vsel %vm355, %v521, -inf
      %523 = vmax.xlane.f32.xlu0 %v522
      %v524 = vpop.xlane.xlu0 %523
      %v525 = vsub.f32 %v521, %v524
      %v526 = vmul.f32 %v525, 1.442695
      %v527 = vpow.pop %v526
      %v528 = vsel %vm355, %v527, 0.0
      %529 = vadd.xlane.f32.xlu0 %v528
      %v530 = vpop.xlane.xlu0 %529
      %v531 = vrcp.pop %v530
      %v532 = vmul.f32 %v527, %v531
      %v533 = vpack.c.bf16 %v532, %v532
      %534 = vrot.lane.b32.xlu0 %v351, 56
      %v535 = vpop.permute.xlu0 %534
      %v537 = vsel %vm355, %v533, 0
      %v540 = vsel %vm426, %v535, 0
      %542 = vmatprep.subr.bf16.mxu0 0
      %543 = vmatpush1.bf16.msra.mxu0 %v540
      %544 = vmatprep.subr.bf16.mxu0 0
      %545 = vmatpush1.bf16.msra.mxu0 0
      %546 = vmatprep.subr.bf16.mxu0 0
      %547 = vmatpush1.bf16.msra.mxu0 0
      %548 = vmatprep.subr.bf16.mxu0 0
      %549 = vmatpush1.bf16.msra.mxu0 0
      %550 = vmatprep.subr.bf16.mxu0 0
      %551 = vmatpush1.bf16.msra.mxu0 0
      %552 = vmatprep.subr.bf16.mxu0 0
      %553 = vmatpush1.bf16.msra.mxu0 0
      %554 = vmatprep.subr.bf16.mxu0 0
      %555 = vmatpush1.bf16.msra.mxu0 0
      %556 = vmatprep.subr.bf16.mxu0 0
      %557 = vmatpush1.bf16.msra.mxu0 0
      %558 = vmatprep.subr.bf16.mxu0 0
      %559 = vmatpush1.bf16.msra.mxu0 0
      %560 = vmatprep.subr.bf16.mxu0 0
      %561 = vmatpush1.bf16.msra.mxu0 0
      %562 = vmatprep.subr.bf16.mxu0 0
      %563 = vmatpush1.bf16.msra.mxu0 0
      %564 = vmatprep.subr.bf16.mxu0 0
      %565 = vmatpush1.bf16.msra.mxu0 0
      %566 = vmatprep.subr.bf16.mxu0 0
      %567 = vmatpush1.bf16.msra.mxu0 0
      %568 = vmatprep.subr.bf16.mxu0 0
      %569 = vmatpush1.bf16.msra.mxu0 0
      %570 = vmatprep.subr.bf16.mxu0 0
      %571 = vmatpush1.bf16.msra.mxu0 0
      %572 = vmatprep.subr.bf16.mxu0 0
      %573 = vmatpush1.bf16.msra.mxu0 0
      %574 = vmatprep.mubr.bf16.mxu0 0
      %575 = vmatmul.mubr.bf16.gmra.mrb[0].mxu0 %v537
      %v576 = vpop.f32.mrb[0].mxu0
      %v577 = vadd.f32 0.0, %v576
      %v578 = vpop.f32.mrb[0].mxu0
      %v579 = vpop.f32.mrb[0].mxu0
      %v580 = vpop.f32.mrb[0].mxu0
      %581 = vdwg.mxu0
      %582 = vrot.lane.b32.xlu0 %v351, 112
      %v583 = vpop.permute.xlu0 %582
      %584 = vrot.lane.b32.xlu0 %v351, 80
      %v585 = vpop.permute.xlu0 %584
      %v587 = vsel %vm355, %v583, 0
      %v590 = vsel %vm355, %v585, 0
      %592 = vmatprep.subr.bf16.mxu0 0
      %593 = vmatpush1.bf16.xpose.msra.mxu0 %v590
      %594 = vmatprep.subr.bf16.mxu0 0
      %595 = vmatpush1.bf16.xpose.msra.mxu0 0
      %596 = vmatprep.subr.bf16.mxu0 0
      %597 = vmatpush1.bf16.xpose.msra.mxu0 0
      %598 = vmatprep.subr.bf16.mxu0 0
      %599 = vmatpush1.bf16.xpose.msra.mxu0 0
      %600 = vmatprep.subr.bf16.mxu0 0
      %601 = vmatpush1.bf16.xpose.msra.mxu0 0
      %602 = vmatprep.subr.bf16.mxu0 0
      %603 = vmatpush1.bf16.xpose.msra.mxu0 0
      %604 = vmatprep.subr.bf16.mxu0 0
      %605 = vmatpush1.bf16.xpose.msra.mxu0 0
      %606 = vmatprep.subr.bf16.mxu0 0
      %607 = vmatpush1.bf16.xpose.msra.mxu0 0
      %608 = vmatprep.subr.bf16.mxu0 0
      %609 = vmatpush1.bf16.xpose.msra.mxu0 0
      %610 = vmatprep.subr.bf16.mxu0 0
      %611 = vmatpush1.bf16.xpose.msra.mxu0 0
      %612 = vmatprep.subr.bf16.mxu0 0
      %613 = vmatpush1.bf16.xpose.msra.mxu0 0
      %614 = vmatprep.subr.bf16.mxu0 0
      %615 = vmatpush1.bf16.xpose.msra.mxu0 0
      %616 = vmatprep.subr.bf16.mxu0 0
      %617 = vmatpush1.bf16.xpose.msra.mxu0 0
      %618 = vmatprep.subr.bf16.mxu0 0
      %619 = vmatpush1.bf16.xpose.msra.mxu0 0
      %620 = vmatprep.subr.bf16.mxu0 0
      %621 = vmatpush1.bf16.xpose.msra.mxu0 0
      %622 = vmatprep.subr.bf16.mxu0 0
      %623 = vmatpush1.bf16.xpose.msra.mxu0 0
      %624 = vmatprep.mubr.bf16.mxu0 0
      %625 = vmatmul.mubr.bf16.gmra.mrb[0].mxu0 %v587
      %v626 = vpop.f32.mrb[0].mxu0
      %v627 = vadd.f32 0.0, %v626
      %v628 = vpop.f32.mrb[0].mxu0
      %v629 = vpop.f32.mrb[0].mxu0
      %v630 = vpop.f32.mrb[0].mxu0
      %631 = vdwg.mxu0
      %v632 = vmul.f32 %v627, 0.35355338
      %v633 = vsel %vm407, %v632, -1e+30
      %v634 = vsel %vm355, %v633, -inf
      %635 = vmax.xlane.f32.xlu0 %v634
      %v636 = vpop.xlane.xlu0 %635
      %v637 = vsub.f32 %v633, %v636
      %v638 = vmul.f32 %v637, 1.442695
      %v639 = vpow.pop %v638
      %v640 = vsel %vm355, %v639, 0.0
      %641 = vadd.xlane.f32.xlu0 %v640
      %v642 = vpop.xlane.xlu0 %641
      %v643 = vrcp.pop %v642
      %v644 = vmul.f32 %v639, %v643
      %v645 = vpack.c.bf16 %v644, %v644
      %646 = vrot.lane.b32.xlu0 %v351, 48
      %v647 = vpop.permute.xlu0 %646
      %v649 = vsel %vm355, %v645, 0
      %v652 = vsel %vm426, %v647, 0
      %654 = vmatprep.subr.bf16.mxu0 0
      %655 = vmatpush1.bf16.msra.mxu0 %v652
      %656 = vmatprep.subr.bf16.mxu0 0
      %657 = vmatpush1.bf16.msra.mxu0 0
      %658 = vmatprep.subr.bf16.mxu0 0
      %659 = vmatpush1.bf16.msra.mxu0 0
      %660 = vmatprep.subr.bf16.mxu0 0
      %661 = vmatpush1.bf16.msra.mxu0 0
      %662 = vmatprep.subr.bf16.mxu0 0
      %663 = vmatpush1.bf16.msra.mxu0 0
      %664 = vmatprep.subr.bf16.mxu0 0
      %665 = vmatpush1.bf16.msra.mxu0 0
      %666 = vmatprep.subr.bf16.mxu0 0
      %667 = vmatpush1.bf16.msra.mxu0 0
      %668 = vmatprep.subr.bf16.mxu0 0
      %669 = vmatpush1.bf16.msra.mxu0 0
      %670 = vmatprep.subr.bf16.mxu0 0
      %671 = vmatpush1.bf16.msra.mxu0 0
      %672 = vmatprep.subr.bf16.mxu0 0
      %673 = vmatpush1.bf16.msra.mxu0 0
      %674 = vmatprep.subr.bf16.mxu0 0
      %675 = vmatpush1.bf16.msra.mxu0 0
      %676 = vmatprep.subr.bf16.mxu0 0
      %677 = vmatpush1.bf16.msra.mxu0 0
      %678 = vmatprep.subr.bf16.mxu0 0
      %679 = vmatpush1.bf16.msra.mxu0 0
      %680 = vmatprep.subr.bf16.mxu0 0
      %681 = vmatpush1.bf16.msra.mxu0 0
      %682 = vmatprep.subr.bf16.mxu0 0
      %683 = vmatpush1.bf16.msra.mxu0 0
      %684 = vmatprep.subr.bf16.mxu0 0
      %685 = vmatpush1.bf16.msra.mxu0 0
      %686 = vmatprep.mubr.bf16.mxu0 0
      %687 = vmatmul.mubr.bf16.gmra.mrb[0].mxu0 %v649
      %v688 = vpop.f32.mrb[0].mxu0
      %v689 = vadd.f32 0.0, %v688
      %v690 = vpop.f32.mrb[0].mxu0
      %v691 = vpop.f32.mrb[0].mxu0
      %v692 = vpop.f32.mrb[0].mxu0
      %693 = vdwg.mxu0
      %694 = vrot.lane.b32.xlu0 %v351, 104
      %v695 = vpop.permute.xlu0 %694
      %696 = vrot.lane.b32.xlu0 %v351, 72
      %v697 = vpop.permute.xlu0 %696
      %v699 = vsel %vm355, %v695, 0
      %v702 = vsel %vm355, %v697, 0
      %704 = vmatprep.subr.bf16.mxu0 0
      %705 = vmatpush1.bf16.xpose.msra.mxu0 %v702
      %706 = vmatprep.subr.bf16.mxu0 0
      %707 = vmatpush1.bf16.xpose.msra.mxu0 0
      %708 = vmatprep.subr.bf16.mxu0 0
      %709 = vmatpush1.bf16.xpose.msra.mxu0 0
      %710 = vmatprep.subr.bf16.mxu0 0
      %711 = vmatpush1.bf16.xpose.msra.mxu0 0
      %712 = vmatprep.subr.bf16.mxu0 0
      %713 = vmatpush1.bf16.xpose.msra.mxu0 0
      %714 = vmatprep.subr.bf16.mxu0 0
      %715 = vmatpush1.bf16.xpose.msra.mxu0 0
      %716 = vmatprep.subr.bf16.mxu0 0
      %717 = vmatpush1.bf16.xpose.msra.mxu0 0
      %718 = vmatprep.subr.bf16.mxu0 0
      %719 = vmatpush1.bf16.xpose.msra.mxu0 0
      %720 = vmatprep.subr.bf16.mxu0 0
      %721 = vmatpush1.bf16.xpose.msra.mxu0 0
      %722 = vmatprep.subr.bf16.mxu0 0
      %723 = vmatpush1.bf16.xpose.msra.mxu0 0
      %724 = vmatprep.subr.bf16.mxu0 0
      %725 = vmatpush1.bf16.xpose.msra.mxu0 0
      %726 = vmatprep.subr.bf16.mxu0 0
      %727 = vmatpush1.bf16.xpose.msra.mxu0 0
      %728 = vmatprep.subr.bf16.mxu0 0
      %729 = vmatpush1.bf16.xpose.msra.mxu0 0
      %730 = vmatprep.subr.bf16.mxu0 0
      %731 = vmatpush1.bf16.xpose.msra.mxu0 0
      %732 = vmatprep.subr.bf16.mxu0 0
      %733 = vmatpush1.bf16.xpose.msra.mxu0 0
      %734 = vmatprep.subr.bf16.mxu0 0
      %735 = vmatpush1.bf16.xpose.msra.mxu0 0
      %736 = vmatprep.mubr.bf16.mxu0 0
      %737 = vmatmul.mubr.bf16.gmra.mrb[0].mxu0 %v699
      %v738 = vpop.f32.mrb[0].mxu0
      %v739 = vadd.f32 0.0, %v738
      %v740 = vpop.f32.mrb[0].mxu0
      %v741 = vpop.f32.mrb[0].mxu0
      %v742 = vpop.f32.mrb[0].mxu0
      %743 = vdwg.mxu0
      %v744 = vmul.f32 %v739, 0.35355338
      %v745 = vsel %vm407, %v744, -1e+30
      %v746 = vsel %vm355, %v745, -inf
      %747 = vmax.xlane.f32.xlu0 %v746
      %v748 = vpop.xlane.xlu0 %747
      %v749 = vsub.f32 %v745, %v748
      %v750 = vmul.f32 %v749, 1.442695
      %v751 = vpow.pop %v750
      %v752 = vsel %vm355, %v751, 0.0
      %753 = vadd.xlane.f32.xlu0 %v752
      %v754 = vpop.xlane.xlu0 %753
      %v755 = vrcp.pop %v754
      %v756 = vmul.f32 %v751, %v755
      %v757 = vpack.c.bf16 %v756, %v756
      %758 = vrot.lane.b32.xlu0 %v351, 40
      %v759 = vpop.permute.xlu0 %758
      %v761 = vsel %vm355, %v757, 0
      %v764 = vsel %vm426, %v759, 0
      %766 = vmatprep.subr.bf16.mxu0 0
      %767 = vmatpush1.bf16.msra.mxu0 %v764
      %768 = vmatprep.subr.bf16.mxu0 0
      %769 = vmatpush1.bf16.msra.mxu0 0
      %770 = vmatprep.subr.bf16.mxu0 0
      %771 = vmatpush1.bf16.msra.mxu0 0
      %772 = vmatprep.subr.bf16.mxu0 0
      %773 = vmatpush1.bf16.msra.mxu0 0
      %774 = vmatprep.subr.bf16.mxu0 0
      %775 = vmatpush1.bf16.msra.mxu0 0
      %776 = vmatprep.subr.bf16.mxu0 0
      %777 = vmatpush1.bf16.msra.mxu0 0
      %778 = vmatprep.subr.bf16.mxu0 0
      %779 = vmatpush1.bf16.msra.mxu0 0
      %780 = vmatprep.subr.bf16.mxu0 0
      %781 = vmatpush1.bf16.msra.mxu0 0
      %782 = vmatprep.subr.bf16.mxu0 0
      %783 = vmatpush1.bf16.msra.mxu0 0
      %784 = vmatprep.subr.bf16.mxu0 0
      %785 = vmatpush1.bf16.msra.mxu0 0
      %786 = vmatprep.subr.bf16.mxu0 0
      %787 = vmatpush1.bf16.msra.mxu0 0
      %788 = vmatprep.subr.bf16.mxu0 0
      %789 = vmatpush1.bf16.msra.mxu0 0
      %790 = vmatprep.subr.bf16.mxu0 0
      %791 = vmatpush1.bf16.msra.mxu0 0
      %792 = vmatprep.subr.bf16.mxu0 0
      %793 = vmatpush1.bf16.msra.mxu0 0
      %794 = vmatprep.subr.bf16.mxu0 0
      %795 = vmatpush1.bf16.msra.mxu0 0
      %796 = vmatprep.subr.bf16.mxu0 0
      %797 = vmatpush1.bf16.msra.mxu0 0
      %798 = vmatprep.mubr.bf16.mxu0 0
      %799 = vmatmul.mubr.bf16.gmra.mrb[0].mxu0 %v761
      %v800 = vpop.f32.mrb[0].mxu0
      %v801 = vadd.f32 0.0, %v800
      %v802 = vpop.f32.mrb[0].mxu0
      %v803 = vpop.f32.mrb[0].mxu0
      %v804 = vpop.f32.mrb[0].mxu0
      %805 = vdwg.mxu0
      %807 = vrot.lane.b32.xlu0 %v577, 8
      %v808 = vpop.permute.xlu0 %807
      %811 = vrot.lane.b32.xlu0 %v689, 16
      %v812 = vpop.permute.xlu0 %811
      %815 = vrot.lane.b32.xlu0 %v801, 24
      %v816 = vpop.permute.xlu0 %815
      %v818 = vsel %vm355, %v465, %v808
      %vm819 = vcmask 130048
      %v820 = vsel %vm819, %v818, %v812
      %vm821 = vcmask 195584
      %v822 = vsel %vm821, %v820, %v816
      %v823 = vpack.c.bf16 %v822, %v822
      %v825 = vlaneseq
      %v826 = vshrl.u32 %v825, 7
      %v827 = vsub.s32 0, %v826
      %v828 = vrot.slane %v348, %v827
      %v834 = vunpack.c.l.b16 %v344
      %v835 = vunpack.c.l.b16 %v345
      %v836 = vunpack.c.l.b16 %v346
      %v837 = vunpack.c.l.b16 %v347
      %v838 = vpack.c.b16 %v835, %v834
      %v839 = vpack.c.b16 %v837, %v836
      %v843 = vsel %vm299, %v823, 0
      %845 = vmatprep.subr.bf16.mxu0 0
      %846 = vmatpush1.bf16.msra.mxu0 %v838
      %847 = vmatprep.subr.bf16.mxu0 0
      %848 = vmatpush1.bf16.msra.mxu0 %v839
      %849 = vmatprep.subr.bf16.mxu0 0
      %850 = vmatpush1.bf16.msra.mxu0 0
      %851 = vmatprep.subr.bf16.mxu0 0
      %852 = vmatpush1.bf16.msra.mxu0 0
      %853 = vmatprep.subr.bf16.mxu0 0
      %854 = vmatpush1.bf16.msra.mxu0 0
      %855 = vmatprep.subr.bf16.mxu0 0
      %856 = vmatpush1.bf16.msra.mxu0 0
      %857 = vmatprep.subr.bf16.mxu0 0
      %858 = vmatpush1.bf16.msra.mxu0 0
      %859 = vmatprep.subr.bf16.mxu0 0
      %860 = vmatpush1.bf16.msra.mxu0 0
      %861 = vmatprep.subr.bf16.mxu0 0
      %862 = vmatpush1.bf16.msra.mxu0 0
      %863 = vmatprep.subr.bf16.mxu0 0
      %864 = vmatpush1.bf16.msra.mxu0 0
      %865 = vmatprep.subr.bf16.mxu0 0
      %866 = vmatpush1.bf16.msra.mxu0 0
      %867 = vmatprep.subr.bf16.mxu0 0
      %868 = vmatpush1.bf16.msra.mxu0 0
      %869 = vmatprep.subr.bf16.mxu0 0
      %870 = vmatpush1.bf16.msra.mxu0 0
      %871 = vmatprep.subr.bf16.mxu0 0
      %872 = vmatpush1.bf16.msra.mxu0 0
      %873 = vmatprep.subr.bf16.mxu0 0
      %874 = vmatpush1.bf16.msra.mxu0 0
      %875 = vmatprep.subr.bf16.mxu0 0
      %876 = vmatpush1.bf16.msra.mxu0 0
      %877 = vmatprep.mubr.bf16.mxu0 0
      %878 = vmatmul.mubr.bf16.gmra.mrb[0].mxu0 %v843
      %v879 = vpop.f32.mrb[0].mxu0
      %v880 = vadd.f32 %v828, %v879
      %v881 = vpop.f32.mrb[0].mxu0
      %v882 = vpop.f32.mrb[0].mxu0
      %v883 = vpop.f32.mrb[0].mxu0
      %884 = vdwg.mxu0
      %v885 = vadd.f32 %v880, %v343
      %v886 = vsel %vm299, %v885, 0.0
      %887 = vadd.xlane.f32.xlu0 %v886
      %v888 = vpop.xlane.xlu0 %887
      %v889 = vrcp.pop 32.0
      %v890 = vmul.f32 %v888, %v889
      %v891 = vsub.f32 %v885, %v890
      %v892 = vmul.f32 %v891, %v891
      %v893 = vsel %vm299, %v892, 0.0
      %894 = vadd.xlane.f32.xlu0 %v893
      %v895 = vpop.xlane.xlu0 %894
      %v896 = vmul.f32 %v895, %v889
      %v897 = vadd.f32 %v896, 1e-05
      %v898 = vrsqrt.pop %v897
      %v899 = vmul.f32 %v891, %v898
      %v901 = vlaneseq
      %v902 = vshrl.u32 %v901, 7
      %v903 = vsub.s32 0, %v902
      %v904 = vrot.slane %v349, %v903
      %v906 = vmul.f32 %v899, %v904
      %v908 = vlaneseq
      %v909 = vshrl.u32 %v908, 7
      %v910 = vsub.s32 0, %v909
      %v911 = vrot.slane %v350, %v910
      %v913 = vadd.f32 %v906, %v911
      %v914 = vpack.c.bf16 %v913, %v913
      %vm915 = vcmask 257024
      %916 = vst.msk [vmem:[%s273] sm:$0xf] %vm915, %v914
      %p917 = scmp.lt.s32.totalorder %s18, 1
      %s918 = scalar_select %p917, %s18, 1
      %s919 = smul.addr %s918, 4
      %s920 = scalar_lea.vmem %s7, %s919
      // Predicated region
      $region49: #{seq2seq_transformer.17} parent=47 // pred_check
        %p921 = pneg %p188
      $region50: #{seq2seq_transformer.17} parent=47 // pred_check_branch
        %923 = sbr.rel (%p921) target = $region52
      $region51: #{seq2seq_transformer.17} parent=47 // pred_region
        _
      $region52: #{seq2seq_transformer.17} parent=47 // pred_fallthru
        _
    $region48: #{seq2seq_transformer.17} parent=5 // pred_fallthru
      _
    %p924 = scmp.le.s32.totalorder 2, %s13
    // Predicated region
    $region53: #{seq2seq_transformer.17} parent=5 // pred_check
      %p925 = pneg %p924
    $region54: #{seq2seq_transformer.17} parent=5 // pred_check_branch
      %927 = sbr.rel (%p925) target = $region56
    $region55: #{seq2seq_transformer.17} parent=5 // pred_region
      %s928 = ssub.s32 %s13, 2
      // Predicated region
      $region57: #{seq2seq_transformer.17} parent=55 // pred_check
        %p929 = pneg %p194
      $region58: #{seq2seq_transformer.17} parent=55 // pred_check_branch
        %931 = sbr.rel (%p929) target = $region60
      $region59: #{seq2seq_transformer.17} parent=55 // pred_region
        %p932 = scmp.lt.s32.totalorder %s19, 1
        %s933 = scalar_select %p932, %s19, 1
        %s934 = smul.addr %s933, 4
        %s935 = scalar_lea.vmem %s7, %s934
      $region60: #{seq2seq_transformer.17} parent=55 // pred_fallthru
        _
    $region56: #{seq2seq_transformer.17} parent=5 // pred_fallthru
      _
  $region6: #{seq2seq_transformer.17} parent=0 // loop_footer
    %s17 = sadd.s32 1, %s13
  $region7: #{seq2seq_transformer.17} parent=0 // loop_footer_branch
    %12 = sbr.rel target = $region3
  $region8: #{seq2seq_transformer.17} parent=0 // loop_exit
    _

// kernel: seq2seq_transformer.23
$region0: #{seq2seq_transformer.23}
  #allocation0 [shape = 'u32[]', space=smem, size = 0x4, offset = 0x4, fixed_abs, tag = 'smem constant byte address 0x4 - core index']
  #allocation1 [shape = 'u32[144,128]{1,0:T(1,128)}', space=vmem, size = 0x12000, scoped, tag = 'internal scratch']
  #allocation2 [shape = 'bf16[16,32]{1,0:T(16,128)(2,1)}', space=vmem, size = 0x1000, scoped, tag = 'scratch operand']
  %s0 = inlined_call_operand.vmem [shape: bf16[16,32], index: 0, kind: input, shape index: {}]
  %s1 = inlined_call_operand.vmem [shape: f32[1,32], index: 1, kind: input, shape index: {}]
  %s2 = inlined_call_operand.vmem [shape: f32[1,32], index: 2, kind: input, shape index: {}]
  %s3 = inlined_call_operand.vmem [shape: f32[1,32], index: 3, kind: input, shape index: {}]
  %s4 = inlined_call_operand.vmem [shape: bf16[128,32], index: 4, kind: input, shape index: {}]
  %s5 = inlined_call_operand.hbm [shape: f32[16,128], index: 5, kind: output, shape index: {}]
  %s6 = sld [smem:[#allocation0]]
  $region34: #{seq2seq_transformer.23} parent=0
    _
  %s8 = ssub.s32 1, %s6
  %s9 = scalar_select 0, %s8, %s6
  $region1: #{seq2seq_transformer.23} parent=0
    #allocation3 [shape = 'u8[8192]{0}', space=vmem, size = 0x2000, scoped, tag = 'output window, operand 0, single buffered']
    #allocation4 [shape = 's32[1]{0}', space=sflag, size = 0x4, scoped, tag = 'scoped memory for seq2seq_transformer.23']
    %10 = vsyncpa [#allocation4], 0
    // Predicated region
    $region2: #{seq2seq_transformer.23} parent=1 // pred_check
      _
    $region3: #{seq2seq_transformer.23} parent=1 // pred_check_branch
      %12 = sbr.rel (0) target = $region5
    $region4: #{seq2seq_transformer.23} parent=1 // pred_region
      _
    $region5: #{seq2seq_transformer.23} parent=1 // pred_fallthru
      _
    // Predicated region
    $region6: #{seq2seq_transformer.23} parent=1 // pred_check
      _
    $region7: #{seq2seq_transformer.23} parent=1 // pred_check_branch
      %14 = sbr.rel (0) target = $region9
    $region8: #{seq2seq_transformer.23} parent=1 // pred_region
      _
    $region9: #{seq2seq_transformer.23} parent=1 // pred_fallthru
      _
    // Predicated region
    $region10: #{seq2seq_transformer.23} parent=1 // pred_check
      _
    $region11: #{seq2seq_transformer.23} parent=1 // pred_check_branch
      %16 = sbr.rel (0) target = $region13
    $region12: #{seq2seq_transformer.23} parent=1 // pred_region
      _
    $region13: #{seq2seq_transformer.23} parent=1 // pred_fallthru
      _
    // Predicated region
    $region14: #{seq2seq_transformer.23} parent=1 // pred_check
      _
    $region15: #{seq2seq_transformer.23} parent=1 // pred_check_branch
      %18 = sbr.rel (0) target = $region17
    $region16: #{seq2seq_transformer.23} parent=1 // pred_region
      _
    $region17: #{seq2seq_transformer.23} parent=1 // pred_fallthru
      _
    // Predicated region
    $region18: #{seq2seq_transformer.23} parent=1 // pred_check
      _
    $region19: #{seq2seq_transformer.23} parent=1 // pred_check_branch
      %20 = sbr.rel (0) target = $region21
    $region20: #{seq2seq_transformer.23} parent=1 // pred_region
      _
    $region21: #{seq2seq_transformer.23} parent=1 // pred_fallthru
      _
    %p22 = scmp.eq.s32.totalorder 0, 0
    // Predicated region
    $region22: #{seq2seq_transformer.23} parent=1 // pred_check
      %p23 = pneg %p22
    $region23: #{seq2seq_transformer.23} parent=1 // pred_check_branch
      %25 = sbr.rel (%p23) target = $region25
    $region24: #{seq2seq_transformer.23} parent=1 // pred_region
      %v26 = vld [vmem:[%s0] sm:$0xf]
      %v27 = vld [vmem:[%s0 + $0x4] sm:$0xf]
      %v28 = vunpack.c.l.bf16 %v26
      %v29 = vunpack.c.l.bf16 %v27
      %vm30 = vcmask 261120
      %v31 = vsel %vm30, %v28, 0.0
      %32 = vadd.xlane.f32.xlu0 %v31
      %v33 = vpop.xlane.xlu0 %32
      %v34 = vsel %vm30, %v29, 0.0
      %35 = vadd.xlane.f32.xlu0 %v34
      %v36 = vpop.xlane.xlu0 %35
      %v37 = vrcp.pop 32.0
      %v38 = vmul.f32 %v33, %v37
      %v39 = vmul.f32 %v36, %v37
      %v40 = vsub.f32 %v28, %v38
      %v41 = vsub.f32 %v29, %v39
      %v42 = vmul.f32 %v40, %v40
      %v43 = vmul.f32 %v41, %v41
      %v44 = vsel %vm30, %v42, 0.0
      %45 = vadd.xlane.f32.xlu0 %v44
      %v46 = vpop.xlane.xlu0 %45
      %v47 = vsel %vm30, %v43, 0.0
      %48 = vadd.xlane.f32.xlu0 %v47
      %v49 = vpop.xlane.xlu0 %48
      %v50 = vmul.f32 %v46, %v37
      %v51 = vmul.f32 %v49, %v37
      %v52 = vadd.f32 %v50, 1e-05
      %v53 = vadd.f32 %v51, 1e-05
      %v54 = vrsqrt.pop %v52
      %v55 = vrsqrt.pop %v53
      %v56 = vmul.f32 %v40, %v54
      %v57 = vmul.f32 %v41, %v55
      %v58 = vld [vmem:[%s1] sm:$0x1]
      %v60 = vlaneseq
      %v61 = vshrl.u32 %v60, 7
      %v62 = vsub.s32 0, %v61
      %v63 = vrot.slane %v58, %v62
      %v65 = vmul.f32 %v56, %v63
      %v66 = vmul.f32 %v57, %v63
      %v67 = vld [vmem:[%s2] sm:$0x1]
      %v69 = vlaneseq
      %v70 = vshrl.u32 %v69, 7
      %v71 = vsub.s32 0, %v70
      %v72 = vrot.slane %v67, %v71
      %v74 = vadd.f32 %v65, %v72
      %v75 = vadd.f32 %v66, %v72
      %v76 = vpack.c.bf16 %v75, %v74
      %77 = vst.msk [vmem:[#allocation2] sm:$0xff] %vm30, %v76
    $region25: #{seq2seq_transformer.23} parent=1 // pred_fallthru
      _
    %v78 = vld [vmem:[#allocation2] sm:$0xff]
    %v79 = vld [vmem:[%s4] sm:$0xf]
    %v80 = vld [vmem:[%s4 + $0x4] sm:$0xf]
    %v81 = vld [vmem:[%s4 + $0x8] sm:$0xf]
    %v82 = vld [vmem:[%s4 + $0xc] sm:$0xf]
    %v83 = vld [vmem:[%s4 + $0x10] sm:$0xf]
    %v84 = vld [vmem:[%s4 + $0x14] sm:$0xf]
    %v85 = vld [vmem:[%s4 + $0x18] sm:$0xf]
    %v86 = vld [vmem:[%s4 + $0x1c] sm:$0xf]
    %v87 = vld [vmem:[%s4 + $0x20] sm:$0xf]
    %v88 = vld [vmem:[%s4 + $0x24] sm:$0xf]
    %v89 = vld [vmem:[%s4 + $0x28] sm:$0xf]
    %v90 = vld [vmem:[%s4 + $0x2c] sm:$0xf]
    %v91 = vld [vmem:[%s4 + $0x30] sm:$0xf]
    %v92 = vld [vmem:[%s4 + $0x34] sm:$0xf]
    %v93 = vld [vmem:[%s4 + $0x38] sm:$0xf]
    %v94 = vld [vmem:[%s4 + $0x3c] sm:$0xf]
    %v111 = vunpack.c.l.b16 %v79
    %v112 = vunpack.c.l.b16 %v80
    %v113 = vunpack.c.l.b16 %v81
    %v114 = vunpack.c.l.b16 %v82
    %v115 = vunpack.c.l.b16 %v83
    %v116 = vunpack.c.l.b16 %v84
    %v117 = vunpack.c.l.b16 %v85
    %v118 = vunpack.c.l.b16 %v86
    %v119 = vunpack.c.l.b16 %v87
    %v120 = vunpack.c.l.b16 %v88
    %v121 = vunpack.c.l.b16 %v89
    %v122 = vunpack.c.l.b16 %v90
    %v123 = vunpack.c.l.b16 %v91
    %v124 = vunpack.c.l.b16 %v92
    %v125 = vunpack.c.l.b16 %v93
    %v126 = vunpack.c.l.b16 %v94
    %v127 = vpack.c.b16 %v112, %v111
    %v128 = vpack.c.b16 %v114, %v113
    %v129 = vpack.c.b16 %v116, %v115
    %v130 = vpack.c.b16 %v118, %v117
    %v131 = vpack.c.b16 %v120, %v119
    %v132 = vpack.c.b16 %v122, %v121
    %v133 = vpack.c.b16 %v124, %v123
    %v134 = vpack.c.b16 %v126, %v125
    %vm135 = vcmask 261120
    %v137 = vsel %vm135, %v78, 0
    %v140 = vsel %vm135, %v127, 0
    %v143 = vsel %vm135, %v128, 0
    %v146 = vsel %vm135, %v129, 0
    %v149 = vsel %vm135, %v130, 0
    %v152 = vsel %vm135, %v131, 0
    %v155 = vsel %vm135, %v132, 0
    %v158 = vsel %vm135, %v133, 0
    %v161 = vsel %vm135, %v134, 0
    %163 = vmatprep.subr.bf16.mxu0 0
    %164 = vmatpush1.bf16.xpose.msra.mxu0 %v140
    %165 = vmatprep.subr.bf16.mxu0 0
    %166 = vmatpush1.bf16.xpose.msra.mxu0 %v143
    %167 = vmatprep.subr.bf16.mxu0 0
    %168 = vmatpush1.bf16.xpose.msra.mxu0 %v146
    %169 = vmatprep.subr.bf16.mxu0 0
    %170 = vmatpush1.bf16.xpose.msra.mxu0 %v149
    %171 = vmatprep.subr.bf16.mxu0 0
    %172 = vmatpush1.bf16.xpose.msra.mxu0 %v152
    %173 = vmatprep.subr.bf16.mxu0 0
    %174 = vmatpush1.bf16.xpose.msra.mxu0 %v155
    %175 = vmatprep.subr.bf16.mxu0 0
    %176 = vmatpush1.bf16.xpose.msra.mxu0 %v158
    %177 = vmatprep.subr.bf16.mxu0 0
    %178 = vmatpush1.bf16.xpose.msra.mxu0 %v161
    %179 = vmatprep.subr.bf16.mxu0 0
    %180 = vmatpush1.bf16.xpose.msra.mxu0 0
    %181 = vmatprep.subr.bf16.mxu0 0
    %182 = vmatpush1.bf16.xpose.msra.mxu0 0
    %183 = vmatprep.subr.bf16.mxu0 0
    %184 = vmatpush1.bf16.xpose.msra.mxu0 0
    %185 = vmatprep.subr.bf16.mxu0 0
    %186 = vmatpush1.bf16.xpose.msra.mxu0 0
    %187 = vmatprep.subr.bf16.mxu0 0
    %188 = vmatpush1.bf16.xpose.msra.mxu0 0
    %189 = vmatprep.subr.bf16.mxu0 0
    %190 = vmatpush1.bf16.xpose.msra.mxu0 0
    %191 = vmatprep.subr.bf16.mxu0 0
    %192 = vmatpush1.bf16.xpose.msra.mxu0 0
    %193 = vmatprep.subr.bf16.mxu0 0
    %194 = vmatpush1.bf16.xpose.msra.mxu0 0
    %195 = vmatprep.mubr.bf16.mxu0 0
    %196 = vmatmul.mubr.bf16.gmra.mrb[0].mxu0 %v137
    %v197 = vpop.f32.mrb[0].mxu0
    %v198 = vadd.f32 0.0, %v197
    %v199 = vpop.f32.mrb[0].mxu0
    %v200 = vpop.f32.mrb[0].mxu0
    %v201 = vadd.f32 0.0, %v200
    %v202 = vpop.f32.mrb[0].mxu0
    %203 = vdwg.mxu0
    %v204 = vmul.f32 %v198, 0.17677669
    %v205 = vmul.f32 %v201, 0.17677669
    %v206 = vunpack.c.l.bf16 %v78
    %v207 = vunpack.c.h.bf16 %v78
    %v208 = vld [vmem:[%s3] sm:$0x1]
    %v210 = vlaneseq
    %v211 = vshrl.u32 %v210, 7
    %v212 = vsub.s32 0, %v211
    %v213 = vrot.slane %v208, %v212
    %v215 = vmul.f32 %v206, %v213
    %v216 = vmul.f32 %v207, %v213
    %v217 = vsel %vm135, %v215, 0.0
    %218 = vadd.xlane.f32.xlu0 %v217
    %v219 = vpop.xlane.xlu0 %218
    %v220 = vsel %vm135, %v216, 0.0
    %221 = vadd.xlane.f32.xlu0 %v220
    %v222 = vpop.xlane.xlu0 %221
    %v223 = vmul.f32 %v219, 0.17677669
    %v224 = vmul.f32 %v222, 0.17677669
    %v225 = vsub.f32 %v204, %v223
    %v226 = vsub.f32 %v205, %v224
    %227 = vst [vmem:[#allocation3] sm:$0xff] %v225
    %228 = vst [vmem:[#allocation3 + $0x8] sm:$0xff] %v226
    // Predicated region
    $region26: #{seq2seq_transformer.23} parent=1 // pred_check
      _
    $region27: #{seq2seq_transformer.23} parent=1 // pred_check_branch
      %230 = sbr.rel (0) target = $region29
    $region28: #{seq2seq_transformer.23} parent=1 // pred_region
      %s232 = ssub.s32 256, 256
      %233 = vsyncadd [#allocation4], %s232
      %s234 = sshll.u32 [#allocation3], 4
      %s235 = int_to_ptr.vmem [resolvable:$true] %s234
      %240 = dma.vmem_to_hbm [thread:$0]  %s235, 256, %s5, [#allocation4], 128, 128, 8
    $region29: #{seq2seq_transformer.23} parent=1 // pred_fallthru
      _
    // Predicated region
    $region30: #{seq2seq_transformer.23} parent=1 // pred_check
      _
    $region31: #{seq2seq_transformer.23} parent=1 // pred_check_branch
      %242 = sbr.rel (0) target = $region33
    $region32: #{seq2seq_transformer.23} parent=1 // pred_region
      %243 = dma.done [#allocation4], 256
    $region33: #{seq2seq_transformer.23} parent=1 // pred_fallthru
      _
    %244 = vsyncpa [#allocation4], 1

// kernel: seq2seq_transformer.18
$region0: #{seq2seq_transformer.18}
  #allocation0 [shape = 'u32[]', space=smem, size = 0x4, offset = 0x4, fixed_abs, tag = 'smem constant byte address 0x4 - core index']
  #allocation1 [shape = 'u32[144,128]{1,0:T(1,128)}', space=vmem, size = 0x12000, scoped, tag = 'internal scratch']
  %s0 = inlined_call_operand.vmem [shape: bf16[2,8,32], index: 0, kind: input, shape index: {}]
  %s1 = inlined_call_operand.vmem [shape: bf16[2,8,32], index: 1, kind: input, shape index: {}]
  %s2 = inlined_call_operand.vmem [shape: bf16[32,32], index: 2, kind: input, shape index: {}]
  %s3 = inlined_call_operand.vmem [shape: f32[1,32], index: 3, kind: input, shape index: {}]
  %s4 = inlined_call_operand.vmem [shape: bf16[32,64], index: 4, kind: input, shape index: {}]
  %s5 = inlined_call_operand.vmem [shape: f32[1,64], index: 5, kind: input, shape index: {}]
  %s6 = inlined_call_operand.vmem [shape: bf16[32,32], index: 6, kind: input, shape index: {}]
  %s7 = inlined_call_operand.vmem [shape: f32[1,32], index: 7, kind: input, shape index: {}]
  %s8 = inlined_call_operand.vmem [shape: f32[1,32], index: 8, kind: input, shape index: {}]
  %s9 = inlined_call_operand.vmem [shape: f32[1,32], index: 9, kind: input, shape index: {}]
  %s10 = inlined_call_operand.vmem [shape: bf16[2,8,32], index: 10, kind: output, shape index: {}]
  %s11 = sld [smem:[#allocation0]]
  $region73: #{seq2seq_transformer.18} parent=0
    _
  %s13 = ssub.s32 1, %s11
  %s14 = scalar_select 0, %s13, %s11
  loop: start=0, step=1, limit=4
  $region2: #{seq2seq_transformer.18} parent=0 // loop_pre_header
    _
  $region3: #{seq2seq_transformer.18} parent=0 // loop_header
    %s16 = sphi 0, %s20
    %p17 = scmp.ge.s32.totalorder %s16, 4
    %s26 = sphi 0, %s28
    %s29 = sphi 0, %s26
    %s30 = sphi 0, %s29
    %s46 = sphi 0, %s30
    %s52 = sphi 0, %s54
    %s55 = sphi 0, %s52
    %s56 = sphi 0, %s55
    %s72 = sphi 0, %s56
    %s76 = sphi 0, %s76
    %s78 = sphi 0, %s76
    %s79 = sphi 0, %s78
    %s93 = sphi 0, %s79
    %s97 = sphi 0, %s97
    %s99 = sphi 0, %s97
    %s100 = sphi 0, %s99
    %s114 = sphi 0, %s100
    %s118 = sphi 0, %s118
    %s120 = sphi 0, %s118
    %s121 = sphi 0, %s120
    %s135 = sphi 0, %s121
    %s139 = sphi 0, %s139
    %s141 = sphi 0, %s139
    %s142 = sphi 0, %s141
    %s156 = sphi 0, %s142
    %s160 = sphi 0, %s160
    %s162 = sphi 0, %s160
    %s163 = sphi 0, %s162
    %s177 = sphi 0, %s163
    %s181 = sphi 0, %s181
    %s183 = sphi 0, %s181
    %s184 = sphi 0, %s183
    %s198 = sphi 0, %s184
    %s202 = sphi 0, %s202
    %s204 = sphi 0, %s202
    %s205 = sphi 0, %s204
    %s219 = sphi 0, %s205
    %s223 = sphi 0, %s223
    %s225 = sphi 0, %s223
    %s226 = sphi 0, %s225
    %s240 = sphi 0, %s226
    %s246 = sphi 0, %s248
    %s249 = sphi 0, %s246
    %s250 = sphi 0, %s249
    %s266 = sphi 0, %s250
  $region4: #{seq2seq_transformer.18} parent=0 // loop_header_branch
    %19 = sbr.rel (%p17) target = $region8
  $region5: #{seq2seq_transformer.18} parent=0 // loop_body
    %s21 = ssub.s32 %s16, 1
    %s22 = ssub.s32 %s16, 2
    %s23 = sadd.s32 %s16, 1
    %s24 = ssub.s32 %s16, %s23
    %p25 = scmp.eq.s32.totalorder %s24, 0
    %s27 = sadd.s32 %s26, 1
    %s28 = scalar_select %p25, %s26, %s27
    %p31 = pneg %p25
    %p32 = scmp.eq.s32.totalorder %s16, 1
    %p33 = por %p31, %p32
    %p34 = scmp.ne.s32.totalorder %s26, %s29
    %p35 = scmp.eq.s32.totalorder %s16, 0
    %p36 = por %p34, %p35
    %p37 = scmp.ne.s32.totalorder %s26, %s29
    %p38 = scmp.eq.s32.totalorder %s21, 1
    %p39 = por %p37, %p38
    %p40 = scmp.ne.s32.totalorder %s29, %s30
    %p41 = scmp.eq.s32.totalorder %s21, 0
    %p42 = por %p40, %p41
    %p43 = scmp.ne.s32.totalorder %s29, %s30
    %p44 = scmp.eq.s32.totalorder %s22, 1
    %p45 = por %p43, %p44
    %p47 = scmp.ne.s32.totalorder %s30, %s46
    %p48 = scmp.eq.s32.totalorder %s22, 0
    %p49 = por %p47, %p48
    %s50 = ssub.s32 %s16, %s23
    %p51 = scmp.eq.s32.totalorder %s50, 0
    %s53 = sadd.s32 %s52, 1
    %s54 = scalar_select %p51, %s52, %s53
    %p57 = pneg %p51
    %p58 = scmp.eq.s32.totalorder %s16, 1
    %p59 = por %p57, %p58
    %p60 = scmp.ne.s32.totalorder %s52, %s55
    %p61 = scmp.eq.s32.totalorder %s16, 0
    %p62 = por %p60, %p61
    %p63 = scmp.ne.s32.totalorder %s52, %s55
    %p64 = scmp.eq.s32.totalorder %s21, 1
    %p65 = por %p63, %p64
    %p66 = scmp.ne.s32.totalorder %s55, %s56
    %p67 = scmp.eq.s32.totalorder %s21, 0
    %p68 = por %p66, %p67
    %p69 = scmp.ne.s32.totalorder %s55, %s56
    %p70 = scmp.eq.s32.totalorder %s22, 1
    %p71 = por %p69, %p70
    %p73 = scmp.ne.s32.totalorder %s56, %s72
    %p74 = scmp.eq.s32.totalorder %s22, 0
    %p75 = por %p73, %p74
    %s77 = sadd.s32 %s76, 1
    %p80 = scmp.eq.s32.totalorder %s16, 1
    %p81 = scmp.ne.s32.totalorder %s76, %s78
    %p82 = scmp.eq.s32.totalorder %s16, 0
    %p83 = por %p81, %p82
    %p84 = scmp.ne.s32.totalorder %s76, %s78
    %p85 = scmp.eq.s32.totalorder %s21, 1
    %p86 = por %p84, %p85
    %p87 = scmp.ne.s32.totalorder %s78, %s79
    %p88 = scmp.eq.s32.totalorder %s21, 0
    %p89 = por %p87, %p88
    %p90 = scmp.ne.s32.totalorder %s78, %s79
    %p91 = scmp.eq.s32.totalorder %s22, 1
    %p92 = por %p90, %p91
    %p94 = scmp.ne.s32.totalorder %s79, %s93
    %p95 = scmp.eq.s32.totalorder %s22, 0
    %p96 = por %p94, %p95
    %s98 = sadd.s32 %s97, 1
    %p101 = scmp.eq.s32.totalorder %s16, 1
    %p102 = scmp.ne.s32.totalorder %s97, %s99
    %p103 = scmp.eq.s32.totalorder %s16, 0
    %p104 = por %p102, %p103
    %p105 = scmp.ne.s32.totalorder %s97, %s99
    %p106 = scmp.eq.s32.totalorder %s21, 1
    %p107 = por %p105, %p106
    %p108 = scmp.ne.s32.totalorder %s99, %s100
    %p109 = scmp.eq.s32.totalorder %s21, 0
    %p110 = por %p108, %p109
    %p111 = scmp.ne.s32.totalorder %s99, %s100
    %p112 = scmp.eq.s32.totalorder %s22, 1
    %p113 = por %p111, %p112
    %p115 = scmp.ne.s32.totalorder %s100, %s114
    %p116 = scmp.eq.s32.totalorder %s22, 0
    %p117 = por %p115, %p116
    %s119 = sadd.s32 %s118, 1
    %p122 = scmp.eq.s32.totalorder %s16, 1
    %p123 = scmp.ne.s32.totalorder %s118, %s120
    %p124 = scmp.eq.s32.totalorder %s16, 0
    %p125 = por %p123, %p124
    %p126 = scmp.ne.s32.totalorder %s118, %s120
    %p127 = scmp.eq.s32.totalorder %s21, 1
    %p128 = por %p126, %p127
    %p129 = scmp.ne.s32.totalorder %s120, %s121
    %p130 = scmp.eq.s32.totalorder %s21, 0
    %p131 = por %p129, %p130
    %p132 = scmp.ne.s32.totalorder %s120, %s121
    %p133 = scmp.eq.s32.totalorder %s22, 1
    %p134 = por %p132, %p133
    %p136 = scmp.ne.s32.totalorder %s121, %s135
    %p137 = scmp.eq.s32.totalorder %s22, 0
    %p138 = por %p136, %p137
    %s140 = sadd.s32 %s139, 1
    %p143 = scmp.eq.s32.totalorder %s16, 1
    %p144 = scmp.ne.s32.totalorder %s139, %s141
    %p145 = scmp.eq.s32.totalorder %s16, 0
    %p146 = por %p144, %p145
    %p147 = scmp.ne.s32.totalorder %s139, %s141
    %p148 = scmp.eq.s32.totalorder %s21, 1
    %p149 = por %p147, %p148
    %p150 = scmp.ne.s32.totalorder %s141, %s142
    %p151 = scmp.eq.s32.totalorder %s21, 0
    %p152 = por %p150, %p151
    %p153 = scmp.ne.s32.totalorder %s141, %s142
    %p154 = scmp.eq.s32.totalorder %s22, 1
    %p155 = por %p153, %p154
    %p157 = scmp.ne.s32.totalorder %s142, %s156
    %p158 = scmp.eq.s32.totalorder %s22, 0
    %p159 = por %p157, %p158
    %s161 = sadd.s32 %s160, 1
    %p164 = scmp.eq.s32.totalorder %s16, 1
    %p165 = scmp.ne.s32.totalorder %s160, %s162
    %p166 = scmp.eq.s32.totalorder %s16, 0
    %p167 = por %p165, %p166
    %p168 = scmp.ne.s32.totalorder %s160, %s162
    %p169 = scmp.eq.s32.totalorder %s21, 1
    %p170 = por %p168, %p169
    %p171 = scmp.ne.s32.totalorder %s162, %s163
    %p172 = scmp.eq.s32.totalorder %s21, 0
    %p173 = por %p171, %p172
    %p174 = scmp.ne.s32.totalorder %s162, %s163
    %p175 = scmp.eq.s32.totalorder %s22, 1
    %p176 = por %p174, %p175
    %p178 = scmp.ne.s32.totalorder %s163, %s177
    %p179 = scmp.eq.s32.totalorder %s22, 0
    %p180 = por %p178, %p179
    %s182 = sadd.s32 %s181, 1
    %p185 = scmp.eq.s32.totalorder %s16, 1
    %p186 = scmp.ne.s32.totalorder %s181, %s183
    %p187 = scmp.eq.s32.totalorder %s16, 0
    %p188 = por %p186, %p187
    %p189 = scmp.ne.s32.totalorder %s181, %s183
    %p190 = scmp.eq.s32.totalorder %s21, 1
    %p191 = por %p189, %p190
    %p192 = scmp.ne.s32.totalorder %s183, %s184
    %p193 = scmp.eq.s32.totalorder %s21, 0
    %p194 = por %p192, %p193
    %p195 = scmp.ne.s32.totalorder %s183, %s184
    %p196 = scmp.eq.s32.totalorder %s22, 1
    %p197 = por %p195, %p196
    %p199 = scmp.ne.s32.totalorder %s184, %s198
    %p200 = scmp.eq.s32.totalorder %s22, 0
    %p201 = por %p199, %p200
    %s203 = sadd.s32 %s202, 1
    %p206 = scmp.eq.s32.totalorder %s16, 1
    %p207 = scmp.ne.s32.totalorder %s202, %s204
    %p208 = scmp.eq.s32.totalorder %s16, 0
    %p209 = por %p207, %p208
    %p210 = scmp.ne.s32.totalorder %s202, %s204
    %p211 = scmp.eq.s32.totalorder %s21, 1
    %p212 = por %p210, %p211
    %p213 = scmp.ne.s32.totalorder %s204, %s205
    %p214 = scmp.eq.s32.totalorder %s21, 0
    %p215 = por %p213, %p214
    %p216 = scmp.ne.s32.totalorder %s204, %s205
    %p217 = scmp.eq.s32.totalorder %s22, 1
    %p218 = por %p216, %p217
    %p220 = scmp.ne.s32.totalorder %s205, %s219
    %p221 = scmp.eq.s32.totalorder %s22, 0
    %p222 = por %p220, %p221
    %s224 = sadd.s32 %s223, 1
    %p227 = scmp.eq.s32.totalorder %s16, 1
    %p228 = scmp.ne.s32.totalorder %s223, %s225
    %p229 = scmp.eq.s32.totalorder %s16, 0
    %p230 = por %p228, %p229
    %p231 = scmp.ne.s32.totalorder %s223, %s225
    %p232 = scmp.eq.s32.totalorder %s21, 1
    %p233 = por %p231, %p232
    %p234 = scmp.ne.s32.totalorder %s225, %s226
    %p235 = scmp.eq.s32.totalorder %s21, 0
    %p236 = por %p234, %p235
    %p237 = scmp.ne.s32.totalorder %s225, %s226
    %p238 = scmp.eq.s32.totalorder %s22, 1
    %p239 = por %p237, %p238
    %p241 = scmp.ne.s32.totalorder %s226, %s240
    %p242 = scmp.eq.s32.totalorder %s22, 0
    %p243 = por %p241, %p242
    %s244 = ssub.s32 %s16, %s23
    %p245 = scmp.eq.s32.totalorder %s244, 0
    %s247 = sadd.s32 %s246, 1
    %s248 = scalar_select %p245, %s246, %s247
    %p251 = pneg %p245
    %p252 = scmp.eq.s32.totalorder %s16, 1
    %p253 = por %p251, %p252
    %p254 = scmp.ne.s32.totalorder %s246, %s249
    %p255 = scmp.eq.s32.totalorder %s16, 0
    %p256 = por %p254, %p255
    %p257 = scmp.ne.s32.totalorder %s246, %s249
    %p258 = scmp.eq.s32.totalorder %s21, 1
    %p259 = por %p257, %p258
    %p260 = scmp.ne.s32.totalorder %s249, %s250
    %p261 = scmp.eq.s32.totalorder %s21, 0
    %p262 = por %p260, %p261
    %p263 = scmp.ne.s32.totalorder %s249, %s250
    %p264 = scmp.eq.s32.totalorder %s22, 1
    %p265 = por %p263, %p264
    %p267 = scmp.ne.s32.totalorder %s250, %s266
    %p268 = scmp.eq.s32.totalorder %s22, 0
    %p269 = por %p267, %p268
    %p270 = scmp.le.s32.totalorder 1, %s16
    %p271 = scmp.lt.s32.totalorder %s16, 3
    %p272 = pnand %p270, %p271
    %p273 = pneg %p272
    // Predicated region
    $region9: #{seq2seq_transformer.18} parent=5 // pred_check
      _
    $region10: #{seq2seq_transformer.18} parent=5 // pred_check_branch
      %275 = sbr.rel (%p272) target = $region12
    $region11: #{seq2seq_transformer.18} parent=5 // pred_region
      %s276 = ssub.s32 %s16, 1
      // Predicated region
      $region13: #{seq2seq_transformer.18} parent=11 // pred_check
        %p277 = pneg %p89
      $region14: #{seq2seq_transformer.18} parent=11 // pred_check_branch
        %279 = sbr.rel (%p277) target = $region16
      $region15: #{seq2seq_transformer.18} parent=11 // pred_region
        _
      $region16: #{seq2seq_transformer.18} parent=11 // pred_fallthru
        _
      // Predicated region
      $region17: #{seq2seq_transformer.18} parent=11 // pred_check
        %p280 = pneg %p110
      $region18: #{seq2seq_transformer.18} parent=11 // pred_check_branch
        %282 = sbr.rel (%p280) target = $region20
      $region19: #{seq2seq_transformer.18} parent=11 // pred_region
        _
      $region20: #{seq2seq_transformer.18} parent=11 // pred_fallthru
        _
      // Predicated region
      $region21: #{seq2seq_transformer.18} parent=11 // pred_check
        %p283 = pneg %p131
      $region22: #{seq2seq_transformer.18} parent=11 // pred_check_branch
        %285 = sbr.rel (%p283) target = $region24
      $region23: #{seq2seq_transformer.18} parent=11 // pred_region
        _
      $region24: #{seq2seq_transformer.18} parent=11 // pred_fallthru
        _
      // Predicated region
      $region25: #{seq2seq_transformer.18} parent=11 // pred_check
        %p286 = pneg %p152
      $region26: #{seq2seq_transformer.18} parent=11 // pred_check_branch
        %288 = sbr.rel (%p286) target = $region28
      $region27: #{seq2seq_transformer.18} parent=11 // pred_region
        _
      $region28: #{seq2seq_transformer.18} parent=11 // pred_fallthru
        _
      // Predicated region
      $region29: #{seq2seq_transformer.18} parent=11 // pred_check
        %p289 = pneg %p173
      $region30: #{seq2seq_transformer.18} parent=11 // pred_check_branch
        %291 = sbr.rel (%p289) target = $region32
      $region31: #{seq2seq_transformer.18} parent=11 // pred_region
        _
      $region32: #{seq2seq_transformer.18} parent=11 // pred_fallthru
        _
      // Predicated region
      $region33: #{seq2seq_transformer.18} parent=11 // pred_check
        %p292 = pneg %p194
      $region34: #{seq2seq_transformer.18} parent=11 // pred_check_branch
        %294 = sbr.rel (%p292) target = $region36
      $region35: #{seq2seq_transformer.18} parent=11 // pred_region
        _
      $region36: #{seq2seq_transformer.18} parent=11 // pred_fallthru
        _
      // Predicated region
      $region37: #{seq2seq_transformer.18} parent=11 // pred_check
        %p295 = pneg %p215
      $region38: #{seq2seq_transformer.18} parent=11 // pred_check_branch
        %297 = sbr.rel (%p295) target = $region40
      $region39: #{seq2seq_transformer.18} parent=11 // pred_region
        _
      $region40: #{seq2seq_transformer.18} parent=11 // pred_fallthru
        _
      // Predicated region
      $region41: #{seq2seq_transformer.18} parent=11 // pred_check
        %p298 = pneg %p236
      $region42: #{seq2seq_transformer.18} parent=11 // pred_check_branch
        %300 = sbr.rel (%p298) target = $region44
      $region43: #{seq2seq_transformer.18} parent=11 // pred_region
        _
      $region44: #{seq2seq_transformer.18} parent=11 // pred_fallthru
        _
    $region12: #{seq2seq_transformer.18} parent=5 // pred_fallthru
      _
    %p301 = scmp.lt.s32.totalorder %s16, 2
    // Predicated region
    $region45: #{seq2seq_transformer.18} parent=5 // pred_check
      %p302 = pneg %p301
    $region46: #{seq2seq_transformer.18} parent=5 // pred_check_branch
      %304 = sbr.rel (%p302) target = $region48
    $region47: #{seq2seq_transformer.18} parent=5 // pred_region
      // Predicated region
      $region49: #{seq2seq_transformer.18} parent=47 // pred_check
        %p305 = pneg %p36
      $region50: #{seq2seq_transformer.18} parent=47 // pred_check_branch
        %307 = sbr.rel (%p305) target = $region52
      $region51: #{seq2seq_transformer.18} parent=47 // pred_region
        %p308 = scmp.lt.s32.totalorder %s16, 1
        %s309 = scalar_select %p308, %s16, 1
        %s310 = smul.addr %s309, 4
        %s311 = scalar_lea.vmem %s0, %s310
      $region52: #{seq2seq_transformer.18} parent=47 // pred_fallthru
        _
      // Predicated region
      $region53: #{seq2seq_transformer.18} parent=47 // pred_check
        %p312 = pneg %p62
      $region54: #{seq2seq_transformer.18} parent=47 // pred_check_branch
        %314 = sbr.rel (%p312) target = $region56
      $region55: #{seq2seq_transformer.18} parent=47 // pred_region
        %p315 = scmp.lt.s32.totalorder %s16, 1
        %s316 = scalar_select %p315, %s16, 1
        %s317 = smul.addr %s316, 4
        %s318 = scalar_lea.vmem %s1, %s317
      $region56: #{seq2seq_transformer.18} parent=47 // pred_fallthru
        _
    $region48: #{seq2seq_transformer.18} parent=5 // pred_fallthru
      _
    %p319 = scmp.le.s32.totalorder 1, %s16
    %p320 = scmp.lt.s32.totalorder %s16, 3
    %p321 = pnand %p319, %p320
    %p322 = pneg %p321
    // Predicated region
    $region57: #{seq2seq_transformer.18} parent=5 // pred_check
      _
    $region58: #{seq2seq_transformer.18} parent=5 // pred_check_branch
      %324 = sbr.rel (%p321) target = $region60
    $region59: #{seq2seq_transformer.18} parent=5 // pred_region
      %s325 = ssub.s32 %s16, 1
      %p326 = scmp.lt.s32.totalorder %s21, 1
      %s327 = scalar_select %p326, %s21, 1
      %s328 = smul.addr %s327, 4
      %s329 = scalar_lea.vmem %s0, %s328
      %p330 = pneg %p42
      %p331 = pneg %p39
      %p332 = scmp.lt.s32.totalorder %s21, 1
      %s333 = scalar_select %p332, %s21, 1
      %s334 = smul.addr %s333, 4
      %s335 = scalar_lea.vmem %s1, %s334
      %p336 = pneg %p68
      %p337 = pneg %p65
      %p338 = pneg %p89
      %p339 = pneg %p86
      %p340 = pneg %p110
      %p341 = pneg %p107
      %p342 = pneg %p131
      %p343 = pneg %p128
      %p344 = pneg %p152
      %p345 = pneg %p149
      %p346 = pneg %p173
      %p347 = pneg %p170
      %p348 = pneg %p194
      %p349 = pneg %p191
      %p350 = pneg %p215
      %p351 = pneg %p212
      %p352 = pneg %p236
      %p353 = pneg %p233
      %p354 = pneg %p262
      %p355 = pneg %p259
      %p356 = scmp.lt.s32.totalorder %s21, 1
      %s357 = scalar_select %p356, %s21, 1
      %s358 = smul.addr %s357, 4
      %s359 = scalar_lea.vmem %s10, %s358
      %p360 = scmp.lt.s32.totalorder %s21, 1
      %s361 = scalar_select %p360, %s21, 1
      %s362 = smul.addr %s361, 4
      %s363 = scalar_lea.vmem %s0, %s362
      %p364 = scmp.lt.s32.totalorder %s21, 1
      %s365 = scalar_select %p364, %s21, 1
      %s366 = smul.addr %s365, 4
      %s367 = scalar_lea.vmem %s1, %s366
      %p368 = scmp.lt.s32.totalorder %s21, 1
      %s369 = scalar_select %p368, %s21, 1
      %s370 = smul.addr %s369, 4
      %s371 = scalar_lea.vmem %s10, %s370
      %v373 = vld [vmem:[%s363] sm:$0xf]
      %v374 = vld [vmem:[%s367] sm:$0xf]
      %v375 = vld [vmem:[%s2] sm:$0xf]
      %v376 = vld [vmem:[%s2 + $0x4] sm:$0xf]
      %v377 = vld [vmem:[%s2 + $0x8] sm:$0xf]
      %v378 = vld [vmem:[%s2 + $0xc] sm:$0xf]
      %v379 = vld [vmem:[%s3] sm:$0x1]
      %v381 = vlaneseq
      %v382 = vshrl.u32 %v381, 7
      %v383 = vsub.s32 0, %v382
      %v384 = vrot.slane %v379, %v383
      %v390 = vunpack.c.l.b16 %v375
      %v391 = vunpack.c.l.b16 %v376
      %v392 = vunpack.c.l.b16 %v377
      %v393 = vunpack.c.l.b16 %v378
      %v394 = vpack.c.b16 %v391, %v390
      %v395 = vpack.c.b16 %v393, %v392
      %vm398 = vcmask 261120
      %v400 = vsel %vm398, %v373, 0
      %402 = vmatprep.subr.bf16.mxu0 0
      %403 = vmatpush1.bf16.msra.mxu0 %v394
      %404 = vmatprep.subr.bf16.mxu0 0
      %405 = vmatpush1.bf16.msra.mxu0 %v395
      %406 = vmatprep.subr.bf16.mxu0 0
      %407 = vmatpush1.bf16.msra.mxu0 0
      %408 = vmatprep.subr.bf16.mxu0 0
      %409 = vmatpush1.bf16.msra.mxu0 0
      %410 = vmatprep.subr.bf16.mxu0 0
      %411 = vmatpush1.bf16.msra.mxu0 0
      %412 = vmatprep.subr.bf16.mxu0 0
      %413 = vmatpush1.bf16.msra.mxu0 0
      %414 = vmatprep.subr.bf16.mxu0 0
      %415 = vmatpush1.bf16.msra.mxu0 0
      %416 = vmatprep.subr.bf16.mxu0 0
      %417 = vmatpush1.bf16.msra.mxu0 0
      %418 = vmatprep.subr.bf16.mxu0 0
      %419 = vmatpush1.bf16.msra.mxu0 0
      %420 = vmatprep.subr.bf16.mxu0 0
      %421 = vmatpush1.bf16.msra.mxu0 0
      %422 = vmatprep.subr.bf16.mxu0 0
      %423 = vmatpush1.bf16.msra.mxu0 0
      %424 = vmatprep.subr.bf16.mxu0 0
      %425 = vmatpush1.bf16.msra.mxu0 0
      %426 = vmatprep.subr.bf16.mxu0 0
      %427 = vmatpush1.bf16.msra.mxu0 0
      %428 = vmatprep.subr.bf16.mxu0 0
      %429 = vmatpush1.bf16.msra.mxu0 0
      %430 = vmatprep.subr.bf16.mxu0 0
      %431 = vmatpush1.bf16.msra.mxu0 0
      %432 = vmatprep.subr.bf16.mxu0 0
      %433 = vmatpush1.bf16.msra.mxu0 0
      %434 = vmatprep.mubr.bf16.mxu0 0
      %435 = vmatmul.mubr.bf16.gmra.mrb[0].mxu0 %v400
      %v436 = vpop.f32.mrb[0].mxu0
      %v437 = vadd.f32 %v384, %v436
      %v438 = vpop.f32.mrb[0].mxu0
      %v439 = vpop.f32.mrb[0].mxu0
      %v440 = vpop.f32.mrb[0].mxu0
      %441 = vdwg.mxu0
      %v442 = vld [vmem:[%s4] sm:$0xf]
      %v443 = vld [vmem:[%s4 + $0x4] sm:$0xf]
      %v444 = vld [vmem:[%s4 + $0x8] sm:$0xf]
      %v445 = vld [vmem:[%s4 + $0xc] sm:$0xf]
      %v446 = vld [vmem:[%s5] sm:$0x1]
      %v448 = vlaneseq
      %v449 = vshrl.u32 %v448, 7
      %v450 = vsub.s32 0, %v449
      %v451 = vrot.slane %v446, %v450
      %v457 = vunpack.c.l.b16 %v442
      %v458 = vunpack.c.l.b16 %v443
      %v459 = vunpack.c.l.b16 %v444
      %v460 = vunpack.c.l.b16 %v445
      %v461 = vpack.c.b16 %v458, %v457
      %v462 = vpack.c.b16 %v460, %v459
      %v466 = vsel %vm398, %v374, 0
      %468 = vmatprep.subr.bf16.mxu0 0
      %469 = vmatpush1.bf16.msra.mxu0 %v461
      %470 = vmatprep.subr.bf16.mxu0 0
      %471 = vmatpush1.bf16.msra.mxu0 %v462
      %472 = vmatprep.subr.bf16.mxu0 0
      %473 = vmatpush1.bf16.msra.mxu0 0
      %474 = vmatprep.subr.bf16.mxu0 0
      %475 = vmatpush1.bf16.msra.mxu0 0
      %476 = vmatprep.subr.bf16.mxu0 0
      %477 = vmatpush1.bf16.msra.mxu0 0
      %478 = vmatprep.subr.bf16.mxu0 0
      %479 = vmatpush1.bf16.msra.mxu0 0
      %480 = vmatprep.subr.bf16.mxu0 0
      %481 = vmatpush1.bf16.msra.mxu0 0
      %482 = vmatprep.subr.bf16.mxu0 0
      %483 = vmatpush1.bf16.msra.mxu0 0
      %484 = vmatprep.subr.bf16.mxu0 0
      %485 = vmatpush1.bf16.msra.mxu0 0
      %486 = vmatprep.subr.bf16.mxu0 0
      %487 = vmatpush1.bf16.msra.mxu0 0
      %488 = vmatprep.subr.bf16.mxu0 0
      %489 = vmatpush1.bf16.msra.mxu0 0
      %490 = vmatprep.subr.bf16.mxu0 0
      %491 = vmatpush1.bf16.msra.mxu0 0
      %492 = vmatprep.subr.bf16.mxu0 0
      %493 = vmatpush1.bf16.msra.mxu0 0
      %494 = vmatprep.subr.bf16.mxu0 0
      %495 = vmatpush1.bf16.msra.mxu0 0
      %496 = vmatprep.subr.bf16.mxu0 0
      %497 = vmatpush1.bf16.msra.mxu0 0
      %498 = vmatprep.subr.bf16.mxu0 0
      %499 = vmatpush1.bf16.msra.mxu0 0
      %500 = vmatprep.mubr.bf16.mxu0 0
      %501 = vmatmul.mubr.bf16.gmra.mrb[0].mxu0 %v466
      %v502 = vpop.f32.mrb[0].mxu0
      %v503 = vadd.f32 %v451, %v502
      %v504 = vpop.f32.mrb[0].mxu0
      %v505 = vpop.f32.mrb[0].mxu0
      %v506 = vpop.f32.mrb[0].mxu0
      %507 = vdwg.mxu0
      %v508 = vunpack.c.l.bf16 %v373
      %v509 = vld [vmem:[%s6] sm:$0xf]
      %v510 = vld [vmem:[%s6 + $0x4] sm:$0xf]
      %v511 = vld [vmem:[%s6 + $0x8] sm:$0xf]
      %v512 = vld [vmem:[%s6 + $0xc] sm:$0xf]
      %v513 = vld [vmem:[%s7] sm:$0x1]
      %v514 = vld [vmem:[%s8] sm:$0x1]
      %v515 = vld [vmem:[%s9] sm:$0x1]
      %v516 = vpack.c.bf16 %v437, %v437
      %v517 = vpack.c.bf16 %v503, %v503
      %vm518 = vcmask 64512
      %v520 = vsel %vm518, %v516, 0
      %v523 = vsel %vm518, %v517, 0
      %525 = vmatprep.subr.bf16.mxu0 0
      %526 = vmatpush1.bf16.xpose.msra.mxu0 %v523
      %527 = vmatprep.subr.bf16.mxu0 0
      %528 = vmatpush1.bf16.xpose.msra.mxu0 0
      %529 = vmatprep.subr.bf16.mxu0 0
      %530 = vmatpush1.bf16.xpose.msra.mxu0 0
      %531 = vmatprep.subr.bf16.mxu0 0
      %532 = vmatpush1.bf16.xpose.msra.mxu0 0
      %533 = vmatprep.subr.bf16.mxu0 0
      %534 = vmatpush1.bf16.xpose.msra.mxu0 0
      %535 = vmatprep.subr.bf16.mxu0 0
      %536 = vmatpush1.bf16.xpose.msra.mxu0 0
      %537 = vmatprep.subr.bf16.mxu0 0
      %538 = vmatpush1.bf16.xpose.msra.mxu0 0
      %539 = vmatprep.subr.bf16.mxu0 0
      %540 = vmatpush1.bf16.xpose.msra.mxu0 0
      %541 = vmatprep.subr.bf16.mxu0 0
      %542 = vmatpush1.bf16.xpose.msra.mxu0 0
      %543 = vmatprep.subr.bf16.mxu0 0
      %544 = vmatpush1.bf16.xpose.msra.mxu0 0
      %545 = vmatprep.subr.bf16.mxu0 0
      %546 = vmatpush1.bf16.xpose.msra.mxu0 0
      %547 = vmatprep.subr.bf16.mxu0 0
      %548 = vmatpush1.bf16.xpose.msra.mxu0 0
      %549 = vmatprep.subr.bf16.mxu0 0
      %550 = vmatpush1.bf16.xpose.msra.mxu0 0
      %551 = vmatprep.subr.bf16.mxu0 0
      %552 = vmatpush1.bf16.xpose.msra.mxu0 0
      %553 = vmatprep.subr.bf16.mxu0 0
      %554 = vmatpush1.bf16.xpose.msra.mxu0 0
      %555 = vmatprep.subr.bf16.mxu0 0
      %556 = vmatpush1.bf16.xpose.msra.mxu0 0
      %557 = vmatprep.mubr.bf16.mxu0 0
      %558 = vmatmul.mubr.bf16.gmra.mrb[0].mxu0 %v520
      %v559 = vpop.f32.mrb[0].mxu0
      %v560 = vadd.f32 0.0, %v559
      %v561 = vpop.f32.mrb[0].mxu0
      %v562 = vpop.f32.mrb[0].mxu0
      %v563 = vpop.f32.mrb[0].mxu0
      %564 = vdwg.mxu0
      %v565 = vmul.f32 %v560, 0.35355338
      %v566 = vsel %vm518, %v565, -inf
      %567 = vmax.xlane.f32.xlu0 %v566
      %v568 = vpop.xlane.xlu0 %567
      %v569 = vsub.f32 %v565, %v568
      %v570 = vmul.f32 %v569, 1.442695
      %v571 = vpow.pop %v570
      %v572 = vsel %vm518, %v571, 0.0
      %573 = vadd.xlane.f32.xlu0 %v572
      %v574 = vpop.xlane.xlu0 %573
      %v575 = vrcp.pop %v574
      %v576 = vmul.f32 %v571, %v575
      %v577 = vpack.c.bf16 %v576, %v576
      %579 = vrot.lane.b32.xlu0 %v517, 96
      %v580 = vpop.permute.xlu0 %579
      %v582 = vsel %vm518, %v577, 0
      %vm584 = vcmask 1043456
      %v586 = vsel %vm584, %v580, 0
      %588 = vmatprep.subr.bf16.mxu0 0
      %589 = vmatpush1.bf16.msra.mxu0 %v586
      %590 = vmatprep.subr.bf16.mxu0 0
      %591 = vmatpush1.bf16.msra.mxu0 0
      %592 = vmatprep.subr.bf16.mxu0 0
      %593 = vmatpush1.bf16.msra.mxu0 0
      %594 = vmatprep.subr.bf16.mxu0 0
      %595 = vmatpush1.bf16.msra.mxu0 0
      %596 = vmatprep.subr.bf16.mxu0 0
      %597 = vmatpush1.bf16.msra.mxu0 0
      %598 = vmatprep.subr.bf16.mxu0 0
      %599 = vmatpush1.bf16.msra.mxu0 0
      %600 = vmatprep.subr.bf16.mxu0 0
      %601 = vmatpush1.bf16.msra.mxu0 0
      %602 = vmatprep.subr.bf16.mxu0 0
      %603 = vmatpush1.bf16.msra.mxu0 0
      %604 = vmatprep.subr.bf16.mxu0 0
      %605 = vmatpush1.bf16.msra.mxu0 0
      %606 = vmatprep.subr.bf16.mxu0 0
      %607 = vmatpush1.bf16.msra.mxu0 0
      %608 = vmatprep.subr.bf16.mxu0 0
      %609 = vmatpush1.bf16.msra.mxu0 0
      %610 = vmatprep.subr.bf16.mxu0 0
      %611 = vmatpush1.bf16.msra.mxu0 0
      %612 = vmatprep.subr.bf16.mxu0 0
      %613 = vmatpush1.bf16.msra.mxu0 0
      %614 = vmatprep.subr.bf16.mxu0 0
      %615 = vmatpush1.bf16.msra.mxu0 0
      %616 = vmatprep.subr.bf16.mxu0 0
      %617 = vmatpush1.bf16.msra.mxu0 0
      %618 = vmatprep.subr.bf16.mxu0 0
      %619 = vmatpush1.bf16.msra.mxu0 0
      %620 = vmatprep.mubr.bf16.mxu0 0
      %621 = vmatmul.mubr.bf16.gmra.mrb[0].mxu0 %v582
      %v622 = vpop.f32.mrb[0].mxu0
      %v623 = vadd.f32 0.0, %v622
      %v624 = vpop.f32.mrb[0].mxu0
      %v625 = vpop.f32.mrb[0].mxu0
      %v626 = vpop.f32.mrb[0].mxu0
      %627 = vdwg.mxu0
      %629 = vrot.lane.b32.xlu0 %v516, 120
      %v630 = vpop.permute.xlu0 %629
      %631 = vrot.lane.b32.xlu0 %v517, 120
      %v632 = vpop.permute.xlu0 %631
      %v634 = vsel %vm518, %v630, 0
      %v637 = vsel %vm518, %v632, 0
      %639 = vmatprep.subr.bf16.mxu0 0
      %640 = vmatpush1.bf16.xpose.msra.mxu0 %v637
      %641 = vmatprep.subr.bf16.mxu0 0
      %642 = vmatpush1.bf16.xpose.msra.mxu0 0
      %643 = vmatprep.subr.bf16.mxu0 0
      %644 = vmatpush1.bf16.xpose.msra.mxu0 0
      %645 = vmatprep.subr.bf16.mxu0 0
      %646 = vmatpush1.bf16.xpose.msra.mxu0 0
      %647 = vmatprep.subr.bf16.mxu0 0
      %648 = vmatpush1.bf16.xpose.msra.mxu0 0
      %649 = vmatprep.subr.bf16.mxu0 0
      %650 = vmatpush1.bf16.xpose.msra.mxu0 0
      %651 = vmatprep.subr.bf16.mxu0 0
      %652 = vmatpush1.bf16.xpose.msra.mxu0 0
      %653 = vmatprep.subr.bf16.mxu0 0
      %654 = vmatpush1.bf16.xpose.msra.mxu0 0
      %655 = vmatprep.subr.bf16.mxu0 0
      %656 = vmatpush1.bf16.xpose.msra.mxu0 0
      %657 = vmatprep.subr.bf16.mxu0 0
      %658 = vmatpush1.bf16.xpose.msra.mxu0 0
      %659 = vmatprep.subr.bf16.mxu0 0
      %660 = vmatpush1.bf16.xpose.msra.mxu0 0
      %661 = vmatprep.subr.bf16.mxu0 0
      %662 = vmatpush1.bf16.xpose.msra.mxu0 0
      %663 = vmatprep.subr.bf16.mxu0 0
      %664 = vmatpush1.bf16.xpose.msra.mxu0 0
      %665 = vmatprep.subr.bf16.mxu0 0
      %666 = vmatpush1.bf16.xpose.msra.mxu0 0
      %667 = vmatprep.subr.bf16.mxu0 0
      %668 = vmatpush1.bf16.xpose.msra.mxu0 0
      %669 = vmatprep.subr.bf16.mxu0 0
      %670 = vmatpush1.bf16.xpose.msra.mxu0 0
      %671 = vmatprep.mubr.bf16.mxu0 0
      %672 = vmatmul.mubr.bf16.gmra.mrb[0].mxu0 %v634
      %v673 = vpop.f32.mrb[0].mxu0
      %v674 = vadd.f32 0.0, %v673
      %v675 = vpop.f32.mrb[0].mxu0
      %v676 = vpop.f32.mrb[0].mxu0
      %v677 = vpop.f32.mrb[0].mxu0
      %678 = vdwg.mxu0
      %v679 = vmul.f32 %v674, 0.35355338
      %v680 = vsel %vm518, %v679, -inf
      %681 = vmax.xlane.f32.xlu0 %v680
      %v682 = vpop.xlane.xlu0 %681
      %v683 = vsub.f32 %v679, %v682
      %v684 = vmul.f32 %v683, 1.442695
      %v685 = vpow.pop %v684
      %v686 = vsel %vm518, %v685, 0.0
      %687 = vadd.xlane.f32.xlu0 %v686
      %v688 = vpop.xlane.xlu0 %687
      %v689 = vrcp.pop %v688
      %v690 = vmul.f32 %v685, %v689
      %v691 = vpack.c.bf16 %v690, %v690
      %692 = vrot.lane.b32.xlu0 %v517, 88
      %v693 = vpop.permute.xlu0 %692
      %v695 = vsel %vm518, %v691, 0
      %v698 = vsel %vm584, %v693, 0
      %700 = vmatprep.subr.bf16.mxu0 0
      %701 = vmatpush1.bf16.msra.mxu0 %v698
      %702 = vmatprep.subr.bf16.mxu0 0
      %703 = vmatpush1.bf16.msra.mxu0 0
      %704 = vmatprep.subr.bf16.mxu0 0
      %705 = vmatpush1.bf16.msra.mxu0 0
      %706 = vmatprep.subr.bf16.mxu0 0
      %707 = vmatpush1.bf16.msra.mxu0 0
      %708 = vmatprep.subr.bf16.mxu0 0
      %709 = vmatpush1.bf16.msra.mxu0 0
      %710 = vmatprep.subr.bf16.mxu0 0
      %711 = vmatpush1.bf16.msra.mxu0 0
      %712 = vmatprep.subr.bf16.mxu0 0
      %713 = vmatpush1.bf16.msra.mxu0 0
      %714 = vmatprep.subr.bf16.mxu0 0
      %715 = vmatpush1.bf16.msra.mxu0 0
      %716 = vmatprep.subr.bf16.mxu0 0
      %717 = vmatpush1.bf16.msra.mxu0 0
      %718 = vmatprep.subr.bf16.mxu0 0
      %719 = vmatpush1.bf16.msra.mxu0 0
      %720 = vmatprep.subr.bf16.mxu0 0
      %721 = vmatpush1.bf16.msra.mxu0 0
      %722 = vmatprep.subr.bf16.mxu0 0
      %723 = vmatpush1.bf16.msra.mxu0 0
      %724 = vmatprep.subr.bf16.mxu0 0
      %725 = vmatpush1.bf16.msra.mxu0 0
      %726 = vmatprep.subr.bf16.mxu0 0
      %727 = vmatpush1.bf16.msra.mxu0 0
      %728 = vmatprep.subr.bf16.mxu0 0
      %729 = vmatpush1.bf16.msra.mxu0 0
      %730 = vmatprep.subr.bf16.mxu0 0
      %731 = vmatpush1.bf16.msra.mxu0 0
      %732 = vmatprep.mubr.bf16.mxu0 0
      %733 = vmatmul.mubr.bf16.gmra.mrb[0].mxu0 %v695
      %v734 = vpop.f32.mrb[0].mxu0
      %v735 = vadd.f32 0.0, %v734
      %v736 = vpop.f32.mrb[0].mxu0
      %v737 = vpop.f32.mrb[0].mxu0
      %v738 = vpop.f32.mrb[0].mxu0
      %739 = vdwg.mxu0
      %740 = vrot.lane.b32.xlu0 %v516, 112
      %v741 = vpop.permute.xlu0 %740
      %742 = vrot.lane.b32.xlu0 %v517, 112
      %v743 = vpop.permute.xlu0 %742
      %v745 = vsel %vm518, %v741, 0
      %v748 = vsel %vm518, %v743, 0
      %750 = vmatprep.subr.bf16.mxu0 0
      %751 = vmatpush1.bf16.xpose.msra.mxu0 %v748
      %752 = vmatprep.subr.bf16.mxu0 0
      %753 = vmatpush1.bf16.xpose.msra.mxu0 0
      %754 = vmatprep.subr.bf16.mxu0 0
      %755 = vmatpush1.bf16.xpose.msra.mxu0 0
      %756 = vmatprep.subr.bf16.mxu0 0
      %757 = vmatpush1.bf16.xpose.msra.mxu0 0
      %758 = vmatprep.subr.bf16.mxu0 0
      %759 = vmatpush1.bf16.xpose.msra.mxu0 0
      %760 = vmatprep.subr.bf16.mxu0 0
      %761 = vmatpush1.bf16.xpose.msra.mxu0 0
      %762 = vmatprep.subr.bf16.mxu0 0
      %763 = vmatpush1.bf16.xpose.msra.mxu0 0
      %764 = vmatprep.subr.bf16.mxu0 0
      %765 = vmatpush1.bf16.xpose.msra.mxu0 0
      %766 = vmatprep.subr.bf16.mxu0 0
      %767 = vmatpush1.bf16.xpose.msra.mxu0 0
      %768 = vmatprep.subr.bf16.mxu0 0
      %769 = vmatpush1.bf16.xpose.msra.mxu0 0
      %770 = vmatprep.subr.bf16.mxu0 0
      %771 = vmatpush1.bf16.xpose.msra.mxu0 0
      %772 = vmatprep.subr.bf16.mxu0 0
      %773 = vmatpush1.bf16.xpose.msra.mxu0 0
      %774 = vmatprep.subr.bf16.mxu0 0
      %775 = vmatpush1.bf16.xpose.msra.mxu0 0
      %776 = vmatprep.subr.bf16.mxu0 0
      %777 = vmatpush1.bf16.xpose.msra.mxu0 0
      %778 = vmatprep.subr.bf16.mxu0 0
      %779 = vmatpush1.bf16.xpose.msra.mxu0 0
      %780 = vmatprep.subr.bf16.mxu0 0
      %781 = vmatpush1.bf16.xpose.msra.mxu0 0
      %782 = vmatprep.mubr.bf16.mxu0 0
      %783 = vmatmul.mubr.bf16.gmra.mrb[0].mxu0 %v745
      %v784 = vpop.f32.mrb[0].mxu0
      %v785 = vadd.f32 0.0, %v784
      %v786 = vpop.f32.mrb[0].mxu0
      %v787 = vpop.f32.mrb[0].mxu0
      %v788 = vpop.f32.mrb[0].mxu0
      %789 = vdwg.mxu0
      %v790 = vmul.f32 %v785, 0.35355338
      %v791 = vsel %vm518, %v790, -inf
      %792 = vmax.xlane.f32.xlu0 %v791
      %v793 = vpop.xlane.xlu0 %792
      %v794 = vsub.f32 %v790, %v793
      %v795 = vmul.f32 %v794, 1.442695
      %v796 = vpow.pop %v795
      %v797 = vsel %vm518, %v796, 0.0
      %798 = vadd.xlane.f32.xlu0 %v797
      %v799 = vpop.xlane.xlu0 %798
      %v800 = vrcp.pop %v799
      %v801 = vmul.f32 %v796, %v800
      %v802 = vpack.c.bf16 %v801, %v801
      %803 = vrot.lane.b32.xlu0 %v517, 80
      %v804 = vpop.permute.xlu0 %803
      %v806 = vsel %vm518, %v802, 0
      %v809 = vsel %vm584, %v804, 0
      %811 = vmatprep.subr.bf16.mxu0 0
      %812 = vmatpush1.bf16.msra.mxu0 %v809
      %813 = vmatprep.subr.bf16.mxu0 0
      %814 = vmatpush1.bf16.msra.mxu0 0
      %815 = vmatprep.subr.bf16.mxu0 0
      %816 = vmatpush1.bf16.msra.mxu0 0
      %817 = vmatprep.subr.bf16.mxu0 0
      %818 = vmatpush1.bf16.msra.mxu0 0
      %819 = vmatprep.subr.bf16.mxu0 0
      %820 = vmatpush1.bf16.msra.mxu0 0
      %821 = vmatprep.subr.bf16.mxu0 0
      %822 = vmatpush1.bf16.msra.mxu0 0
      %823 = vmatprep.subr.bf16.mxu0 0
      %824 = vmatpush1.bf16.msra.mxu0 0
      %825 = vmatprep.subr.bf16.mxu0 0
      %826 = vmatpush1.bf16.msra.mxu0 0
      %827 = vmatprep.subr.bf16.mxu0 0
      %828 = vmatpush1.bf16.msra.mxu0 0
      %829 = vmatprep.subr.bf16.mxu0 0
      %830 = vmatpush1.bf16.msra.mxu0 0
      %831 = vmatprep.subr.bf16.mxu0 0
      %832 = vmatpush1.bf16.msra.mxu0 0
      %833 = vmatprep.subr.bf16.mxu0 0
      %834 = vmatpush1.bf16.msra.mxu0 0
      %835 = vmatprep.subr.bf16.mxu0 0
      %836 = vmatpush1.bf16.msra.mxu0 0
      %837 = vmatprep.subr.bf16.mxu0 0
      %838 = vmatpush1.bf16.msra.mxu0 0
      %839 = vmatprep.subr.bf16.mxu0 0
      %840 = vmatpush1.bf16.msra.mxu0 0
      %841 = vmatprep.subr.bf16.mxu0 0
      %842 = vmatpush1.bf16.msra.mxu0 0
      %843 = vmatprep.mubr.bf16.mxu0 0
      %844 = vmatmul.mubr.bf16.gmra.mrb[0].mxu0 %v806
      %v845 = vpop.f32.mrb[0].mxu0
      %v846 = vadd.f32 0.0, %v845
      %v847 = vpop.f32.mrb[0].mxu0
      %v848 = vpop.f32.mrb[0].mxu0
      %v849 = vpop.f32.mrb[0].mxu0
      %850 = vdwg.mxu0
      %851 = vrot.lane.b32.xlu0 %v516, 104
      %v852 = vpop.permute.xlu0 %851
      %853 = vrot.lane.b32.xlu0 %v517, 104
      %v854 = vpop.permute.xlu0 %853
      %v856 = vsel %vm518, %v852, 0
      %v859 = vsel %vm518, %v854, 0
      %861 = vmatprep.subr.bf16.mxu0 0
      %862 = vmatpush1.bf16.xpose.msra.mxu0 %v859
      %863 = vmatprep.subr.bf16.mxu0 0
      %864 = vmatpush1.bf16.xpose.msra.mxu0 0
      %865 = vmatprep.subr.bf16.mxu0 0
      %866 = vmatpush1.bf16.xpose.msra.mxu0 0
      %867 = vmatprep.subr.bf16.mxu0 0
      %868 = vmatpush1.bf16.xpose.msra.mxu0 0
      %869 = vmatprep.subr.bf16.mxu0 0
      %870 = vmatpush1.bf16.xpose.msra.mxu0 0
      %871 = vmatprep.subr.bf16.mxu0 0
      %872 = vmatpush1.bf16.xpose.msra.mxu0 0
      %873 = vmatprep.subr.bf16.mxu0 0
      %874 = vmatpush1.bf16.xpose.msra.mxu0 0
      %875 = vmatprep.subr.bf16.mxu0 0
      %876 = vmatpush1.bf16.xpose.msra.mxu0 0
      %877 = vmatprep.subr.bf16.mxu0 0
      %878 = vmatpush1.bf16.xpose.msra.mxu0 0
      %879 = vmatprep.subr.bf16.mxu0 0
      %880 = vmatpush1.bf16.xpose.msra.mxu0 0
      %881 = vmatprep.subr.bf16.mxu0 0
      %882 = vmatpush1.bf16.xpose.msra.mxu0 0
      %883 = vmatprep.subr.bf16.mxu0 0
      %884 = vmatpush1.bf16.xpose.msra.mxu0 0
      %885 = vmatprep.subr.bf16.mxu0 0
      %886 = vmatpush1.bf16.xpose.msra.mxu0 0
      %887 = vmatprep.subr.bf16.mxu0 0
      %888 = vmatpush1.bf16.xpose.msra.mxu0 0
      %889 = vmatprep.subr.bf16.mxu0 0
      %890 = vmatpush1.bf16.xpose.msra.mxu0 0
      %891 = vmatprep.subr.bf16.mxu0 0
      %892 = vmatpush1.bf16.xpose.msra.mxu0 0
      %893 = vmatprep.mubr.bf16.mxu0 0
      %894 = vmatmul.mubr.bf16.gmra.mrb[0].mxu0 %v856
      %v895 = vpop.f32.mrb[0].mxu0
      %v896 = vadd.f32 0.0, %v895
      %v897 = vpop.f32.mrb[0].mxu0
      %v898 = vpop.f32.mrb[0].mxu0
      %v899 = vpop.f32.mrb[0].mxu0
      %900 = vdwg.mxu0
      %v901 = vmul.f32 %v896, 0.35355338
      %v902 = vsel %vm518, %v901, -inf
      %903 = vmax.xlane.f32.xlu0 %v902
      %v904 = vpop.xlane.xlu0 %903
      %v905 = vsub.f32 %v901, %v904
      %v906 = vmul.f32 %v905, 1.442695
      %v907 = vpow.pop %v906
      %v908 = vsel %vm518, %v907, 0.0
      %909 = vadd.xlane.f32.xlu0 %v908
      %v910 = vpop.xlane.xlu0 %909
      %v911 = vrcp.pop %v910
      %v912 = vmul.f32 %v907, %v911
      %v913 = vpack.c.bf16 %v912, %v912
      %914 = vrot.lane.b32.xlu0 %v517, 72
      %v915 = vpop.permute.xlu0 %914
      %v917 = vsel %vm518, %v913, 0
      %v920 = vsel %vm584, %v915, 0
      %922 = vmatprep.subr.bf16.mxu0 0
      %923 = vmatpush1.bf16.msra.mxu0 %v920
      %924 = vmatprep.subr.bf16.mxu0 0
      %925 = vmatpush1.bf16.msra.mxu0 0
      %926 = vmatprep.subr.bf16.mxu0 0
      %927 = vmatpush1.bf16.msra.mxu0 0
      %928 = vmatprep.subr.bf16.mxu0 0
      %929 = vmatpush1.bf16.msra.mxu0 0
      %930 = vmatprep.subr.bf16.mxu0 0
      %931 = vmatpush1.bf16.msra.mxu0 0
      %932 = vmatprep.subr.bf16.mxu0 0
      %933 = vmatpush1.bf16.msra.mxu0 0
      %934 = vmatprep.subr.bf16.mxu0 0
      %935 = vmatpush1.bf16.msra.mxu0 0
      %936 = vmatprep.subr.bf16.mxu0 0
      %937 = vmatpush1.bf16.msra.mxu0 0
      %938 = vmatprep.subr.bf16.mxu0 0
      %939 = vmatpush1.bf16.msra.mxu0 0
      %940 = vmatprep.subr.bf16.mxu0 0
      %941 = vmatpush1.bf16.msra.mxu0 0
      %942 = vmatprep.subr.bf16.mxu0 0
      %943 = vmatpush1.bf16.msra.mxu0 0
      %944 = vmatprep.subr.bf16.mxu0 0
      %945 = vmatpush1.bf16.msra.mxu0 0
      %946 = vmatprep.subr.bf16.mxu0 0
      %947 = vmatpush1.bf16.msra.mxu0 0
      %948 = vmatprep.subr.bf16.mxu0 0
      %949 = vmatpush1.bf16.msra.mxu0 0
      %950 = vmatprep.subr.bf16.mxu0 0
      %951 = vmatpush1.bf16.msra.mxu0 0
      %952 = vmatprep.subr.bf16.mxu0 0
      %953 = vmatpush1.bf16.msra.mxu0 0
      %954 = vmatprep.mubr.bf16.mxu0 0
      %955 = vmatmul.mubr.bf16.gmra.mrb[0].mxu0 %v917
      %v956 = vpop.f32.mrb[0].mxu0
      %v957 = vadd.f32 0.0, %v956
      %v958 = vpop.f32.mrb[0].mxu0
      %v959 = vpop.f32.mrb[0].mxu0
      %v960 = vpop.f32.mrb[0].mxu0
      %961 = vdwg.mxu0
      %963 = vrot.lane.b32.xlu0 %v735, 8
      %v964 = vpop.permute.xlu0 %963
      %967 = vrot.lane.b32.xlu0 %v846, 16
      %v968 = vpop.permute.xlu0 %967
      %971 = vrot.lane.b32.xlu0 %v957, 24
      %v972 = vpop.permute.xlu0 %971
      %v974 = vsel %vm518, %v623, %v964
      %vm975 = vcmask 130048
      %v976 = vsel %vm975, %v974, %v968
      %vm977 = vcmask 195584
      %v978 = vsel %vm977, %v976, %v972
      %v979 = vpack.c.bf16 %v978, %v978
      %v981 = vlaneseq
      %v982 = vshrl.u32 %v981, 7
      %v983 = vsub.s32 0, %v982
      %v984 = vrot.slane %v513, %v983
      %v990 = vunpack.c.l.b16 %v509
      %v991 = vunpack.c.l.b16 %v510
      %v992 = vunpack.c.l.b16 %v511
      %v993 = vunpack.c.l.b16 %v512
      %v994 = vpack.c.b16 %v991, %v990
      %v995 = vpack.c.b16 %v993, %v992
      %v999 = vsel %vm398, %v979, 0
      %1001 = vmatprep.subr.bf16.mxu0 0
      %1002 = vmatpush1.bf16.msra.mxu0 %v994
      %1003 = vmatprep.subr.bf16.mxu0 0
      %1004 = vmatpush1.bf16.msra.mxu0 %v995
      %1005 = vmatprep.subr.bf16.mxu0 0
      %1006 = vmatpush1.bf16.msra.mxu0 0
      %1007 = vmatprep.subr.bf16.mxu0 0
      %1008 = vmatpush1.bf16.msra.mxu0 0
      %1009 = vmatprep.subr.bf16.mxu0 0
      %1010 = vmatpush1.bf16.msra.mxu0 0
      %1011 = vmatprep.subr.bf16.mxu0 0
      %1012 = vmatpush1.bf16.msra.mxu0 0
      %1013 = vmatprep.subr.bf16.mxu0 0
      %1014 = vmatpush1.bf16.msra.mxu0 0
      %1015 = vmatprep.subr.bf16.mxu0 0
      %1016 = vmatpush1.bf16.msra.mxu0 0
      %1017 = vmatprep.subr.bf16.mxu0 0
      %1018 = vmatpush1.bf16.msra.mxu0 0
      %1019 = vmatprep.subr.bf16.mxu0 0
      %1020 = vmatpush1.bf16.msra.mxu0 0
      %1021 = vmatprep.subr.bf16.mxu0 0
      %1022 = vmatpush1.bf16.msra.mxu0 0
      %1023 = vmatprep.subr.bf16.mxu0 0
      %1024 = vmatpush1.bf16.msra.mxu0 0
      %1025 = vmatprep.subr.bf16.mxu0 0
      %1026 = vmatpush1.bf16.msra.mxu0 0
      %1027 = vmatprep.subr.bf16.mxu0 0
      %1028 = vmatpush1.bf16.msra.mxu0 0
      %1029 = vmatprep.subr.bf16.mxu0 0
      %1030 = vmatpush1.bf16.msra.mxu0 0
      %1031 = vmatprep.subr.bf16.mxu0 0
      %1032 = vmatpush1.bf16.msra.mxu0 0
      %1033 = vmatprep.mubr.bf16.mxu0 0
      %1034 = vmatmul.mubr.bf16.gmra.mrb[0].mxu0 %v999
      %v1035 = vpop.f32.mrb[0].mxu0
      %v1036 = vadd.f32 %v984, %v1035
      %v1037 = vpop.f32.mrb[0].mxu0
      %v1038 = vpop.f32.mrb[0].mxu0
      %v1039 = vpop.f32.mrb[0].mxu0
      %1040 = vdwg.mxu0
      %v1041 = vadd.f32 %v1036, %v508
      %v1042 = vsel %vm398, %v1041, 0.0
      %1043 = vadd.xlane.f32.xlu0 %v1042
      %v1044 = vpop.xlane.xlu0 %1043
      %v1045 = vrcp.pop 32.0
      %v1046 = vmul.f32 %v1044, %v1045
      %v1047 = vsub.f32 %v1041, %v1046
      %v1048 = vmul.f32 %v1047, %v1047
      %v1049 = vsel %vm398, %v1048, 0.0
      %1050 = vadd.xlane.f32.xlu0 %v1049
      %v1051 = vpop.xlane.xlu0 %1050
      %v1052 = vmul.f32 %v1051, %v1045
      %v1053 = vadd.f32 %v1052, 1e-05
      %v1054 = vrsqrt.pop %v1053
      %v1055 = vmul.f32 %v1047, %v1054
      %v1057 = vlaneseq
      %v1058 = vshrl.u32 %v1057, 7
      %v1059 = vsub.s32 0, %v1058
      %v1060 = vrot.slane %v514, %v1059
      %v1062 = vmul.f32 %v1055, %v1060
      %v1064 = vlaneseq
      %v1065 = vshrl.u32 %v1064, 7
      %v1066 = vsub.s32 0, %v1065
      %v1067 = vrot.slane %v515, %v1066
      %v1069 = vadd.f32 %v1062, %v1067
      %v1070 = vpack.c.bf16 %v1069, %v1069
      %vm1071 = vcmask 257024
      %1072 = vst.msk [vmem:[%s371] sm:$0xf] %vm1071, %v1070
      %p1073 = scmp.lt.s32.totalorder %s21, 1
      %s1074 = scalar_select %p1073, %s21, 1
      %s1075 = smul.addr %s1074, 4
      %s1076 = scalar_lea.vmem %s10, %s1075
      // Predicated region
      $region61: #{seq2seq_transformer.18} parent=59 // pred_check
        %p1077 = pneg %p259
      $region62: #{seq2seq_transformer.18} parent=59 // pred_check_branch
        %1079 = sbr.rel (%p1077) target = $region64
      $region63: #{seq2seq_transformer.18} parent=59 // pred_region
        _
      $region64: #{seq2seq_transformer.18} parent=59 // pred_fallthru
        _
    $region60: #{seq2seq_transformer.18} parent=5 // pred_fallthru
      _
    %p1080 = scmp.le.s32.totalorder 2, %s16
    // Predicated region
    $region65: #{seq2seq_transformer.18} parent=5 // pred_check
      %p1081 = pneg %p1080
    $region66: #{seq2seq_transformer.18} parent=5 // pred_check_branch
      %1083 = sbr.rel (%p1081) target = $region68
    $region67: #{seq2seq_transformer.18} parent=5 // pred_region
      %s1084 = ssub.s32 %s16, 2
      // Predicated region
      $region69: #{seq2seq_transformer.18} parent=67 // pred_check
        %p1085 = pneg %p265
      $region70: #{seq2seq_transformer.18} parent=67 // pred_check_branch
        %1087 = sbr.rel (%p1085) target = $region72
      $region71: #{seq2seq_transformer.18} parent=67 // pred_region
        %p1088 = scmp.lt.s32.totalorder %s22, 1
        %s1089 = scalar_select %p1088, %s22, 1
        %s1090 = smul.addr %s1089, 4
        %s1091 = scalar_lea.vmem %s10, %s1090
      $region72: #{seq2seq_transformer.18} parent=67 // pred_fallthru
        _
    $region68: #{seq2seq_transformer.18} parent=5 // pred_fallthru
      _
  $region6: #{seq2seq_transformer.18} parent=0 // loop_footer
    %s20 = sadd.s32 1, %s16
  $region7: #{seq2seq_transformer.18} parent=0 // loop_footer_branch
    %15 = sbr.rel target = $region3
  $region8: #{seq2seq_transformer.18} parent=0 // loop_exit
    _

</llo_original>
